<compile_context>
chip_gen: v6e
topology: v6e:2x2x1
jax: 0.10.0
libtpu: 0.0.40
codegen_flags: <defaults>
</compile_context>

<pallas_src>
import functools
import math

import jax
import jax.numpy as jnp
import numpy as np
from jax import lax
from jax.experimental import pallas as pl
from jax.experimental.pallas import tpu as pltpu


# ----------------------------------------------------------------------------
# Tiling / layout helpers
# ----------------------------------------------------------------------------

def _largest_divisor_leq(n, cap, multiple_of=1):
    """Largest divisor of n that is <= cap and a multiple of `multiple_of`, else None."""
    cap = int(max(1, min(n, cap)))
    for t in range(cap, 0, -1):
        if n % t == 0 and t % multiple_of == 0:
            return t
    return None


def _choose_lane_layout(batch_size, c_out):
    """True -> C_out on the lane axis of the output block; False -> B on lanes."""
    b_dense = (batch_size % 128 == 0)
    o_dense = (c_out % 128 == 0)
    if b_dense and not o_dense:
        return False
    if o_dense and not b_dense:
        return True
    return c_out >= batch_size  # tie-break: larger axis gets the lanes


def _pick_tiles(B, C_out, K, D, itemsize, cout_lanes):
    """Pick (TD, TB) tile sizes for the (D, B) grid."""
    # Batch tile granularity: B sits on the lane axis (needs x128) when B is on
    # lanes, on the sublane axis (needs x8) when C_out is on lanes.  A full-B
    # block is always legal.
    gran = 8 if cout_lanes else 128
    TB = None
    if B % gran == 0:
        TB = _largest_divisor_leq(B, 512, multiple_of=gran)
    if TB is None:
        TB = B
    # D tile: bound the per-step block footprint to ~2 MiB; double-buffering by the
    # pipeline brings this to ~4-8 MiB — comfortably below v7x's 64 MiB VMEM.
    per_d_bytes = itemsize * (C_out * K + K * TB + C_out * TB + C_out)
    budget = 2 * 1024 * 1024
    TD = _largest_divisor_leq(D, max(1, budget // max(per_d_bytes, 1))) or 1
    # Give the grid at least 2 steps when possible so both v7x TCs get work.
    if (D // TD) * (B // TB) < 2 and D > 1:
        TD = _largest_divisor_leq(D, max(1, (D + 1) // 2)) or TD
    return TD, TB


# ----------------------------------------------------------------------------
# Kernel
# ----------------------------------------------------------------------------

def _lcn1d_kernel(*refs, use_bias, cout_lanes):
    if use_bias:
        x_ref, w_ref, b_ref, o_ref = refs
    else:
        x_ref, w_ref, o_ref = refs
        b_ref = None

    # Contract k = (c, tap) on the MXU, batched over the local-d axis; f32 acc.
    dn = (((2,), (1,)), ((0,), (0,)))
    if cout_lanes:
        # x: (TD, TB, K) @ w: (TD, K, C_out) -> (TD, TB, C_out)
        acc = lax.dot_general(x_ref[...], w_ref[...], dimension_numbers=dn,
                              preferred_element_type=jnp.float32,
                              precision=lax.Precision.HIGHEST)
    else:
        # w: (TD, C_out, K) @ x: (TD, K, TB) -> (TD, C_out, TB)
        acc = lax.dot_general(w_ref[...], x_ref[...], dimension_numbers=dn,
                              preferred_element_type=jnp.float32,
                              precision=lax.Precision.HIGHEST)

    if use_bias:
        acc = acc + b_ref[...].astype(jnp.float32)  # size-1 axis broadcasts over TB
    o_ref[...] = acc.astype(o_ref.dtype)


# ----------------------------------------------------------------------------
# Parameter packing (one-time, at init) and apply
# ----------------------------------------------------------------------------

def prepare_lcn1d_params(weight, bias=None, batch_size=None):
    """Pack PyTorch parameters once into kernel layout.

    Folds the 1/sqrt(C_in) normalization into the weights and the 0.1 scale into
    the bias so the kernel hot path has no extra per-element multiplies.
    Returns a dict {w2, b2, cout_lanes}.
    """
    C_out, C_in, L = weight.shape
    assert L % 2 == 0, "weight last dim must be 2*out_dim"
    D = L // 2
    K = 2 * C_in

    if batch_size is None:
        cout_lanes = (C_out % 128 == 0) or (C_out >= 128)
    else:
        cout_lanes = _choose_lane_layout(int(batch_size), C_out)

    inv = 1.0 / math.sqrt(C_in)
    w4 = weight.reshape(C_out, C_in, D, 2)          # [o, c, d, t]
    if cout_lanes:
        # (D, K, C_out) with k = c*2 + t
        w2 = (w4.transpose(2, 1, 3, 0).reshape(D, K, C_out) * inv).astype(weight.dtype)
    else:
        # (D, C_out, K) with k = c*2 + t
        w2 = (w4.transpose(2, 0, 1, 3).reshape(D, C_out, K) * inv).astype(weight.dtype)

    b2 = None
    if bias is not None:
        bt = (0.1 * bias)[0].T                       # (D, C_out), 0.1 folded in
        b2 = bt[:, None, :] if cout_lanes else bt[:, :, None]

    return {"w2": w2, "b2": b2, "cout_lanes": bool(cout_lanes)}


def lcn1d_apply(x, params):
    """x: (B, C_in, 2*D); params from prepare_lcn1d_params. Returns (B, C_out, D)."""
    w2 = params["w2"]
    b2 = params["b2"]
    cout_lanes = params["cout_lanes"]

    B, C_in, L = x.shape
    assert L % 2 == 0
    D = L // 2
    K = 2 * C_in

    if cout_lanes:
        assert w2.shape[0] == D and w2.shape[1] == K
        C_out = w2.shape[2]
        # (B, C_in, 2D) -> (D, B, 2*C_in); single fused XLA reshape+transpose.
        x2 = x.reshape(B, C_in, D, 2).transpose(2, 0, 1, 3).reshape(D, B, K)
    else:
        assert w2.shape[0] == D and w2.shape[2] == K
        C_out = w2.shape[1]
        # (B, C_in, 2D) -> (D, 2*C_in, B)
        x2 = x.reshape(B, C_in, D, 2).transpose(2, 1, 3, 0).reshape(D, K, B)

    use_bias = b2 is not None
    itemsize = max(jnp.dtype(x.dtype).itemsize, jnp.dtype(w2.dtype).itemsize)
    TD, TB = _pick_tiles(B, C_out, K, D, itemsize, cout_lanes)
    grid = (D // TD, B // TB)

    kernel = functools.partial(_lcn1d_kernel, use_bias=use_bias, cout_lanes=cout_lanes)

    if cout_lanes:
        in_specs = [
            pl.BlockSpec((TD, TB, K), lambda d, b: (d, b, 0)),      # x2
            pl.BlockSpec((TD, K, C_out), lambda d, b: (d, 0, 0)),   # w2 (B-invariant)
        ]
        bias_spec = pl.BlockSpec((TD, 1, C_out), lambda d, b: (d, 0, 0))
        out_spec = pl.BlockSpec((TD, TB, C_out), lambda d, b: (d, b, 0))
        out_shape = jax.ShapeDtypeStruct((D, B, C_out), x.dtype)
    else:
        in_specs = [
            pl.BlockSpec((TD, K, TB), lambda d, b: (d, 0, b)),      # x2
            pl.BlockSpec((TD, C_out, K), lambda d, b: (d, 0, 0)),   # w2 (B-invariant)
        ]
        bias_spec = pl.BlockSpec((TD, C_out, 1), lambda d, b: (d, 0, 0))
        out_spec = pl.BlockSpec((TD, C_out, TB), lambda d, b: (d, 0, b))
        out_shape = jax.ShapeDtypeStruct((D, C_out, B), x.dtype)

    args = [x2, w2]
    if use_bias:
        in_specs.append(bias_spec)
        args.append(b2)

    out_itemsize = jnp.dtype(x.dtype).itemsize
    bytes_accessed = int(
        x2.size * jnp.dtype(x2.dtype).itemsize
        + w2.size * jnp.dtype(w2.dtype).itemsize
        + (b2.size * jnp.dtype(b2.dtype).itemsize if use_bias else 0)
        + D * C_out * B * out_itemsize
    )
    cost = pl.CostEstimate(
        flops=4 * B * C_out * C_in * D,
        transcendentals=0,
        bytes_accessed=bytes_accessed,
    )

    # VMEM budget: double-buffered blocks + the f32 accumulator, with slack.
    block_bytes = itemsize * TD * (C_out * K + K * TB + C_out * TB + C_out) \
        + 4 * TD * C_out * TB
    vmem_limit = int(min(48 << 20, max(4 * block_bytes + (2 << 20), 8 << 20)))

    out_l = pl.pallas_call(
        kernel,
        out_shape=out_shape,
        grid_spec=pltpu.PrefetchScalarGridSpec(
            num_scalar_prefetch=0,
            grid=grid,
            in_specs=in_specs,
            out_specs=out_spec,
        ),
        compiler_params=pltpu.CompilerParams(
            dimension_semantics=("parallel", "parallel"),
            vmem_limit_bytes=vmem_limit,
        ),
        cost_estimate=cost,
    )(*args)

    # One fused XLA transpose back to the PyTorch output layout (B, C_out, D).
    if cout_lanes:
        return out_l.transpose(1, 2, 0)   # (D, B, C_out) -> (B, C_out, D)
    return out_l.transpose(2, 1, 0)       # (D, C_out, B) -> (B, C_out, D)


def non_overlapping_lcn1d(x, weight, bias=None):
    """Convenience wrapper matching the PyTorch module call signature."""
    # TODO(synk): in a real model, call prepare_lcn1d_params once at __init__ and
    # reuse the packed params across forward calls instead of repacking per call.
    params = prepare_lcn1d_params(weight, bias, batch_size=x.shape[0])
    return lcn1d_apply(x, params)


# ----------------------------------------------------------------------------
# Reference + test
# ----------------------------------------------------------------------------

def _reference(x, weight, bias, input_channels):
    # Direct transcription of the PyTorch forward in jnp.
    y = x[:, None, :, :] * weight[None, :, :, :]            # (B, C_out, C_in, L)
    y = y.reshape(*y.shape[:-1], -1, 2)                     # (B, C_out, C_in, D, 2)
    y = y.sum(axis=(-1, -3))                                # (B, C_out, D)
    y = y / (input_channels ** 0.5)
    if bias is not None:
        y = y + bias * 0.1
    return y


if __name__ == "__main__":
    # Small shapes consistent with the module.
    B, C_in, C_out, D = 2, 4, 8, 16
    L = 2 * D

    key = jax.random.PRNGKey(0)
    kx, kw, kb = jax.random.split(key, 3)

    x = jax.random.normal(kx, (B, C_in, L), dtype=jnp.float32)
    weight = jax.random.normal(kw, (C_out, C_in, L), dtype=jnp.float32)   # randn init
    bias = jax.random.normal(kb, (1, C_out, D), dtype=jnp.float32)        # randn init

    # Bias path: params packed once, then applied.
    params_b = prepare_lcn1d_params(weight, bias, batch_size=B)
    out_b = jax.block_until_ready(lcn1d_apply(x, params_b))
    ref_b = _reference(x, weight, bias, C_in)
    np.testing.assert_allclose(np.asarray(out_b), np.asarray(ref_b), rtol=1e-4, atol=1e-4)

    # No-bias path (module default bias=False): no dummy bias input is DMA'd.
    out_nb = jax.block_until_ready(non_overlapping_lcn1d(x, weight, None))
    ref_nb = _reference(x, weight, None, C_in)
    np.testing.assert_allclose(np.asarray(out_nb), np.asarray(ref_nb), rtol=1e-4, atol=1e-4)

    print("KERNEL_OK")
</pallas_src>

<mosaic_0001>
module attributes {stable_mosaic.version = 11 : i64} {
  func.func @_lcn1d_kernel(%arg0: i32, %arg1: i32, %arg2: memref<8x2x8xf32, #tpu.memory_space<vmem>>, %arg3: memref<8x8x8xf32, #tpu.memory_space<vmem>>, %arg4: memref<8x1x8xf32, #tpu.memory_space<vmem>>, %arg5: memref<8x2x8xf32, #tpu.memory_space<vmem>>) attributes {dimension_semantics = [#tpu.dimension_semantics<parallel>, #tpu.dimension_semantics<parallel>], iteration_bounds = array<i64: 2, 1>, scalar_prefetch = 0 : i64, scratch_operands = 0 : i64, tpu.core_type = #tpu.core_type<tc>, window_params = [{transform_indices = @transform_0, window_bounds = array<i64: 8, 2, 8>}, {transform_indices = @transform_1, window_bounds = array<i64: 8, 8, 8>}, {transform_indices = @transform_2, window_bounds = array<i64: 8, 1, 8>}, {transform_indices = @transform_3, window_bounds = array<i64: 8, 2, 8>}]} {
    %c0 = arith.constant 0 : index
    %c0_0 = arith.constant 0 : index
    %c0_1 = arith.constant 0 : index
    %0 = vector.load %arg2[%c0, %c0_0, %c0_1] : memref<8x2x8xf32, #tpu.memory_space<vmem>>, vector<8x2x8xf32>
    %c0_2 = arith.constant 0 : index
    %c0_3 = arith.constant 0 : index
    %c0_4 = arith.constant 0 : index
    %1 = vector.load %arg3[%c0_2, %c0_3, %c0_4] : memref<8x8x8xf32, #tpu.memory_space<vmem>>, vector<8x8x8xf32>
    %cst = arith.constant dense<0.000000e+00> : vector<8x2x8xf32>
    %2 = tpu.matmul %0, %1, %cst {dimension_numbers = #tpu.dot_dimension_numbers<[2], [1], [1], [2], [0, 0, 0, 1, 1, 2], [0], [0]>, precision = #tpu.contract_precision<fp32>} : vector<8x2x8xf32>, vector<8x8x8xf32>, vector<8x2x8xf32> -> vector<8x2x8xf32>
    %c0_5 = arith.constant 0 : index
    %c0_6 = arith.constant 0 : index
    %c0_7 = arith.constant 0 : index
    %3 = vector.load %arg4[%c0_5, %c0_6, %c0_7] : memref<8x1x8xf32, #tpu.memory_space<vmem>>, vector<8x1x8xf32>
    %4 = vector.broadcast %3 : vector<8x1x8xf32> to vector<8x2x8xf32>
    %5 = arith.addf %2, %4 : vector<8x2x8xf32>
    %c0_8 = arith.constant 0 : index
    %c0_9 = arith.constant 0 : index
    %c0_10 = arith.constant 0 : index
    %6 = vector.load %arg5[%c0_8, %c0_9, %c0_10] : memref<8x2x8xf32, #tpu.memory_space<vmem>>, vector<8x2x8xf32>
    tpu.vector_store %arg5[%c0_8, %c0_9, %c0_10], %5 {strides = array<i32>} : memref<8x2x8xf32, #tpu.memory_space<vmem>>, vector<8x2x8xf32>,
    return
  }
  func.func @transform_0(%arg0: i32, %arg1: i32) -> (i32, i32, i32) {
    %c0_i32 = arith.constant 0 : i32
    %c0_i32_0 = arith.constant 0 : i32
    return %arg0, %arg1, %c0_i32 : i32, i32, i32
  }
  func.func @transform_1(%arg0: i32, %arg1: i32) -> (i32, i32, i32) {
    %c0_i32 = arith.constant 0 : i32
    %c0_i32_0 = arith.constant 0 : i32
    %c0_i32_1 = arith.constant 0 : i32
    return %arg0, %c0_i32, %c0_i32_0 : i32, i32, i32
  }
  func.func @transform_2(%arg0: i32, %arg1: i32) -> (i32, i32, i32) {
    %c0_i32 = arith.constant 0 : i32
    %c0_i32_0 = arith.constant 0 : i32
    %c0_i32_1 = arith.constant 0 : i32
    return %arg0, %c0_i32, %c0_i32_0 : i32, i32, i32
  }
  func.func @transform_3(%arg0: i32, %arg1: i32) -> (i32, i32, i32) {
    %c0_i32 = arith.constant 0 : i32
    %c0_i32_0 = arith.constant 0 : i32
    return %arg0, %arg1, %c0_i32 : i32, i32, i32
  }
}

</mosaic_0001>

<llo_original>
// kernel: tpu_custom_call.1
$region0: #{tpu_custom_call.1}
  #allocation0 [shape = 'u32[]', space=smem, size = 0x4, offset = 0x4, fixed_abs, tag = 'smem constant byte address 0x4 - core index']
  #allocation1 [shape = 'u32[144,128]{1,0:T(1,128)}', space=vmem, size = 0x12000, scoped, tag = 'internal scratch']
  %s0 = inlined_call_operand.vmem [shape: f32[16,2,8], index: 0, kind: input, shape index: {}]
  %s1 = inlined_call_operand.vmem [shape: f32[16,8,8], index: 1, kind: input, shape index: {}]
  %s2 = inlined_call_operand.vmem [shape: f32[16,1,8], index: 2, kind: input, shape index: {}]
  %s3 = inlined_call_operand.vmem [shape: f32[16,2,8], index: 3, kind: output, shape index: {}]
  %s4 = sld [smem:[#allocation0]]
  $region45: #{tpu_custom_call.1} parent=0
    _
  %s6 = ssub.s32 1, %s4
  %s7 = scalar_select 0, %s6, %s4
  loop: start=0, step=1, limit=4
  $region2: #{tpu_custom_call.1} parent=0 // loop_pre_header
    _
  $region3: #{tpu_custom_call.1} parent=0 // loop_header
    %s9 = sphi 0, %s13
    %p10 = scmp.ge.s32.totalorder %s9, 4
    %s16 = sphi 0, %s28
    %s17 = sphi 0, %s24
    %s18 = sphi 0, %s16
    %s19 = sphi 0, %s17
    %s20 = sphi 0, %s18
    %s21 = sphi 0, %s19
    %s33 = sphi 0, %s35
    %s36 = sphi 0, %s33
    %s37 = sphi 0, %s36
    %s53 = sphi 0, %s37
    %s59 = sphi 0, %s61
    %s62 = sphi 0, %s59
    %s63 = sphi 0, %s62
    %s79 = sphi 0, %s63
    %s85 = sphi 0, %s87
    %s88 = sphi 0, %s85
    %s89 = sphi 0, %s88
    %s105 = sphi 0, %s89
    %s113 = sphi 0, %s115
    %s116 = sphi 0, %s113
    %s117 = sphi 0, %s116
    %s133 = sphi 0, %s117
  $region4: #{tpu_custom_call.1} parent=0 // loop_header_branch
    %12 = sbr.rel (%p10) target = $region8
  $region5: #{tpu_custom_call.1} parent=0 // loop_body
    %s14 = ssub.s32 %s9, 1
    %s15 = ssub.s32 %s9, 2
    %s22 = sadd.s32 1, %s17
    %p23 = scmp.ge.s32.totalorder %s22, 1
    %s24 = scalar_select %p23, 0, %s22
    %s25 = sadd.s32 1, %s16
    %s26 = scalar_select %p23, %s25, %s16
    %p27 = scmp.ge.s32.totalorder %s26, 2
    %s28 = scalar_select %p27, 0, %s26
    %s29 = ssub.s32 %s16, %s28
    %s30 = ssub.s32 %s17, %s24
    %s31 = sor.u32 %s29, %s30
    %p32 = scmp.eq.s32.totalorder %s31, 0
    %s34 = sadd.s32 %s33, 1
    %s35 = scalar_select %p32, %s33, %s34
    %p38 = pneg %p32
    %p39 = scmp.eq.s32.totalorder %s9, 1
    %p40 = por %p38, %p39
    %p41 = scmp.ne.s32.totalorder %s33, %s36
    %p42 = scmp.eq.s32.totalorder %s9, 0
    %p43 = por %p41, %p42
    %p44 = scmp.ne.s32.totalorder %s33, %s36
    %p45 = scmp.eq.s32.totalorder %s14, 1
    %p46 = por %p44, %p45
    %p47 = scmp.ne.s32.totalorder %s36, %s37
    %p48 = scmp.eq.s32.totalorder %s14, 0
    %p49 = por %p47, %p48
    %p50 = scmp.ne.s32.totalorder %s36, %s37
    %p51 = scmp.eq.s32.totalorder %s15, 1
    %p52 = por %p50, %p51
    %p54 = scmp.ne.s32.totalorder %s37, %s53
    %p55 = scmp.eq.s32.totalorder %s15, 0
    %p56 = por %p54, %p55
    %s57 = ssub.s32 %s16, %s28
    %p58 = scmp.eq.s32.totalorder %s57, 0
    %s60 = sadd.s32 %s59, 1
    %s61 = scalar_select %p58, %s59, %s60
    %p64 = pneg %p58
    %p65 = scmp.eq.s32.totalorder %s9, 1
    %p66 = por %p64, %p65
    %p67 = scmp.ne.s32.totalorder %s59, %s62
    %p68 = scmp.eq.s32.totalorder %s9, 0
    %p69 = por %p67, %p68
    %p70 = scmp.ne.s32.totalorder %s59, %s62
    %p71 = scmp.eq.s32.totalorder %s14, 1
    %p72 = por %p70, %p71
    %p73 = scmp.ne.s32.totalorder %s62, %s63
    %p74 = scmp.eq.s32.totalorder %s14, 0
    %p75 = por %p73, %p74
    %p76 = scmp.ne.s32.totalorder %s62, %s63
    %p77 = scmp.eq.s32.totalorder %s15, 1
    %p78 = por %p76, %p77
    %p80 = scmp.ne.s32.totalorder %s63, %s79
    %p81 = scmp.eq.s32.totalorder %s15, 0
    %p82 = por %p80, %p81
    %s83 = ssub.s32 %s16, %s28
    %p84 = scmp.eq.s32.totalorder %s83, 0
    %s86 = sadd.s32 %s85, 1
    %s87 = scalar_select %p84, %s85, %s86
    %p90 = pneg %p84
    %p91 = scmp.eq.s32.totalorder %s9, 1
    %p92 = por %p90, %p91
    %p93 = scmp.ne.s32.totalorder %s85, %s88
    %p94 = scmp.eq.s32.totalorder %s9, 0
    %p95 = por %p93, %p94
    %p96 = scmp.ne.s32.totalorder %s85, %s88
    %p97 = scmp.eq.s32.totalorder %s14, 1
    %p98 = por %p96, %p97
    %p99 = scmp.ne.s32.totalorder %s88, %s89
    %p100 = scmp.eq.s32.totalorder %s14, 0
    %p101 = por %p99, %p100
    %p102 = scmp.ne.s32.totalorder %s88, %s89
    %p103 = scmp.eq.s32.totalorder %s15, 1
    %p104 = por %p102, %p103
    %p106 = scmp.ne.s32.totalorder %s89, %s105
    %p107 = scmp.eq.s32.totalorder %s15, 0
    %p108 = por %p106, %p107
    %s109 = ssub.s32 %s16, %s28
    %s110 = ssub.s32 %s17, %s24
    %s111 = sor.u32 %s109, %s110
    %p112 = scmp.eq.s32.totalorder %s111, 0
    %s114 = sadd.s32 %s113, 1
    %s115 = scalar_select %p112, %s113, %s114
    %p118 = pneg %p112
    %p119 = scmp.eq.s32.totalorder %s9, 1
    %p120 = por %p118, %p119
    %p121 = scmp.ne.s32.totalorder %s113, %s116
    %p122 = scmp.eq.s32.totalorder %s9, 0
    %p123 = por %p121, %p122
    %p124 = scmp.ne.s32.totalorder %s113, %s116
    %p125 = scmp.eq.s32.totalorder %s14, 1
    %p126 = por %p124, %p125
    %p127 = scmp.ne.s32.totalorder %s116, %s117
    %p128 = scmp.eq.s32.totalorder %s14, 0
    %p129 = por %p127, %p128
    %p130 = scmp.ne.s32.totalorder %s116, %s117
    %p131 = scmp.eq.s32.totalorder %s15, 1
    %p132 = por %p130, %p131
    %p134 = scmp.ne.s32.totalorder %s117, %s133
    %p135 = scmp.eq.s32.totalorder %s15, 0
    %p136 = por %p134, %p135
    %p137 = scmp.le.s32.totalorder 1, %s9
    %p138 = scmp.lt.s32.totalorder %s9, 3
    %p139 = pnand %p137, %p138
    %p140 = pneg %p139
    // Predicated region
    $region9: #{tpu_custom_call.1} parent=5 // pred_check
      _
    $region10: #{tpu_custom_call.1} parent=5 // pred_check_branch
      %142 = sbr.rel (%p139) target = $region12
    $region11: #{tpu_custom_call.1} parent=5 // pred_region
      %s143 = ssub.s32 %s9, 1
    $region12: #{tpu_custom_call.1} parent=5 // pred_fallthru
      _
    %p144 = scmp.lt.s32.totalorder %s9, 2
    // Predicated region
    $region13: #{tpu_custom_call.1} parent=5 // pred_check
      %p145 = pneg %p144
    $region14: #{tpu_custom_call.1} parent=5 // pred_check_branch
      %147 = sbr.rel (%p145) target = $region16
    $region15: #{tpu_custom_call.1} parent=5 // pred_region
      // Predicated region
      $region17: #{tpu_custom_call.1} parent=15 // pred_check
        %p148 = pneg %p43
      $region18: #{tpu_custom_call.1} parent=15 // pred_check_branch
        %150 = sbr.rel (%p148) target = $region20
      $region19: #{tpu_custom_call.1} parent=15 // pred_region
        %s151 = smul.u32 8, %s16
        %p152 = scmp.lt.s32.totalorder %s151, 15
        %s153 = scalar_select %p152, %s151, 15
        %p154 = scmp.lt.s32.totalorder %s17, 0
        %s155 = scalar_select %p154, %s17, 0
        %s156 = sadd.s32 %s155, %s153
        %s157 = smul.addr %s156, 2
        %s158 = scalar_lea.vmem %s0, %s157
        %s159 = smul.u32 8, %s16
      $region20: #{tpu_custom_call.1} parent=15 // pred_fallthru
        _
      // Predicated region
      $region21: #{tpu_custom_call.1} parent=15 // pred_check
        %p160 = pneg %p69
      $region22: #{tpu_custom_call.1} parent=15 // pred_check_branch
        %162 = sbr.rel (%p160) target = $region24
      $region23: #{tpu_custom_call.1} parent=15 // pred_region
        %s163 = smul.u32 8, %s16
        %p164 = scmp.lt.s32.totalorder %s163, 15
        %s165 = scalar_select %p164, %s163, 15
        %s166 = smul.addr %s165, 8
        %s167 = scalar_lea.vmem %s1, %s166
        %s168 = smul.u32 8, %s16
      $region24: #{tpu_custom_call.1} parent=15 // pred_fallthru
        _
      // Predicated region
      $region25: #{tpu_custom_call.1} parent=15 // pred_check
        %p169 = pneg %p95
      $region26: #{tpu_custom_call.1} parent=15 // pred_check_branch
        %171 = sbr.rel (%p169) target = $region28
      $region27: #{tpu_custom_call.1} parent=15 // pred_region
        %s172 = smul.u32 8, %s16
        %p173 = scmp.lt.s32.totalorder %s172, 15
        %s174 = scalar_select %p173, %s172, 15
        %s175 = scalar_lea.vmem %s2, %s174
        %s176 = smul.u32 8, %s16
      $region28: #{tpu_custom_call.1} parent=15 // pred_fallthru
        _
    $region16: #{tpu_custom_call.1} parent=5 // pred_fallthru
      _
    %p177 = scmp.le.s32.totalorder 1, %s9
    %p178 = scmp.lt.s32.totalorder %s9, 3
    %p179 = pnand %p177, %p178
    %p180 = pneg %p179
    // Predicated region
    $region29: #{tpu_custom_call.1} parent=5 // pred_check
      _
    $region30: #{tpu_custom_call.1} parent=5 // pred_check_branch
      %182 = sbr.rel (%p179) target = $region32
    $region31: #{tpu_custom_call.1} parent=5 // pred_region
      %s183 = ssub.s32 %s9, 1
      %s184 = smul.u32 8, %s18
      %p185 = scmp.lt.s32.totalorder %s184, 15
      %s186 = scalar_select %p185, %s184, 15
      %p187 = scmp.lt.s32.totalorder %s19, 0
      %s188 = scalar_select %p187, %s19, 0
      %s189 = sadd.s32 %s188, %s186
      %s190 = smul.addr %s189, 2
      %s191 = scalar_lea.vmem %s0, %s190
      %p192 = pneg %p49
      %p193 = pneg %p46
      %s194 = smul.u32 8, %s18
      %p195 = scmp.lt.s32.totalorder %s194, 15
      %s196 = scalar_select %p195, %s194, 15
      %s197 = smul.addr %s196, 8
      %s198 = scalar_lea.vmem %s1, %s197
      %p199 = pneg %p75
      %p200 = pneg %p72
      %s201 = smul.u32 8, %s18
      %p202 = scmp.lt.s32.totalorder %s201, 15
      %s203 = scalar_select %p202, %s201, 15
      %s204 = scalar_lea.vmem %s2, %s203
      %p205 = pneg %p101
      %p206 = pneg %p98
      %p207 = pneg %p129
      %p208 = pneg %p126
      %s209 = smul.u32 8, %s18
      %p210 = scmp.lt.s32.totalorder %s209, 15
      %s211 = scalar_select %p210, %s209, 15
      %p212 = scmp.lt.s32.totalorder %s19, 0
      %s213 = scalar_select %p212, %s19, 0
      %s214 = sadd.s32 %s213, %s211
      %s215 = smul.addr %s214, 2
      %s216 = scalar_lea.vmem %s3, %s215
      %s217 = smul.u32 8, %s18
      %p218 = scmp.lt.s32.totalorder %s217, 15
      %s219 = scalar_select %p218, %s217, 15
      %p220 = scmp.lt.s32.totalorder %s19, 0
      %s221 = scalar_select %p220, %s19, 0
      %s222 = sadd.s32 %s221, %s219
      %s223 = smul.addr %s222, 2
      %s224 = scalar_lea.vmem %s0, %s223
      %s225 = smul.u32 8, %s18
      %s226 = smul.u32 8, %s18
      %p227 = scmp.lt.s32.totalorder %s226, 15
      %s228 = scalar_select %p227, %s226, 15
      %s229 = smul.addr %s228, 8
      %s230 = scalar_lea.vmem %s1, %s229
      %s231 = smul.u32 8, %s18
      %s232 = smul.u32 8, %s18
      %p233 = scmp.lt.s32.totalorder %s232, 15
      %s234 = scalar_select %p233, %s232, 15
      %s235 = scalar_lea.vmem %s2, %s234
      %s236 = smul.u32 8, %s18
      %s237 = smul.u32 8, %s18
      %p238 = scmp.lt.s32.totalorder %s237, 15
      %s239 = scalar_select %p238, %s237, 15
      %p240 = scmp.lt.s32.totalorder %s19, 0
      %s241 = scalar_select %p240, %s19, 0
      %s242 = sadd.s32 %s241, %s239
      %s243 = smul.addr %s242, 2
      %s244 = scalar_lea.vmem %s3, %s243
      %s245 = smul.u32 8, %s18
      %v246 = vld [vmem:[%s224] sm:$0x3]
      %v247 = vld [vmem:[%s224 + $0x2] sm:$0x3]
      %v248 = vld [vmem:[%s224 + $0x4] sm:$0x3]
      %v249 = vld [vmem:[%s224 + $0x6] sm:$0x3]
      %v250 = vld [vmem:[%s224 + $0x8] sm:$0x3]
      %v251 = vld [vmem:[%s224 + $0xa] sm:$0x3]
      %v252 = vld [vmem:[%s224 + $0xc] sm:$0x3]
      %v253 = vld [vmem:[%s224 + $0xe] sm:$0x3]
      %v254 = vld [vmem:[%s230] sm:$0xff]
      %v255 = vld [vmem:[%s230 + $0x8] sm:$0xff]
      %v256 = vld [vmem:[%s230 + $0x10] sm:$0xff]
      %v257 = vld [vmem:[%s230 + $0x18] sm:$0xff]
      %v258 = vld [vmem:[%s230 + $0x20] sm:$0xff]
      %v259 = vld [vmem:[%s230 + $0x28] sm:$0xff]
      %v260 = vld [vmem:[%s230 + $0x30] sm:$0xff]
      %v261 = vld [vmem:[%s230 + $0x38] sm:$0xff]
      %v262 = vld [vmem:[%s235] sm:$0x1]
      %v263 = vld [vmem:[%s235 + $0x1] sm:$0x1]
      %v264 = vld [vmem:[%s235 + $0x2] sm:$0x1]
      %v265 = vld [vmem:[%s235 + $0x3] sm:$0x1]
      %v266 = vld [vmem:[%s235 + $0x4] sm:$0x1]
      %v267 = vld [vmem:[%s235 + $0x5] sm:$0x1]
      %v268 = vld [vmem:[%s235 + $0x6] sm:$0x1]
      %v269 = vld [vmem:[%s235 + $0x7] sm:$0x1]
      %v278 = vlaneseq
      %v279 = vshrl.u32 %v278, 7
      %v280 = vsub.s32 0, %v279
      %v281 = vrot.slane %v262, %v280
      %v282 = vlaneseq
      %v283 = vshrl.u32 %v282, 7
      %v284 = vsub.s32 0, %v283
      %v285 = vrot.slane %v263, %v284
      %v286 = vlaneseq
      %v287 = vshrl.u32 %v286, 7
      %v288 = vsub.s32 0, %v287
      %v289 = vrot.slane %v264, %v288
      %v290 = vlaneseq
      %v291 = vshrl.u32 %v290, 7
      %v292 = vsub.s32 0, %v291
      %v293 = vrot.slane %v265, %v292
      %v294 = vlaneseq
      %v295 = vshrl.u32 %v294, 7
      %v296 = vsub.s32 0, %v295
      %v297 = vrot.slane %v266, %v296
      %v298 = vlaneseq
      %v299 = vshrl.u32 %v298, 7
      %v300 = vsub.s32 0, %v299
      %v301 = vrot.slane %v267, %v300
      %v302 = vlaneseq
      %v303 = vshrl.u32 %v302, 7
      %v304 = vsub.s32 0, %v303
      %v305 = vrot.slane %v268, %v304
      %v306 = vlaneseq
      %v307 = vshrl.u32 %v306, 7
      %v308 = vsub.s32 0, %v307
      %v309 = vrot.slane %v269, %v308
      %vm318 = vcmask 64512
      %v320 = vsel %vm318, %v246, 0
      %322 = vmatprep.subr.mxu0 0.0
      %323 = vmatpush1.msra.mxu0 0.0
      %324 = vmatprep.subr.mxu0 0.0
      %325 = vmatpush1.msra.mxu0 0.0
      %326 = vmatprep.subr.mxu0 0.0
      %327 = vmatpush1.msra.mxu0 0.0
      %328 = vmatprep.subr.mxu0 0.0
      %329 = vmatpush1.msra.mxu0 0.0
      %330 = vmatprep.subr.mxu0 0.0
      %331 = vmatpush1.msra.mxu0 0.0
      %332 = vmatprep.subr.mxu0 0.0
      %333 = vmatpush1.msra.mxu0 0.0
      %334 = vmatprep.subr.mxu0 0.0
      %335 = vmatpush1.msra.mxu0 0.0
      %336 = vmatprep.subr.mxu0 0.0
      %337 = vmatpush1.msra.mxu0 0.0
      %338 = vmatprep.subr.mxu0 0.0
      %339 = vmatpush1.msra.mxu0 0.0
      %340 = vmatprep.subr.mxu0 0.0
      %341 = vmatpush1.msra.mxu0 0.0
      %342 = vmatprep.subr.mxu0 0.0
      %343 = vmatpush1.msra.mxu0 0.0
      %344 = vmatprep.subr.mxu0 0.0
      %345 = vmatpush1.msra.mxu0 0.0
      %346 = vmatprep.subr.mxu0 0.0
      %347 = vmatpush1.msra.mxu0 0.0
      %348 = vmatprep.subr.mxu0 0.0
      %349 = vmatpush1.msra.mxu0 0.0
      %350 = vmatprep.subr.mxu0 0.0
      %351 = vmatpush1.msra.mxu0 0.0
      %352 = vmatprep.subr.mxu0 0.0
      %v353 = vand.u32 %v254, 4294901760
      %354 = vmatpush1.msra.mxu0 %v353
      %355 = vmatprep.subr.mxu0 0.0
      %356 = vmatpush2.msra.mxu0 0.0
      %357 = vmatprep.subr.mxu0 0.0
      %358 = vmatpush2.msra.mxu0 0.0
      %359 = vmatprep.subr.mxu0 0.0
      %360 = vmatpush2.msra.mxu0 0.0
      %361 = vmatprep.subr.mxu0 0.0
      %362 = vmatpush2.msra.mxu0 0.0
      %363 = vmatprep.subr.mxu0 0.0
      %364 = vmatpush2.msra.mxu0 0.0
      %365 = vmatprep.subr.mxu0 0.0
      %366 = vmatpush2.msra.mxu0 0.0
      %367 = vmatprep.subr.mxu0 0.0
      %368 = vmatpush2.msra.mxu0 0.0
      %369 = vmatprep.subr.mxu0 0.0
      %370 = vmatpush2.msra.mxu0 0.0
      %371 = vmatprep.subr.mxu0 0.0
      %372 = vmatpush2.msra.mxu0 0.0
      %373 = vmatprep.subr.mxu0 0.0
      %374 = vmatpush2.msra.mxu0 0.0
      %375 = vmatprep.subr.mxu0 0.0
      %376 = vmatpush2.msra.mxu0 0.0
      %377 = vmatprep.subr.mxu0 0.0
      %378 = vmatpush2.msra.mxu0 0.0
      %379 = vmatprep.subr.mxu0 0.0
      %380 = vmatpush2.msra.mxu0 0.0
      %381 = vmatprep.subr.mxu0 0.0
      %382 = vmatpush2.msra.mxu0 0.0
      %383 = vmatprep.subr.mxu0 0.0
      %384 = vmatpush2.msra.mxu0 0.0
      %385 = vmatprep.subr.mxu0 0.0
      %386 = vmatpush2.msra.mxu0 0.0
      %387 = vmatprep.mubr.f32.mxu0 0.0
      %v388 = vand.u32 %v320, 4294901760
      %v389 = vsub.f32 %v320, %v388
      %v390 = vand.u32 %v389, 4294901760
      %v391 = vsub.f32 %v389, %v390
      %v392 = vand.u32 %v391, 4294901760
      %393 = vmatmul.mubr.f32.gmra.mxu0 %v392
      %v394 = vpop.f32.mrf.mxu0
      %v395 = vadd.f32 %v281, %v394
      %v396 = vpop.f32.mrf.mxu0
      %397 = vdwg.mxu0
      %398 = vmatprep.subr.mxu0 0.0
      %399 = vmatpush1.msra.mxu0 0.0
      %400 = vmatprep.subr.mxu0 0.0
      %401 = vmatpush1.msra.mxu0 0.0
      %402 = vmatprep.subr.mxu0 0.0
      %403 = vmatpush1.msra.mxu0 0.0
      %404 = vmatprep.subr.mxu0 0.0
      %405 = vmatpush1.msra.mxu0 0.0
      %406 = vmatprep.subr.mxu0 0.0
      %407 = vmatpush1.msra.mxu0 0.0
      %408 = vmatprep.subr.mxu0 0.0
      %409 = vmatpush1.msra.mxu0 0.0
      %410 = vmatprep.subr.mxu0 0.0
      %411 = vmatpush1.msra.mxu0 0.0
      %412 = vmatprep.subr.mxu0 0.0
      %413 = vmatpush1.msra.mxu0 0.0
      %414 = vmatprep.subr.mxu0 0.0
      %415 = vmatpush1.msra.mxu0 0.0
      %416 = vmatprep.subr.mxu0 0.0
      %417 = vmatpush1.msra.mxu0 0.0
      %418 = vmatprep.subr.mxu0 0.0
      %419 = vmatpush1.msra.mxu0 0.0
      %420 = vmatprep.subr.mxu0 0.0
      %421 = vmatpush1.msra.mxu0 0.0
      %422 = vmatprep.subr.mxu0 0.0
      %423 = vmatpush1.msra.mxu0 0.0
      %424 = vmatprep.subr.mxu0 0.0
      %425 = vmatpush1.msra.mxu0 0.0
      %426 = vmatprep.subr.mxu0 0.0
      %427 = vmatpush1.msra.mxu0 0.0
      %428 = vmatprep.subr.mxu0 0.0
      %v429 = vand.u32 %v254, 4294901760
      %v430 = vsub.f32 %v254, %v429
      %v431 = vand.u32 %v430, 4294901760
      %v432 = vsub.f32 %v430, %v431
      %v433 = vand.u32 %v432, 4294901760
      %434 = vmatpush1.msra.mxu0 %v433
      %435 = vmatprep.subr.mxu0 0.0
      %436 = vmatpush2.msra.mxu0 0.0
      %437 = vmatprep.subr.mxu0 0.0
      %438 = vmatpush2.msra.mxu0 0.0
      %439 = vmatprep.subr.mxu0 0.0
      %440 = vmatpush2.msra.mxu0 0.0
      %441 = vmatprep.subr.mxu0 0.0
      %442 = vmatpush2.msra.mxu0 0.0
      %443 = vmatprep.subr.mxu0 0.0
      %444 = vmatpush2.msra.mxu0 0.0
      %445 = vmatprep.subr.mxu0 0.0
      %446 = vmatpush2.msra.mxu0 0.0
      %447 = vmatprep.subr.mxu0 0.0
      %448 = vmatpush2.msra.mxu0 0.0
      %449 = vmatprep.subr.mxu0 0.0
      %450 = vmatpush2.msra.mxu0 0.0
      %451 = vmatprep.subr.mxu0 0.0
      %452 = vmatpush2.msra.mxu0 0.0
      %453 = vmatprep.subr.mxu0 0.0
      %454 = vmatpush2.msra.mxu0 0.0
      %455 = vmatprep.subr.mxu0 0.0
      %456 = vmatpush2.msra.mxu0 0.0
      %457 = vmatprep.subr.mxu0 0.0
      %458 = vmatpush2.msra.mxu0 0.0
      %459 = vmatprep.subr.mxu0 0.0
      %460 = vmatpush2.msra.mxu0 0.0
      %461 = vmatprep.subr.mxu0 0.0
      %462 = vmatpush2.msra.mxu0 0.0
      %463 = vmatprep.subr.mxu0 0.0
      %464 = vmatpush2.msra.mxu0 0.0
      %465 = vmatprep.subr.mxu0 0.0
      %466 = vmatpush2.msra.mxu0 0.0
      %467 = vmatprep.mubr.f32.mxu0 0.0
      %v468 = vand.u32 %v320, 4294901760
      %469 = vmatmul.mubr.f32.gmra.mxu0 %v468
      %v470 = vpop.f32.mrf.mxu0
      %v471 = vadd.f32 %v395, %v470
      %v472 = vpop.f32.mrf.mxu0
      %473 = vdwg.mxu0
      %474 = vmatprep.subr.mxu0 0.0
      %475 = vmatpush1.msra.mxu0 0.0
      %476 = vmatprep.subr.mxu0 0.0
      %477 = vmatpush1.msra.mxu0 0.0
      %478 = vmatprep.subr.mxu0 0.0
      %479 = vmatpush1.msra.mxu0 0.0
      %480 = vmatprep.subr.mxu0 0.0
      %481 = vmatpush1.msra.mxu0 0.0
      %482 = vmatprep.subr.mxu0 0.0
      %483 = vmatpush1.msra.mxu0 0.0
      %484 = vmatprep.subr.mxu0 0.0
      %485 = vmatpush1.msra.mxu0 0.0
      %486 = vmatprep.subr.mxu0 0.0
      %487 = vmatpush1.msra.mxu0 0.0
      %488 = vmatprep.subr.mxu0 0.0
      %489 = vmatpush1.msra.mxu0 0.0
      %490 = vmatprep.subr.mxu0 0.0
      %491 = vmatpush1.msra.mxu0 0.0
      %492 = vmatprep.subr.mxu0 0.0
      %493 = vmatpush1.msra.mxu0 0.0
      %494 = vmatprep.subr.mxu0 0.0
      %495 = vmatpush1.msra.mxu0 0.0
      %496 = vmatprep.subr.mxu0 0.0
      %497 = vmatpush1.msra.mxu0 0.0
      %498 = vmatprep.subr.mxu0 0.0
      %499 = vmatpush1.msra.mxu0 0.0
      %500 = vmatprep.subr.mxu0 0.0
      %501 = vmatpush1.msra.mxu0 0.0
      %502 = vmatprep.subr.mxu0 0.0
      %503 = vmatpush1.msra.mxu0 0.0
      %504 = vmatprep.subr.mxu0 0.0
      %v505 = vand.u32 %v254, 4294901760
      %v506 = vsub.f32 %v254, %v505
      %507 = vmatpush1.msra.mxu0 %v506
      %508 = vmatprep.subr.mxu0 0.0
      %509 = vmatpush2.msra.mxu0 0.0
      %510 = vmatprep.subr.mxu0 0.0
      %511 = vmatpush2.msra.mxu0 0.0
      %512 = vmatprep.subr.mxu0 0.0
      %513 = vmatpush2.msra.mxu0 0.0
      %514 = vmatprep.subr.mxu0 0.0
      %515 = vmatpush2.msra.mxu0 0.0
      %516 = vmatprep.subr.mxu0 0.0
      %517 = vmatpush2.msra.mxu0 0.0
      %518 = vmatprep.subr.mxu0 0.0
      %519 = vmatpush2.msra.mxu0 0.0
      %520 = vmatprep.subr.mxu0 0.0
      %521 = vmatpush2.msra.mxu0 0.0
      %522 = vmatprep.subr.mxu0 0.0
      %523 = vmatpush2.msra.mxu0 0.0
      %524 = vmatprep.subr.mxu0 0.0
      %525 = vmatpush2.msra.mxu0 0.0
      %526 = vmatprep.subr.mxu0 0.0
      %527 = vmatpush2.msra.mxu0 0.0
      %528 = vmatprep.subr.mxu0 0.0
      %529 = vmatpush2.msra.mxu0 0.0
      %530 = vmatprep.subr.mxu0 0.0
      %531 = vmatpush2.msra.mxu0 0.0
      %532 = vmatprep.subr.mxu0 0.0
      %533 = vmatpush2.msra.mxu0 0.0
      %534 = vmatprep.subr.mxu0 0.0
      %535 = vmatpush2.msra.mxu0 0.0
      %536 = vmatprep.subr.mxu0 0.0
      %537 = vmatpush2.msra.mxu0 0.0
      %538 = vmatprep.subr.mxu0 0.0
      %539 = vmatpush2.msra.mxu0 0.0
      %540 = vmatprep.mubr.f32.mxu0 0.0
      %v541 = vand.u32 %v320, 4294901760
      %v542 = vsub.f32 %v320, %v541
      %543 = vmatmul.mubr.f32.gmra.mxu0 %v542
      %v544 = vpop.f32.mrf.mxu0
      %v545 = vadd.f32 %v471, %v544
      %v546 = vpop.f32.mrf.mxu0
      %547 = vdwg.mxu0
      %548 = vmatprep.subr.mxu0 0.0
      %549 = vmatpush1.msra.mxu0 0.0
      %550 = vmatprep.subr.mxu0 0.0
      %551 = vmatpush1.msra.mxu0 0.0
      %552 = vmatprep.subr.mxu0 0.0
      %553 = vmatpush1.msra.mxu0 0.0
      %554 = vmatprep.subr.mxu0 0.0
      %555 = vmatpush1.msra.mxu0 0.0
      %556 = vmatprep.subr.mxu0 0.0
      %557 = vmatpush1.msra.mxu0 0.0
      %558 = vmatprep.subr.mxu0 0.0
      %559 = vmatpush1.msra.mxu0 0.0
      %560 = vmatprep.subr.mxu0 0.0
      %561 = vmatpush1.msra.mxu0 0.0
      %562 = vmatprep.subr.mxu0 0.0
      %563 = vmatpush1.msra.mxu0 0.0
      %564 = vmatprep.subr.mxu0 0.0
      %565 = vmatpush1.msra.mxu0 0.0
      %566 = vmatprep.subr.mxu0 0.0
      %567 = vmatpush1.msra.mxu0 0.0
      %568 = vmatprep.subr.mxu0 0.0
      %569 = vmatpush1.msra.mxu0 0.0
      %570 = vmatprep.subr.mxu0 0.0
      %571 = vmatpush1.msra.mxu0 0.0
      %572 = vmatprep.subr.mxu0 0.0
      %573 = vmatpush1.msra.mxu0 0.0
      %574 = vmatprep.subr.mxu0 0.0
      %575 = vmatpush1.msra.mxu0 0.0
      %576 = vmatprep.subr.mxu0 0.0
      %577 = vmatpush1.msra.mxu0 0.0
      %578 = vmatprep.subr.mxu0 0.0
      %v579 = vand.u32 %v254, 4294901760
      %580 = vmatpush1.msra.mxu0 %v579
      %581 = vmatprep.subr.mxu0 0.0
      %582 = vmatpush2.msra.mxu0 0.0
      %583 = vmatprep.subr.mxu0 0.0
      %584 = vmatpush2.msra.mxu0 0.0
      %585 = vmatprep.subr.mxu0 0.0
      %586 = vmatpush2.msra.mxu0 0.0
      %587 = vmatprep.subr.mxu0 0.0
      %588 = vmatpush2.msra.mxu0 0.0
      %589 = vmatprep.subr.mxu0 0.0
      %590 = vmatpush2.msra.mxu0 0.0
      %591 = vmatprep.subr.mxu0 0.0
      %592 = vmatpush2.msra.mxu0 0.0
      %593 = vmatprep.subr.mxu0 0.0
      %594 = vmatpush2.msra.mxu0 0.0
      %595 = vmatprep.subr.mxu0 0.0
      %596 = vmatpush2.msra.mxu0 0.0
      %597 = vmatprep.subr.mxu0 0.0
      %598 = vmatpush2.msra.mxu0 0.0
      %599 = vmatprep.subr.mxu0 0.0
      %600 = vmatpush2.msra.mxu0 0.0
      %601 = vmatprep.subr.mxu0 0.0
      %602 = vmatpush2.msra.mxu0 0.0
      %603 = vmatprep.subr.mxu0 0.0
      %604 = vmatpush2.msra.mxu0 0.0
      %605 = vmatprep.subr.mxu0 0.0
      %606 = vmatpush2.msra.mxu0 0.0
      %607 = vmatprep.subr.mxu0 0.0
      %608 = vmatpush2.msra.mxu0 0.0
      %609 = vmatprep.subr.mxu0 0.0
      %610 = vmatpush2.msra.mxu0 0.0
      %611 = vmatprep.subr.mxu0 0.0
      %612 = vmatpush2.msra.mxu0 0.0
      %613 = vmatprep.mubr.f32.mxu0 0.0
      %v614 = vand.u32 %v320, 4294901760
      %v615 = vsub.f32 %v320, %v614
      %v616 = vand.u32 %v615, 4294901760
      %617 = vmatmul.mubr.f32.gmra.mxu0 %v616
      %v618 = vpop.f32.mrf.mxu0
      %v619 = vadd.f32 %v545, %v618
      %v620 = vpop.f32.mrf.mxu0
      %621 = vdwg.mxu0
      %622 = vmatprep.subr.mxu0 0.0
      %623 = vmatpush1.msra.mxu0 0.0
      %624 = vmatprep.subr.mxu0 0.0
      %625 = vmatpush1.msra.mxu0 0.0
      %626 = vmatprep.subr.mxu0 0.0
      %627 = vmatpush1.msra.mxu0 0.0
      %628 = vmatprep.subr.mxu0 0.0
      %629 = vmatpush1.msra.mxu0 0.0
      %630 = vmatprep.subr.mxu0 0.0
      %631 = vmatpush1.msra.mxu0 0.0
      %632 = vmatprep.subr.mxu0 0.0
      %633 = vmatpush1.msra.mxu0 0.0
      %634 = vmatprep.subr.mxu0 0.0
      %635 = vmatpush1.msra.mxu0 0.0
      %636 = vmatprep.subr.mxu0 0.0
      %637 = vmatpush1.msra.mxu0 0.0
      %638 = vmatprep.subr.mxu0 0.0
      %639 = vmatpush1.msra.mxu0 0.0
      %640 = vmatprep.subr.mxu0 0.0
      %641 = vmatpush1.msra.mxu0 0.0
      %642 = vmatprep.subr.mxu0 0.0
      %643 = vmatpush1.msra.mxu0 0.0
      %644 = vmatprep.subr.mxu0 0.0
      %645 = vmatpush1.msra.mxu0 0.0
      %646 = vmatprep.subr.mxu0 0.0
      %647 = vmatpush1.msra.mxu0 0.0
      %648 = vmatprep.subr.mxu0 0.0
      %649 = vmatpush1.msra.mxu0 0.0
      %650 = vmatprep.subr.mxu0 0.0
      %651 = vmatpush1.msra.mxu0 0.0
      %652 = vmatprep.subr.mxu0 0.0
      %v653 = vand.u32 %v254, 4294901760
      %v654 = vsub.f32 %v254, %v653
      %v655 = vand.u32 %v654, 4294901760
      %656 = vmatpush1.msra.mxu0 %v655
      %657 = vmatprep.subr.mxu0 0.0
      %658 = vmatpush2.msra.mxu0 0.0
      %659 = vmatprep.subr.mxu0 0.0
      %660 = vmatpush2.msra.mxu0 0.0
      %661 = vmatprep.subr.mxu0 0.0
      %662 = vmatpush2.msra.mxu0 0.0
      %663 = vmatprep.subr.mxu0 0.0
      %664 = vmatpush2.msra.mxu0 0.0
      %665 = vmatprep.subr.mxu0 0.0
      %666 = vmatpush2.msra.mxu0 0.0
      %667 = vmatprep.subr.mxu0 0.0
      %668 = vmatpush2.msra.mxu0 0.0
      %669 = vmatprep.subr.mxu0 0.0
      %670 = vmatpush2.msra.mxu0 0.0
      %671 = vmatprep.subr.mxu0 0.0
      %672 = vmatpush2.msra.mxu0 0.0
      %673 = vmatprep.subr.mxu0 0.0
      %674 = vmatpush2.msra.mxu0 0.0
      %675 = vmatprep.subr.mxu0 0.0
      %676 = vmatpush2.msra.mxu0 0.0
      %677 = vmatprep.subr.mxu0 0.0
      %678 = vmatpush2.msra.mxu0 0.0
      %679 = vmatprep.subr.mxu0 0.0
      %680 = vmatpush2.msra.mxu0 0.0
      %681 = vmatprep.subr.mxu0 0.0
      %682 = vmatpush2.msra.mxu0 0.0
      %683 = vmatprep.subr.mxu0 0.0
      %684 = vmatpush2.msra.mxu0 0.0
      %685 = vmatprep.subr.mxu0 0.0
      %686 = vmatpush2.msra.mxu0 0.0
      %687 = vmatprep.subr.mxu0 0.0
      %688 = vmatpush2.msra.mxu0 0.0
      %689 = vmatprep.mubr.f32.mxu0 0.0
      %v690 = vand.u32 %v320, 4294901760
      %691 = vmatmul.mubr.f32.gmra.mxu0 %v690
      %v692 = vpop.f32.mrf.mxu0
      %v693 = vadd.f32 %v619, %v692
      %v694 = vpop.f32.mrf.mxu0
      %695 = vdwg.mxu0
      %696 = vmatprep.subr.mxu0 0.0
      %697 = vmatpush1.msra.mxu0 0.0
      %698 = vmatprep.subr.mxu0 0.0
      %699 = vmatpush1.msra.mxu0 0.0
      %700 = vmatprep.subr.mxu0 0.0
      %701 = vmatpush1.msra.mxu0 0.0
      %702 = vmatprep.subr.mxu0 0.0
      %703 = vmatpush1.msra.mxu0 0.0
      %704 = vmatprep.subr.mxu0 0.0
      %705 = vmatpush1.msra.mxu0 0.0
      %706 = vmatprep.subr.mxu0 0.0
      %707 = vmatpush1.msra.mxu0 0.0
      %708 = vmatprep.subr.mxu0 0.0
      %709 = vmatpush1.msra.mxu0 0.0
      %710 = vmatprep.subr.mxu0 0.0
      %711 = vmatpush1.msra.mxu0 0.0
      %712 = vmatprep.subr.mxu0 0.0
      %713 = vmatpush1.msra.mxu0 0.0
      %714 = vmatprep.subr.mxu0 0.0
      %715 = vmatpush1.msra.mxu0 0.0
      %716 = vmatprep.subr.mxu0 0.0
      %717 = vmatpush1.msra.mxu0 0.0
      %718 = vmatprep.subr.mxu0 0.0
      %719 = vmatpush1.msra.mxu0 0.0
      %720 = vmatprep.subr.mxu0 0.0
      %721 = vmatpush1.msra.mxu0 0.0
      %722 = vmatprep.subr.mxu0 0.0
      %723 = vmatpush1.msra.mxu0 0.0
      %724 = vmatprep.subr.mxu0 0.0
      %725 = vmatpush1.msra.mxu0 0.0
      %726 = vmatprep.subr.mxu0 0.0
      %v727 = vand.u32 %v254, 4294901760
      %728 = vmatpush1.msra.mxu0 %v727
      %729 = vmatprep.subr.mxu0 0.0
      %730 = vmatpush2.msra.mxu0 0.0
      %731 = vmatprep.subr.mxu0 0.0
      %732 = vmatpush2.msra.mxu0 0.0
      %733 = vmatprep.subr.mxu0 0.0
      %734 = vmatpush2.msra.mxu0 0.0
      %735 = vmatprep.subr.mxu0 0.0
      %736 = vmatpush2.msra.mxu0 0.0
      %737 = vmatprep.subr.mxu0 0.0
      %738 = vmatpush2.msra.mxu0 0.0
      %739 = vmatprep.subr.mxu0 0.0
      %740 = vmatpush2.msra.mxu0 0.0
      %741 = vmatprep.subr.mxu0 0.0
      %742 = vmatpush2.msra.mxu0 0.0
      %743 = vmatprep.subr.mxu0 0.0
      %744 = vmatpush2.msra.mxu0 0.0
      %745 = vmatprep.subr.mxu0 0.0
      %746 = vmatpush2.msra.mxu0 0.0
      %747 = vmatprep.subr.mxu0 0.0
      %748 = vmatpush2.msra.mxu0 0.0
      %749 = vmatprep.subr.mxu0 0.0
      %750 = vmatpush2.msra.mxu0 0.0
      %751 = vmatprep.subr.mxu0 0.0
      %752 = vmatpush2.msra.mxu0 0.0
      %753 = vmatprep.subr.mxu0 0.0
      %754 = vmatpush2.msra.mxu0 0.0
      %755 = vmatprep.subr.mxu0 0.0
      %756 = vmatpush2.msra.mxu0 0.0
      %757 = vmatprep.subr.mxu0 0.0
      %758 = vmatpush2.msra.mxu0 0.0
      %759 = vmatprep.subr.mxu0 0.0
      %760 = vmatpush2.msra.mxu0 0.0
      %761 = vmatprep.mubr.f32.mxu0 0.0
      %v762 = vand.u32 %v320, 4294901760
      %763 = vmatmul.mubr.f32.gmra.mxu0 %v762
      %v764 = vpop.f32.mrf.mxu0
      %v765 = vadd.f32 %v693, %v764
      %v766 = vpop.f32.mrf.mxu0
      %767 = vdwg.mxu0
      %v769 = vsel %vm318, %v247, 0
      %771 = vmatprep.subr.mxu0 0.0
      %772 = vmatpush1.msra.mxu0 0.0
      %773 = vmatprep.subr.mxu0 0.0
      %774 = vmatpush1.msra.mxu0 0.0
      %775 = vmatprep.subr.mxu0 0.0
      %776 = vmatpush1.msra.mxu0 0.0
      %777 = vmatprep.subr.mxu0 0.0
      %778 = vmatpush1.msra.mxu0 0.0
      %779 = vmatprep.subr.mxu0 0.0
      %780 = vmatpush1.msra.mxu0 0.0
      %781 = vmatprep.subr.mxu0 0.0
      %782 = vmatpush1.msra.mxu0 0.0
      %783 = vmatprep.subr.mxu0 0.0
      %784 = vmatpush1.msra.mxu0 0.0
      %785 = vmatprep.subr.mxu0 0.0
      %786 = vmatpush1.msra.mxu0 0.0
      %787 = vmatprep.subr.mxu0 0.0
      %788 = vmatpush1.msra.mxu0 0.0
      %789 = vmatprep.subr.mxu0 0.0
      %790 = vmatpush1.msra.mxu0 0.0
      %791 = vmatprep.subr.mxu0 0.0
      %792 = vmatpush1.msra.mxu0 0.0
      %793 = vmatprep.subr.mxu0 0.0
      %794 = vmatpush1.msra.mxu0 0.0
      %795 = vmatprep.subr.mxu0 0.0
      %796 = vmatpush1.msra.mxu0 0.0
      %797 = vmatprep.subr.mxu0 0.0
      %798 = vmatpush1.msra.mxu0 0.0
      %799 = vmatprep.subr.mxu0 0.0
      %800 = vmatpush1.msra.mxu0 0.0
      %801 = vmatprep.subr.mxu0 0.0
      %v802 = vand.u32 %v255, 4294901760
      %803 = vmatpush1.msra.mxu0 %v802
      %804 = vmatprep.subr.mxu0 0.0
      %805 = vmatpush2.msra.mxu0 0.0
      %806 = vmatprep.subr.mxu0 0.0
      %807 = vmatpush2.msra.mxu0 0.0
      %808 = vmatprep.subr.mxu0 0.0
      %809 = vmatpush2.msra.mxu0 0.0
      %810 = vmatprep.subr.mxu0 0.0
      %811 = vmatpush2.msra.mxu0 0.0
      %812 = vmatprep.subr.mxu0 0.0
      %813 = vmatpush2.msra.mxu0 0.0
      %814 = vmatprep.subr.mxu0 0.0
      %815 = vmatpush2.msra.mxu0 0.0
      %816 = vmatprep.subr.mxu0 0.0
      %817 = vmatpush2.msra.mxu0 0.0
      %818 = vmatprep.subr.mxu0 0.0
      %819 = vmatpush2.msra.mxu0 0.0
      %820 = vmatprep.subr.mxu0 0.0
      %821 = vmatpush2.msra.mxu0 0.0
      %822 = vmatprep.subr.mxu0 0.0
      %823 = vmatpush2.msra.mxu0 0.0
      %824 = vmatprep.subr.mxu0 0.0
      %825 = vmatpush2.msra.mxu0 0.0
      %826 = vmatprep.subr.mxu0 0.0
      %827 = vmatpush2.msra.mxu0 0.0
      %828 = vmatprep.subr.mxu0 0.0
      %829 = vmatpush2.msra.mxu0 0.0
      %830 = vmatprep.subr.mxu0 0.0
      %831 = vmatpush2.msra.mxu0 0.0
      %832 = vmatprep.subr.mxu0 0.0
      %833 = vmatpush2.msra.mxu0 0.0
      %834 = vmatprep.subr.mxu0 0.0
      %835 = vmatpush2.msra.mxu0 0.0
      %836 = vmatprep.mubr.f32.mxu0 0.0
      %v837 = vand.u32 %v769, 4294901760
      %v838 = vsub.f32 %v769, %v837
      %v839 = vand.u32 %v838, 4294901760
      %v840 = vsub.f32 %v838, %v839
      %v841 = vand.u32 %v840, 4294901760
      %842 = vmatmul.mubr.f32.gmra.mxu0 %v841
      %v843 = vpop.f32.mrf.mxu0
      %v844 = vadd.f32 %v285, %v843
      %v845 = vpop.f32.mrf.mxu0
      %846 = vdwg.mxu0
      %847 = vmatprep.subr.mxu0 0.0
      %848 = vmatpush1.msra.mxu0 0.0
      %849 = vmatprep.subr.mxu0 0.0
      %850 = vmatpush1.msra.mxu0 0.0
      %851 = vmatprep.subr.mxu0 0.0
      %852 = vmatpush1.msra.mxu0 0.0
      %853 = vmatprep.subr.mxu0 0.0
      %854 = vmatpush1.msra.mxu0 0.0
      %855 = vmatprep.subr.mxu0 0.0
      %856 = vmatpush1.msra.mxu0 0.0
      %857 = vmatprep.subr.mxu0 0.0
      %858 = vmatpush1.msra.mxu0 0.0
      %859 = vmatprep.subr.mxu0 0.0
      %860 = vmatpush1.msra.mxu0 0.0
      %861 = vmatprep.subr.mxu0 0.0
      %862 = vmatpush1.msra.mxu0 0.0
      %863 = vmatprep.subr.mxu0 0.0
      %864 = vmatpush1.msra.mxu0 0.0
      %865 = vmatprep.subr.mxu0 0.0
      %866 = vmatpush1.msra.mxu0 0.0
      %867 = vmatprep.subr.mxu0 0.0
      %868 = vmatpush1.msra.mxu0 0.0
      %869 = vmatprep.subr.mxu0 0.0
      %870 = vmatpush1.msra.mxu0 0.0
      %871 = vmatprep.subr.mxu0 0.0
      %872 = vmatpush1.msra.mxu0 0.0
      %873 = vmatprep.subr.mxu0 0.0
      %874 = vmatpush1.msra.mxu0 0.0
      %875 = vmatprep.subr.mxu0 0.0
      %876 = vmatpush1.msra.mxu0 0.0
      %877 = vmatprep.subr.mxu0 0.0
      %v878 = vand.u32 %v255, 4294901760
      %v879 = vsub.f32 %v255, %v878
      %v880 = vand.u32 %v879, 4294901760
      %v881 = vsub.f32 %v879, %v880
      %v882 = vand.u32 %v881, 4294901760
      %883 = vmatpush1.msra.mxu0 %v882
      %884 = vmatprep.subr.mxu0 0.0
      %885 = vmatpush2.msra.mxu0 0.0
      %886 = vmatprep.subr.mxu0 0.0
      %887 = vmatpush2.msra.mxu0 0.0
      %888 = vmatprep.subr.mxu0 0.0
      %889 = vmatpush2.msra.mxu0 0.0
      %890 = vmatprep.subr.mxu0 0.0
      %891 = vmatpush2.msra.mxu0 0.0
      %892 = vmatprep.subr.mxu0 0.0
      %893 = vmatpush2.msra.mxu0 0.0
      %894 = vmatprep.subr.mxu0 0.0
      %895 = vmatpush2.msra.mxu0 0.0
      %896 = vmatprep.subr.mxu0 0.0
      %897 = vmatpush2.msra.mxu0 0.0
      %898 = vmatprep.subr.mxu0 0.0
      %899 = vmatpush2.msra.mxu0 0.0
      %900 = vmatprep.subr.mxu0 0.0
      %901 = vmatpush2.msra.mxu0 0.0
      %902 = vmatprep.subr.mxu0 0.0
      %903 = vmatpush2.msra.mxu0 0.0
      %904 = vmatprep.subr.mxu0 0.0
      %905 = vmatpush2.msra.mxu0 0.0
      %906 = vmatprep.subr.mxu0 0.0
      %907 = vmatpush2.msra.mxu0 0.0
      %908 = vmatprep.subr.mxu0 0.0
      %909 = vmatpush2.msra.mxu0 0.0
      %910 = vmatprep.subr.mxu0 0.0
      %911 = vmatpush2.msra.mxu0 0.0
      %912 = vmatprep.subr.mxu0 0.0
      %913 = vmatpush2.msra.mxu0 0.0
      %914 = vmatprep.subr.mxu0 0.0
      %915 = vmatpush2.msra.mxu0 0.0
      %916 = vmatprep.mubr.f32.mxu0 0.0
      %v917 = vand.u32 %v769, 4294901760
      %918 = vmatmul.mubr.f32.gmra.mxu0 %v917
      %v919 = vpop.f32.mrf.mxu0
      %v920 = vadd.f32 %v844, %v919
      %v921 = vpop.f32.mrf.mxu0
      %922 = vdwg.mxu0
      %923 = vmatprep.subr.mxu0 0.0
      %924 = vmatpush1.msra.mxu0 0.0
      %925 = vmatprep.subr.mxu0 0.0
      %926 = vmatpush1.msra.mxu0 0.0
      %927 = vmatprep.subr.mxu0 0.0
      %928 = vmatpush1.msra.mxu0 0.0
      %929 = vmatprep.subr.mxu0 0.0
      %930 = vmatpush1.msra.mxu0 0.0
      %931 = vmatprep.subr.mxu0 0.0
      %932 = vmatpush1.msra.mxu0 0.0
      %933 = vmatprep.subr.mxu0 0.0
      %934 = vmatpush1.msra.mxu0 0.0
      %935 = vmatprep.subr.mxu0 0.0
      %936 = vmatpush1.msra.mxu0 0.0
      %937 = vmatprep.subr.mxu0 0.0
      %938 = vmatpush1.msra.mxu0 0.0
      %939 = vmatprep.subr.mxu0 0.0
      %940 = vmatpush1.msra.mxu0 0.0
      %941 = vmatprep.subr.mxu0 0.0
      %942 = vmatpush1.msra.mxu0 0.0
      %943 = vmatprep.subr.mxu0 0.0
      %944 = vmatpush1.msra.mxu0 0.0
      %945 = vmatprep.subr.mxu0 0.0
      %946 = vmatpush1.msra.mxu0 0.0
      %947 = vmatprep.subr.mxu0 0.0
      %948 = vmatpush1.msra.mxu0 0.0
      %949 = vmatprep.subr.mxu0 0.0
      %950 = vmatpush1.msra.mxu0 0.0
      %951 = vmatprep.subr.mxu0 0.0
      %952 = vmatpush1.msra.mxu0 0.0
      %953 = vmatprep.subr.mxu0 0.0
      %v954 = vand.u32 %v255, 4294901760
      %v955 = vsub.f32 %v255, %v954
      %956 = vmatpush1.msra.mxu0 %v955
      %957 = vmatprep.subr.mxu0 0.0
      %958 = vmatpush2.msra.mxu0 0.0
      %959 = vmatprep.subr.mxu0 0.0
      %960 = vmatpush2.msra.mxu0 0.0
      %961 = vmatprep.subr.mxu0 0.0
      %962 = vmatpush2.msra.mxu0 0.0
      %963 = vmatprep.subr.mxu0 0.0
      %964 = vmatpush2.msra.mxu0 0.0
      %965 = vmatprep.subr.mxu0 0.0
      %966 = vmatpush2.msra.mxu0 0.0
      %967 = vmatprep.subr.mxu0 0.0
      %968 = vmatpush2.msra.mxu0 0.0
      %969 = vmatprep.subr.mxu0 0.0
      %970 = vmatpush2.msra.mxu0 0.0
      %971 = vmatprep.subr.mxu0 0.0
      %972 = vmatpush2.msra.mxu0 0.0
      %973 = vmatprep.subr.mxu0 0.0
      %974 = vmatpush2.msra.mxu0 0.0
      %975 = vmatprep.subr.mxu0 0.0
      %976 = vmatpush2.msra.mxu0 0.0
      %977 = vmatprep.subr.mxu0 0.0
      %978 = vmatpush2.msra.mxu0 0.0
      %979 = vmatprep.subr.mxu0 0.0
      %980 = vmatpush2.msra.mxu0 0.0
      %981 = vmatprep.subr.mxu0 0.0
      %982 = vmatpush2.msra.mxu0 0.0
      %983 = vmatprep.subr.mxu0 0.0
      %984 = vmatpush2.msra.mxu0 0.0
      %985 = vmatprep.subr.mxu0 0.0
      %986 = vmatpush2.msra.mxu0 0.0
      %987 = vmatprep.subr.mxu0 0.0
      %988 = vmatpush2.msra.mxu0 0.0
      %989 = vmatprep.mubr.f32.mxu0 0.0
      %v990 = vand.u32 %v769, 4294901760
      %v991 = vsub.f32 %v769, %v990
      %992 = vmatmul.mubr.f32.gmra.mxu0 %v991
      %v993 = vpop.f32.mrf.mxu0
      %v994 = vadd.f32 %v920, %v993
      %v995 = vpop.f32.mrf.mxu0
      %996 = vdwg.mxu0
      %997 = vmatprep.subr.mxu0 0.0
      %998 = vmatpush1.msra.mxu0 0.0
      %999 = vmatprep.subr.mxu0 0.0
      %1000 = vmatpush1.msra.mxu0 0.0
      %1001 = vmatprep.subr.mxu0 0.0
      %1002 = vmatpush1.msra.mxu0 0.0
      %1003 = vmatprep.subr.mxu0 0.0
      %1004 = vmatpush1.msra.mxu0 0.0
      %1005 = vmatprep.subr.mxu0 0.0
      %1006 = vmatpush1.msra.mxu0 0.0
      %1007 = vmatprep.subr.mxu0 0.0
      %1008 = vmatpush1.msra.mxu0 0.0
      %1009 = vmatprep.subr.mxu0 0.0
      %1010 = vmatpush1.msra.mxu0 0.0
      %1011 = vmatprep.subr.mxu0 0.0
      %1012 = vmatpush1.msra.mxu0 0.0
      %1013 = vmatprep.subr.mxu0 0.0
      %1014 = vmatpush1.msra.mxu0 0.0
      %1015 = vmatprep.subr.mxu0 0.0
      %1016 = vmatpush1.msra.mxu0 0.0
      %1017 = vmatprep.subr.mxu0 0.0
      %1018 = vmatpush1.msra.mxu0 0.0
      %1019 = vmatprep.subr.mxu0 0.0
      %1020 = vmatpush1.msra.mxu0 0.0
      %1021 = vmatprep.subr.mxu0 0.0
      %1022 = vmatpush1.msra.mxu0 0.0
      %1023 = vmatprep.subr.mxu0 0.0
      %1024 = vmatpush1.msra.mxu0 0.0
      %1025 = vmatprep.subr.mxu0 0.0
      %1026 = vmatpush1.msra.mxu0 0.0
      %1027 = vmatprep.subr.mxu0 0.0
      %v1028 = vand.u32 %v255, 4294901760
      %1029 = vmatpush1.msra.mxu0 %v1028
      %1030 = vmatprep.subr.mxu0 0.0
      %1031 = vmatpush2.msra.mxu0 0.0
      %1032 = vmatprep.subr.mxu0 0.0
      %1033 = vmatpush2.msra.mxu0 0.0
      %1034 = vmatprep.subr.mxu0 0.0
      %1035 = vmatpush2.msra.mxu0 0.0
      %1036 = vmatprep.subr.mxu0 0.0
      %1037 = vmatpush2.msra.mxu0 0.0
      %1038 = vmatprep.subr.mxu0 0.0
      %1039 = vmatpush2.msra.mxu0 0.0
      %1040 = vmatprep.subr.mxu0 0.0
      %1041 = vmatpush2.msra.mxu0 0.0
      %1042 = vmatprep.subr.mxu0 0.0
      %1043 = vmatpush2.msra.mxu0 0.0
      %1044 = vmatprep.subr.mxu0 0.0
      %1045 = vmatpush2.msra.mxu0 0.0
      %1046 = vmatprep.subr.mxu0 0.0
      %1047 = vmatpush2.msra.mxu0 0.0
      %1048 = vmatprep.subr.mxu0 0.0
      %1049 = vmatpush2.msra.mxu0 0.0
      %1050 = vmatprep.subr.mxu0 0.0
      %1051 = vmatpush2.msra.mxu0 0.0
      %1052 = vmatprep.subr.mxu0 0.0
      %1053 = vmatpush2.msra.mxu0 0.0
      %1054 = vmatprep.subr.mxu0 0.0
      %1055 = vmatpush2.msra.mxu0 0.0
      %1056 = vmatprep.subr.mxu0 0.0
      %1057 = vmatpush2.msra.mxu0 0.0
      %1058 = vmatprep.subr.mxu0 0.0
      %1059 = vmatpush2.msra.mxu0 0.0
      %1060 = vmatprep.subr.mxu0 0.0
      %1061 = vmatpush2.msra.mxu0 0.0
      %1062 = vmatprep.mubr.f32.mxu0 0.0
      %v1063 = vand.u32 %v769, 4294901760
      %v1064 = vsub.f32 %v769, %v1063
      %v1065 = vand.u32 %v1064, 4294901760
      %1066 = vmatmul.mubr.f32.gmra.mxu0 %v1065
      %v1067 = vpop.f32.mrf.mxu0
      %v1068 = vadd.f32 %v994, %v1067
      %v1069 = vpop.f32.mrf.mxu0
      %1070 = vdwg.mxu0
      %1071 = vmatprep.subr.mxu0 0.0
      %1072 = vmatpush1.msra.mxu0 0.0
      %1073 = vmatprep.subr.mxu0 0.0
      %1074 = vmatpush1.msra.mxu0 0.0
      %1075 = vmatprep.subr.mxu0 0.0
      %1076 = vmatpush1.msra.mxu0 0.0
      %1077 = vmatprep.subr.mxu0 0.0
      %1078 = vmatpush1.msra.mxu0 0.0
      %1079 = vmatprep.subr.mxu0 0.0
      %1080 = vmatpush1.msra.mxu0 0.0
      %1081 = vmatprep.subr.mxu0 0.0
      %1082 = vmatpush1.msra.mxu0 0.0
      %1083 = vmatprep.subr.mxu0 0.0
      %1084 = vmatpush1.msra.mxu0 0.0
      %1085 = vmatprep.subr.mxu0 0.0
      %1086 = vmatpush1.msra.mxu0 0.0
      %1087 = vmatprep.subr.mxu0 0.0
      %1088 = vmatpush1.msra.mxu0 0.0
      %1089 = vmatprep.subr.mxu0 0.0
      %1090 = vmatpush1.msra.mxu0 0.0
      %1091 = vmatprep.subr.mxu0 0.0
      %1092 = vmatpush1.msra.mxu0 0.0
      %1093 = vmatprep.subr.mxu0 0.0
      %1094 = vmatpush1.msra.mxu0 0.0
      %1095 = vmatprep.subr.mxu0 0.0
      %1096 = vmatpush1.msra.mxu0 0.0
      %1097 = vmatprep.subr.mxu0 0.0
      %1098 = vmatpush1.msra.mxu0 0.0
      %1099 = vmatprep.subr.mxu0 0.0
      %1100 = vmatpush1.msra.mxu0 0.0
      %1101 = vmatprep.subr.mxu0 0.0
      %v1102 = vand.u32 %v255, 4294901760
      %v1103 = vsub.f32 %v255, %v1102
      %v1104 = vand.u32 %v1103, 4294901760
      %1105 = vmatpush1.msra.mxu0 %v1104
      %1106 = vmatprep.subr.mxu0 0.0
      %1107 = vmatpush2.msra.mxu0 0.0
      %1108 = vmatprep.subr.mxu0 0.0
      %1109 = vmatpush2.msra.mxu0 0.0
      %1110 = vmatprep.subr.mxu0 0.0
      %1111 = vmatpush2.msra.mxu0 0.0
      %1112 = vmatprep.subr.mxu0 0.0
      %1113 = vmatpush2.msra.mxu0 0.0
      %1114 = vmatprep.subr.mxu0 0.0
      %1115 = vmatpush2.msra.mxu0 0.0
      %1116 = vmatprep.subr.mxu0 0.0
      %1117 = vmatpush2.msra.mxu0 0.0
      %1118 = vmatprep.subr.mxu0 0.0
      %1119 = vmatpush2.msra.mxu0 0.0
      %1120 = vmatprep.subr.mxu0 0.0
      %1121 = vmatpush2.msra.mxu0 0.0
      %1122 = vmatprep.subr.mxu0 0.0
      %1123 = vmatpush2.msra.mxu0 0.0
      %1124 = vmatprep.subr.mxu0 0.0
      %1125 = vmatpush2.msra.mxu0 0.0
      %1126 = vmatprep.subr.mxu0 0.0
      %1127 = vmatpush2.msra.mxu0 0.0
      %1128 = vmatprep.subr.mxu0 0.0
      %1129 = vmatpush2.msra.mxu0 0.0
      %1130 = vmatprep.subr.mxu0 0.0
      %1131 = vmatpush2.msra.mxu0 0.0
      %1132 = vmatprep.subr.mxu0 0.0
      %1133 = vmatpush2.msra.mxu0 0.0
      %1134 = vmatprep.subr.mxu0 0.0
      %1135 = vmatpush2.msra.mxu0 0.0
      %1136 = vmatprep.subr.mxu0 0.0
      %1137 = vmatpush2.msra.mxu0 0.0
      %1138 = vmatprep.mubr.f32.mxu0 0.0
      %v1139 = vand.u32 %v769, 4294901760
      %1140 = vmatmul.mubr.f32.gmra.mxu0 %v1139
      %v1141 = vpop.f32.mrf.mxu0
      %v1142 = vadd.f32 %v1068, %v1141
      %v1143 = vpop.f32.mrf.mxu0
      %1144 = vdwg.mxu0
      %1145 = vmatprep.subr.mxu0 0.0
      %1146 = vmatpush1.msra.mxu0 0.0
      %1147 = vmatprep.subr.mxu0 0.0
      %1148 = vmatpush1.msra.mxu0 0.0
      %1149 = vmatprep.subr.mxu0 0.0
      %1150 = vmatpush1.msra.mxu0 0.0
      %1151 = vmatprep.subr.mxu0 0.0
      %1152 = vmatpush1.msra.mxu0 0.0
      %1153 = vmatprep.subr.mxu0 0.0
      %1154 = vmatpush1.msra.mxu0 0.0
      %1155 = vmatprep.subr.mxu0 0.0
      %1156 = vmatpush1.msra.mxu0 0.0
      %1157 = vmatprep.subr.mxu0 0.0
      %1158 = vmatpush1.msra.mxu0 0.0
      %1159 = vmatprep.subr.mxu0 0.0
      %1160 = vmatpush1.msra.mxu0 0.0
      %1161 = vmatprep.subr.mxu0 0.0
      %1162 = vmatpush1.msra.mxu0 0.0
      %1163 = vmatprep.subr.mxu0 0.0
      %1164 = vmatpush1.msra.mxu0 0.0
      %1165 = vmatprep.subr.mxu0 0.0
      %1166 = vmatpush1.msra.mxu0 0.0
      %1167 = vmatprep.subr.mxu0 0.0
      %1168 = vmatpush1.msra.mxu0 0.0
      %1169 = vmatprep.subr.mxu0 0.0
      %1170 = vmatpush1.msra.mxu0 0.0
      %1171 = vmatprep.subr.mxu0 0.0
      %1172 = vmatpush1.msra.mxu0 0.0
      %1173 = vmatprep.subr.mxu0 0.0
      %1174 = vmatpush1.msra.mxu0 0.0
      %1175 = vmatprep.subr.mxu0 0.0
      %v1176 = vand.u32 %v255, 4294901760
      %1177 = vmatpush1.msra.mxu0 %v1176
      %1178 = vmatprep.subr.mxu0 0.0
      %1179 = vmatpush2.msra.mxu0 0.0
      %1180 = vmatprep.subr.mxu0 0.0
      %1181 = vmatpush2.msra.mxu0 0.0
      %1182 = vmatprep.subr.mxu0 0.0
      %1183 = vmatpush2.msra.mxu0 0.0
      %1184 = vmatprep.subr.mxu0 0.0
      %1185 = vmatpush2.msra.mxu0 0.0
      %1186 = vmatprep.subr.mxu0 0.0
      %1187 = vmatpush2.msra.mxu0 0.0
      %1188 = vmatprep.subr.mxu0 0.0
      %1189 = vmatpush2.msra.mxu0 0.0
      %1190 = vmatprep.subr.mxu0 0.0
      %1191 = vmatpush2.msra.mxu0 0.0
      %1192 = vmatprep.subr.mxu0 0.0
      %1193 = vmatpush2.msra.mxu0 0.0
      %1194 = vmatprep.subr.mxu0 0.0
      %1195 = vmatpush2.msra.mxu0 0.0
      %1196 = vmatprep.subr.mxu0 0.0
      %1197 = vmatpush2.msra.mxu0 0.0
      %1198 = vmatprep.subr.mxu0 0.0
      %1199 = vmatpush2.msra.mxu0 0.0
      %1200 = vmatprep.subr.mxu0 0.0
      %1201 = vmatpush2.msra.mxu0 0.0
      %1202 = vmatprep.subr.mxu0 0.0
      %1203 = vmatpush2.msra.mxu0 0.0
      %1204 = vmatprep.subr.mxu0 0.0
      %1205 = vmatpush2.msra.mxu0 0.0
      %1206 = vmatprep.subr.mxu0 0.0
      %1207 = vmatpush2.msra.mxu0 0.0
      %1208 = vmatprep.subr.mxu0 0.0
      %1209 = vmatpush2.msra.mxu0 0.0
      %1210 = vmatprep.mubr.f32.mxu0 0.0
      %v1211 = vand.u32 %v769, 4294901760
      %1212 = vmatmul.mubr.f32.gmra.mxu0 %v1211
      %v1213 = vpop.f32.mrf.mxu0
      %v1214 = vadd.f32 %v1142, %v1213
      %v1215 = vpop.f32.mrf.mxu0
      %1216 = vdwg.mxu0
      %v1218 = vsel %vm318, %v248, 0
      %1220 = vmatprep.subr.mxu0 0.0
      %1221 = vmatpush1.msra.mxu0 0.0
      %1222 = vmatprep.subr.mxu0 0.0
      %1223 = vmatpush1.msra.mxu0 0.0
      %1224 = vmatprep.subr.mxu0 0.0
      %1225 = vmatpush1.msra.mxu0 0.0
      %1226 = vmatprep.subr.mxu0 0.0
      %1227 = vmatpush1.msra.mxu0 0.0
      %1228 = vmatprep.subr.mxu0 0.0
      %1229 = vmatpush1.msra.mxu0 0.0
      %1230 = vmatprep.subr.mxu0 0.0
      %1231 = vmatpush1.msra.mxu0 0.0
      %1232 = vmatprep.subr.mxu0 0.0
      %1233 = vmatpush1.msra.mxu0 0.0
      %1234 = vmatprep.subr.mxu0 0.0
      %1235 = vmatpush1.msra.mxu0 0.0
      %1236 = vmatprep.subr.mxu0 0.0
      %1237 = vmatpush1.msra.mxu0 0.0
      %1238 = vmatprep.subr.mxu0 0.0
      %1239 = vmatpush1.msra.mxu0 0.0
      %1240 = vmatprep.subr.mxu0 0.0
      %1241 = vmatpush1.msra.mxu0 0.0
      %1242 = vmatprep.subr.mxu0 0.0
      %1243 = vmatpush1.msra.mxu0 0.0
      %1244 = vmatprep.subr.mxu0 0.0
      %1245 = vmatpush1.msra.mxu0 0.0
      %1246 = vmatprep.subr.mxu0 0.0
      %1247 = vmatpush1.msra.mxu0 0.0
      %1248 = vmatprep.subr.mxu0 0.0
      %1249 = vmatpush1.msra.mxu0 0.0
      %1250 = vmatprep.subr.mxu0 0.0
      %v1251 = vand.u32 %v256, 4294901760
      %1252 = vmatpush1.msra.mxu0 %v1251
      %1253 = vmatprep.subr.mxu0 0.0
      %1254 = vmatpush2.msra.mxu0 0.0
      %1255 = vmatprep.subr.mxu0 0.0
      %1256 = vmatpush2.msra.mxu0 0.0
      %1257 = vmatprep.subr.mxu0 0.0
      %1258 = vmatpush2.msra.mxu0 0.0
      %1259 = vmatprep.subr.mxu0 0.0
      %1260 = vmatpush2.msra.mxu0 0.0
      %1261 = vmatprep.subr.mxu0 0.0
      %1262 = vmatpush2.msra.mxu0 0.0
      %1263 = vmatprep.subr.mxu0 0.0
      %1264 = vmatpush2.msra.mxu0 0.0
      %1265 = vmatprep.subr.mxu0 0.0
      %1266 = vmatpush2.msra.mxu0 0.0
      %1267 = vmatprep.subr.mxu0 0.0
      %1268 = vmatpush2.msra.mxu0 0.0
      %1269 = vmatprep.subr.mxu0 0.0
      %1270 = vmatpush2.msra.mxu0 0.0
      %1271 = vmatprep.subr.mxu0 0.0
      %1272 = vmatpush2.msra.mxu0 0.0
      %1273 = vmatprep.subr.mxu0 0.0
      %1274 = vmatpush2.msra.mxu0 0.0
      %1275 = vmatprep.subr.mxu0 0.0
      %1276 = vmatpush2.msra.mxu0 0.0
      %1277 = vmatprep.subr.mxu0 0.0
      %1278 = vmatpush2.msra.mxu0 0.0
      %1279 = vmatprep.subr.mxu0 0.0
      %1280 = vmatpush2.msra.mxu0 0.0
      %1281 = vmatprep.subr.mxu0 0.0
      %1282 = vmatpush2.msra.mxu0 0.0
      %1283 = vmatprep.subr.mxu0 0.0
      %1284 = vmatpush2.msra.mxu0 0.0
      %1285 = vmatprep.mubr.f32.mxu0 0.0
      %v1286 = vand.u32 %v1218, 4294901760
      %v1287 = vsub.f32 %v1218, %v1286
      %v1288 = vand.u32 %v1287, 4294901760
      %v1289 = vsub.f32 %v1287, %v1288
      %v1290 = vand.u32 %v1289, 4294901760
      %1291 = vmatmul.mubr.f32.gmra.mxu0 %v1290
      %v1292 = vpop.f32.mrf.mxu0
      %v1293 = vadd.f32 %v289, %v1292
      %v1294 = vpop.f32.mrf.mxu0
      %1295 = vdwg.mxu0
      %1296 = vmatprep.subr.mxu0 0.0
      %1297 = vmatpush1.msra.mxu0 0.0
      %1298 = vmatprep.subr.mxu0 0.0
      %1299 = vmatpush1.msra.mxu0 0.0
      %1300 = vmatprep.subr.mxu0 0.0
      %1301 = vmatpush1.msra.mxu0 0.0
      %1302 = vmatprep.subr.mxu0 0.0
      %1303 = vmatpush1.msra.mxu0 0.0
      %1304 = vmatprep.subr.mxu0 0.0
      %1305 = vmatpush1.msra.mxu0 0.0
      %1306 = vmatprep.subr.mxu0 0.0
      %1307 = vmatpush1.msra.mxu0 0.0
      %1308 = vmatprep.subr.mxu0 0.0
      %1309 = vmatpush1.msra.mxu0 0.0
      %1310 = vmatprep.subr.mxu0 0.0
      %1311 = vmatpush1.msra.mxu0 0.0
      %1312 = vmatprep.subr.mxu0 0.0
      %1313 = vmatpush1.msra.mxu0 0.0
      %1314 = vmatprep.subr.mxu0 0.0
      %1315 = vmatpush1.msra.mxu0 0.0
      %1316 = vmatprep.subr.mxu0 0.0
      %1317 = vmatpush1.msra.mxu0 0.0
      %1318 = vmatprep.subr.mxu0 0.0
      %1319 = vmatpush1.msra.mxu0 0.0
      %1320 = vmatprep.subr.mxu0 0.0
      %1321 = vmatpush1.msra.mxu0 0.0
      %1322 = vmatprep.subr.mxu0 0.0
      %1323 = vmatpush1.msra.mxu0 0.0
      %1324 = vmatprep.subr.mxu0 0.0
      %1325 = vmatpush1.msra.mxu0 0.0
      %1326 = vmatprep.subr.mxu0 0.0
      %v1327 = vand.u32 %v256, 4294901760
      %v1328 = vsub.f32 %v256, %v1327
      %v1329 = vand.u32 %v1328, 4294901760
      %v1330 = vsub.f32 %v1328, %v1329
      %v1331 = vand.u32 %v1330, 4294901760
      %1332 = vmatpush1.msra.mxu0 %v1331
      %1333 = vmatprep.subr.mxu0 0.0
      %1334 = vmatpush2.msra.mxu0 0.0
      %1335 = vmatprep.subr.mxu0 0.0
      %1336 = vmatpush2.msra.mxu0 0.0
      %1337 = vmatprep.subr.mxu0 0.0
      %1338 = vmatpush2.msra.mxu0 0.0
      %1339 = vmatprep.subr.mxu0 0.0
      %1340 = vmatpush2.msra.mxu0 0.0
      %1341 = vmatprep.subr.mxu0 0.0
      %1342 = vmatpush2.msra.mxu0 0.0
      %1343 = vmatprep.subr.mxu0 0.0
      %1344 = vmatpush2.msra.mxu0 0.0
      %1345 = vmatprep.subr.mxu0 0.0
      %1346 = vmatpush2.msra.mxu0 0.0
      %1347 = vmatprep.subr.mxu0 0.0
      %1348 = vmatpush2.msra.mxu0 0.0
      %1349 = vmatprep.subr.mxu0 0.0
      %1350 = vmatpush2.msra.mxu0 0.0
      %1351 = vmatprep.subr.mxu0 0.0
      %1352 = vmatpush2.msra.mxu0 0.0
      %1353 = vmatprep.subr.mxu0 0.0
      %1354 = vmatpush2.msra.mxu0 0.0
      %1355 = vmatprep.subr.mxu0 0.0
      %1356 = vmatpush2.msra.mxu0 0.0
      %1357 = vmatprep.subr.mxu0 0.0
      %1358 = vmatpush2.msra.mxu0 0.0
      %1359 = vmatprep.subr.mxu0 0.0
      %1360 = vmatpush2.msra.mxu0 0.0
      %1361 = vmatprep.subr.mxu0 0.0
      %1362 = vmatpush2.msra.mxu0 0.0
      %1363 = vmatprep.subr.mxu0 0.0
      %1364 = vmatpush2.msra.mxu0 0.0
      %1365 = vmatprep.mubr.f32.mxu0 0.0
      %v1366 = vand.u32 %v1218, 4294901760
      %1367 = vmatmul.mubr.f32.gmra.mxu0 %v1366
      %v1368 = vpop.f32.mrf.mxu0
      %v1369 = vadd.f32 %v1293, %v1368
      %v1370 = vpop.f32.mrf.mxu0
      %1371 = vdwg.mxu0
      %1372 = vmatprep.subr.mxu0 0.0
      %1373 = vmatpush1.msra.mxu0 0.0
      %1374 = vmatprep.subr.mxu0 0.0
      %1375 = vmatpush1.msra.mxu0 0.0
      %1376 = vmatprep.subr.mxu0 0.0
      %1377 = vmatpush1.msra.mxu0 0.0
      %1378 = vmatprep.subr.mxu0 0.0
      %1379 = vmatpush1.msra.mxu0 0.0
      %1380 = vmatprep.subr.mxu0 0.0
      %1381 = vmatpush1.msra.mxu0 0.0
      %1382 = vmatprep.subr.mxu0 0.0
      %1383 = vmatpush1.msra.mxu0 0.0
      %1384 = vmatprep.subr.mxu0 0.0
      %1385 = vmatpush1.msra.mxu0 0.0
      %1386 = vmatprep.subr.mxu0 0.0
      %1387 = vmatpush1.msra.mxu0 0.0
      %1388 = vmatprep.subr.mxu0 0.0
      %1389 = vmatpush1.msra.mxu0 0.0
      %1390 = vmatprep.subr.mxu0 0.0
      %1391 = vmatpush1.msra.mxu0 0.0
      %1392 = vmatprep.subr.mxu0 0.0
      %1393 = vmatpush1.msra.mxu0 0.0
      %1394 = vmatprep.subr.mxu0 0.0
      %1395 = vmatpush1.msra.mxu0 0.0
      %1396 = vmatprep.subr.mxu0 0.0
      %1397 = vmatpush1.msra.mxu0 0.0
      %1398 = vmatprep.subr.mxu0 0.0
      %1399 = vmatpush1.msra.mxu0 0.0
      %1400 = vmatprep.subr.mxu0 0.0
      %1401 = vmatpush1.msra.mxu0 0.0
      %1402 = vmatprep.subr.mxu0 0.0
      %v1403 = vand.u32 %v256, 4294901760
      %v1404 = vsub.f32 %v256, %v1403
      %1405 = vmatpush1.msra.mxu0 %v1404
      %1406 = vmatprep.subr.mxu0 0.0
      %1407 = vmatpush2.msra.mxu0 0.0
      %1408 = vmatprep.subr.mxu0 0.0
      %1409 = vmatpush2.msra.mxu0 0.0
      %1410 = vmatprep.subr.mxu0 0.0
      %1411 = vmatpush2.msra.mxu0 0.0
      %1412 = vmatprep.subr.mxu0 0.0
      %1413 = vmatpush2.msra.mxu0 0.0
      %1414 = vmatprep.subr.mxu0 0.0
      %1415 = vmatpush2.msra.mxu0 0.0
      %1416 = vmatprep.subr.mxu0 0.0
      %1417 = vmatpush2.msra.mxu0 0.0
      %1418 = vmatprep.subr.mxu0 0.0
      %1419 = vmatpush2.msra.mxu0 0.0
      %1420 = vmatprep.subr.mxu0 0.0
      %1421 = vmatpush2.msra.mxu0 0.0
      %1422 = vmatprep.subr.mxu0 0.0
      %1423 = vmatpush2.msra.mxu0 0.0
      %1424 = vmatprep.subr.mxu0 0.0
      %1425 = vmatpush2.msra.mxu0 0.0
      %1426 = vmatprep.subr.mxu0 0.0
      %1427 = vmatpush2.msra.mxu0 0.0
      %1428 = vmatprep.subr.mxu0 0.0
      %1429 = vmatpush2.msra.mxu0 0.0
      %1430 = vmatprep.subr.mxu0 0.0
      %1431 = vmatpush2.msra.mxu0 0.0
      %1432 = vmatprep.subr.mxu0 0.0
      %1433 = vmatpush2.msra.mxu0 0.0
      %1434 = vmatprep.subr.mxu0 0.0
      %1435 = vmatpush2.msra.mxu0 0.0
      %1436 = vmatprep.subr.mxu0 0.0
      %1437 = vmatpush2.msra.mxu0 0.0
      %1438 = vmatprep.mubr.f32.mxu0 0.0
      %v1439 = vand.u32 %v1218, 4294901760
      %v1440 = vsub.f32 %v1218, %v1439
      %1441 = vmatmul.mubr.f32.gmra.mxu0 %v1440
      %v1442 = vpop.f32.mrf.mxu0
      %v1443 = vadd.f32 %v1369, %v1442
      %v1444 = vpop.f32.mrf.mxu0
      %1445 = vdwg.mxu0
      %1446 = vmatprep.subr.mxu0 0.0
      %1447 = vmatpush1.msra.mxu0 0.0
      %1448 = vmatprep.subr.mxu0 0.0
      %1449 = vmatpush1.msra.mxu0 0.0
      %1450 = vmatprep.subr.mxu0 0.0
      %1451 = vmatpush1.msra.mxu0 0.0
      %1452 = vmatprep.subr.mxu0 0.0
      %1453 = vmatpush1.msra.mxu0 0.0
      %1454 = vmatprep.subr.mxu0 0.0
      %1455 = vmatpush1.msra.mxu0 0.0
      %1456 = vmatprep.subr.mxu0 0.0
      %1457 = vmatpush1.msra.mxu0 0.0
      %1458 = vmatprep.subr.mxu0 0.0
      %1459 = vmatpush1.msra.mxu0 0.0
      %1460 = vmatprep.subr.mxu0 0.0
      %1461 = vmatpush1.msra.mxu0 0.0
      %1462 = vmatprep.subr.mxu0 0.0
      %1463 = vmatpush1.msra.mxu0 0.0
      %1464 = vmatprep.subr.mxu0 0.0
      %1465 = vmatpush1.msra.mxu0 0.0
      %1466 = vmatprep.subr.mxu0 0.0
      %1467 = vmatpush1.msra.mxu0 0.0
      %1468 = vmatprep.subr.mxu0 0.0
      %1469 = vmatpush1.msra.mxu0 0.0
      %1470 = vmatprep.subr.mxu0 0.0
      %1471 = vmatpush1.msra.mxu0 0.0
      %1472 = vmatprep.subr.mxu0 0.0
      %1473 = vmatpush1.msra.mxu0 0.0
      %1474 = vmatprep.subr.mxu0 0.0
      %1475 = vmatpush1.msra.mxu0 0.0
      %1476 = vmatprep.subr.mxu0 0.0
      %v1477 = vand.u32 %v256, 4294901760
      %1478 = vmatpush1.msra.mxu0 %v1477
      %1479 = vmatprep.subr.mxu0 0.0
      %1480 = vmatpush2.msra.mxu0 0.0
      %1481 = vmatprep.subr.mxu0 0.0
      %1482 = vmatpush2.msra.mxu0 0.0
      %1483 = vmatprep.subr.mxu0 0.0
      %1484 = vmatpush2.msra.mxu0 0.0
      %1485 = vmatprep.subr.mxu0 0.0
      %1486 = vmatpush2.msra.mxu0 0.0
      %1487 = vmatprep.subr.mxu0 0.0
      %1488 = vmatpush2.msra.mxu0 0.0
      %1489 = vmatprep.subr.mxu0 0.0
      %1490 = vmatpush2.msra.mxu0 0.0
      %1491 = vmatprep.subr.mxu0 0.0
      %1492 = vmatpush2.msra.mxu0 0.0
      %1493 = vmatprep.subr.mxu0 0.0
      %1494 = vmatpush2.msra.mxu0 0.0
      %1495 = vmatprep.subr.mxu0 0.0
      %1496 = vmatpush2.msra.mxu0 0.0
      %1497 = vmatprep.subr.mxu0 0.0
      %1498 = vmatpush2.msra.mxu0 0.0
      %1499 = vmatprep.subr.mxu0 0.0
      %1500 = vmatpush2.msra.mxu0 0.0
      %1501 = vmatprep.subr.mxu0 0.0
      %1502 = vmatpush2.msra.mxu0 0.0
      %1503 = vmatprep.subr.mxu0 0.0
      %1504 = vmatpush2.msra.mxu0 0.0
      %1505 = vmatprep.subr.mxu0 0.0
      %1506 = vmatpush2.msra.mxu0 0.0
      %1507 = vmatprep.subr.mxu0 0.0
      %1508 = vmatpush2.msra.mxu0 0.0
      %1509 = vmatprep.subr.mxu0 0.0
      %1510 = vmatpush2.msra.mxu0 0.0
      %1511 = vmatprep.mubr.f32.mxu0 0.0
      %v1512 = vand.u32 %v1218, 4294901760
      %v1513 = vsub.f32 %v1218, %v1512
      %v1514 = vand.u32 %v1513, 4294901760
      %1515 = vmatmul.mubr.f32.gmra.mxu0 %v1514
      %v1516 = vpop.f32.mrf.mxu0
      %v1517 = vadd.f32 %v1443, %v1516
      %v1518 = vpop.f32.mrf.mxu0
      %1519 = vdwg.mxu0
      %1520 = vmatprep.subr.mxu0 0.0
      %1521 = vmatpush1.msra.mxu0 0.0
      %1522 = vmatprep.subr.mxu0 0.0
      %1523 = vmatpush1.msra.mxu0 0.0
      %1524 = vmatprep.subr.mxu0 0.0
      %1525 = vmatpush1.msra.mxu0 0.0
      %1526 = vmatprep.subr.mxu0 0.0
      %1527 = vmatpush1.msra.mxu0 0.0
      %1528 = vmatprep.subr.mxu0 0.0
      %1529 = vmatpush1.msra.mxu0 0.0
      %1530 = vmatprep.subr.mxu0 0.0
      %1531 = vmatpush1.msra.mxu0 0.0
      %1532 = vmatprep.subr.mxu0 0.0
      %1533 = vmatpush1.msra.mxu0 0.0
      %1534 = vmatprep.subr.mxu0 0.0
      %1535 = vmatpush1.msra.mxu0 0.0
      %1536 = vmatprep.subr.mxu0 0.0
      %1537 = vmatpush1.msra.mxu0 0.0
      %1538 = vmatprep.subr.mxu0 0.0
      %1539 = vmatpush1.msra.mxu0 0.0
      %1540 = vmatprep.subr.mxu0 0.0
      %1541 = vmatpush1.msra.mxu0 0.0
      %1542 = vmatprep.subr.mxu0 0.0
      %1543 = vmatpush1.msra.mxu0 0.0
      %1544 = vmatprep.subr.mxu0 0.0
      %1545 = vmatpush1.msra.mxu0 0.0
      %1546 = vmatprep.subr.mxu0 0.0
      %1547 = vmatpush1.msra.mxu0 0.0
      %1548 = vmatprep.subr.mxu0 0.0
      %1549 = vmatpush1.msra.mxu0 0.0
      %1550 = vmatprep.subr.mxu0 0.0
      %v1551 = vand.u32 %v256, 4294901760
      %v1552 = vsub.f32 %v256, %v1551
      %v1553 = vand.u32 %v1552, 4294901760
      %1554 = vmatpush1.msra.mxu0 %v1553
      %1555 = vmatprep.subr.mxu0 0.0
      %1556 = vmatpush2.msra.mxu0 0.0
      %1557 = vmatprep.subr.mxu0 0.0
      %1558 = vmatpush2.msra.mxu0 0.0
      %1559 = vmatprep.subr.mxu0 0.0
      %1560 = vmatpush2.msra.mxu0 0.0
      %1561 = vmatprep.subr.mxu0 0.0
      %1562 = vmatpush2.msra.mxu0 0.0
      %1563 = vmatprep.subr.mxu0 0.0
      %1564 = vmatpush2.msra.mxu0 0.0
      %1565 = vmatprep.subr.mxu0 0.0
      %1566 = vmatpush2.msra.mxu0 0.0
      %1567 = vmatprep.subr.mxu0 0.0
      %1568 = vmatpush2.msra.mxu0 0.0
      %1569 = vmatprep.subr.mxu0 0.0
      %1570 = vmatpush2.msra.mxu0 0.0
      %1571 = vmatprep.subr.mxu0 0.0
      %1572 = vmatpush2.msra.mxu0 0.0
      %1573 = vmatprep.subr.mxu0 0.0
      %1574 = vmatpush2.msra.mxu0 0.0
      %1575 = vmatprep.subr.mxu0 0.0
      %1576 = vmatpush2.msra.mxu0 0.0
      %1577 = vmatprep.subr.mxu0 0.0
      %1578 = vmatpush2.msra.mxu0 0.0
      %1579 = vmatprep.subr.mxu0 0.0
      %1580 = vmatpush2.msra.mxu0 0.0
      %1581 = vmatprep.subr.mxu0 0.0
      %1582 = vmatpush2.msra.mxu0 0.0
      %1583 = vmatprep.subr.mxu0 0.0
      %1584 = vmatpush2.msra.mxu0 0.0
      %1585 = vmatprep.subr.mxu0 0.0
      %1586 = vmatpush2.msra.mxu0 0.0
      %1587 = vmatprep.mubr.f32.mxu0 0.0
      %v1588 = vand.u32 %v1218, 4294901760
      %1589 = vmatmul.mubr.f32.gmra.mxu0 %v1588
      %v1590 = vpop.f32.mrf.mxu0
      %v1591 = vadd.f32 %v1517, %v1590
      %v1592 = vpop.f32.mrf.mxu0
      %1593 = vdwg.mxu0
      %1594 = vmatprep.subr.mxu0 0.0
      %1595 = vmatpush1.msra.mxu0 0.0
      %1596 = vmatprep.subr.mxu0 0.0
      %1597 = vmatpush1.msra.mxu0 0.0
      %1598 = vmatprep.subr.mxu0 0.0
      %1599 = vmatpush1.msra.mxu0 0.0
      %1600 = vmatprep.subr.mxu0 0.0
      %1601 = vmatpush1.msra.mxu0 0.0
      %1602 = vmatprep.subr.mxu0 0.0
      %1603 = vmatpush1.msra.mxu0 0.0
      %1604 = vmatprep.subr.mxu0 0.0
      %1605 = vmatpush1.msra.mxu0 0.0
      %1606 = vmatprep.subr.mxu0 0.0
      %1607 = vmatpush1.msra.mxu0 0.0
      %1608 = vmatprep.subr.mxu0 0.0
      %1609 = vmatpush1.msra.mxu0 0.0
      %1610 = vmatprep.subr.mxu0 0.0
      %1611 = vmatpush1.msra.mxu0 0.0
      %1612 = vmatprep.subr.mxu0 0.0
      %1613 = vmatpush1.msra.mxu0 0.0
      %1614 = vmatprep.subr.mxu0 0.0
      %1615 = vmatpush1.msra.mxu0 0.0
      %1616 = vmatprep.subr.mxu0 0.0
      %1617 = vmatpush1.msra.mxu0 0.0
      %1618 = vmatprep.subr.mxu0 0.0
      %1619 = vmatpush1.msra.mxu0 0.0
      %1620 = vmatprep.subr.mxu0 0.0
      %1621 = vmatpush1.msra.mxu0 0.0
      %1622 = vmatprep.subr.mxu0 0.0
      %1623 = vmatpush1.msra.mxu0 0.0
      %1624 = vmatprep.subr.mxu0 0.0
      %v1625 = vand.u32 %v256, 4294901760
      %1626 = vmatpush1.msra.mxu0 %v1625
      %1627 = vmatprep.subr.mxu0 0.0
      %1628 = vmatpush2.msra.mxu0 0.0
      %1629 = vmatprep.subr.mxu0 0.0
      %1630 = vmatpush2.msra.mxu0 0.0
      %1631 = vmatprep.subr.mxu0 0.0
      %1632 = vmatpush2.msra.mxu0 0.0
      %1633 = vmatprep.subr.mxu0 0.0
      %1634 = vmatpush2.msra.mxu0 0.0
      %1635 = vmatprep.subr.mxu0 0.0
      %1636 = vmatpush2.msra.mxu0 0.0
      %1637 = vmatprep.subr.mxu0 0.0
      %1638 = vmatpush2.msra.mxu0 0.0
      %1639 = vmatprep.subr.mxu0 0.0
      %1640 = vmatpush2.msra.mxu0 0.0
      %1641 = vmatprep.subr.mxu0 0.0
      %1642 = vmatpush2.msra.mxu0 0.0
      %1643 = vmatprep.subr.mxu0 0.0
      %1644 = vmatpush2.msra.mxu0 0.0
      %1645 = vmatprep.subr.mxu0 0.0
      %1646 = vmatpush2.msra.mxu0 0.0
      %1647 = vmatprep.subr.mxu0 0.0
      %1648 = vmatpush2.msra.mxu0 0.0
      %1649 = vmatprep.subr.mxu0 0.0
      %1650 = vmatpush2.msra.mxu0 0.0
      %1651 = vmatprep.subr.mxu0 0.0
      %1652 = vmatpush2.msra.mxu0 0.0
      %1653 = vmatprep.subr.mxu0 0.0
      %1654 = vmatpush2.msra.mxu0 0.0
      %1655 = vmatprep.subr.mxu0 0.0
      %1656 = vmatpush2.msra.mxu0 0.0
      %1657 = vmatprep.subr.mxu0 0.0
      %1658 = vmatpush2.msra.mxu0 0.0
      %1659 = vmatprep.mubr.f32.mxu0 0.0
      %v1660 = vand.u32 %v1218, 4294901760
      %1661 = vmatmul.mubr.f32.gmra.mxu0 %v1660
      %v1662 = vpop.f32.mrf.mxu0
      %v1663 = vadd.f32 %v1591, %v1662
      %v1664 = vpop.f32.mrf.mxu0
      %1665 = vdwg.mxu0
      %v1667 = vsel %vm318, %v249, 0
      %1669 = vmatprep.subr.mxu0 0.0
      %1670 = vmatpush1.msra.mxu0 0.0
      %1671 = vmatprep.subr.mxu0 0.0
      %1672 = vmatpush1.msra.mxu0 0.0
      %1673 = vmatprep.subr.mxu0 0.0
      %1674 = vmatpush1.msra.mxu0 0.0
      %1675 = vmatprep.subr.mxu0 0.0
      %1676 = vmatpush1.msra.mxu0 0.0
      %1677 = vmatprep.subr.mxu0 0.0
      %1678 = vmatpush1.msra.mxu0 0.0
      %1679 = vmatprep.subr.mxu0 0.0
      %1680 = vmatpush1.msra.mxu0 0.0
      %1681 = vmatprep.subr.mxu0 0.0
      %1682 = vmatpush1.msra.mxu0 0.0
      %1683 = vmatprep.subr.mxu0 0.0
      %1684 = vmatpush1.msra.mxu0 0.0
      %1685 = vmatprep.subr.mxu0 0.0
      %1686 = vmatpush1.msra.mxu0 0.0
      %1687 = vmatprep.subr.mxu0 0.0
      %1688 = vmatpush1.msra.mxu0 0.0
      %1689 = vmatprep.subr.mxu0 0.0
      %1690 = vmatpush1.msra.mxu0 0.0
      %1691 = vmatprep.subr.mxu0 0.0
      %1692 = vmatpush1.msra.mxu0 0.0
      %1693 = vmatprep.subr.mxu0 0.0
      %1694 = vmatpush1.msra.mxu0 0.0
      %1695 = vmatprep.subr.mxu0 0.0
      %1696 = vmatpush1.msra.mxu0 0.0
      %1697 = vmatprep.subr.mxu0 0.0
      %1698 = vmatpush1.msra.mxu0 0.0
      %1699 = vmatprep.subr.mxu0 0.0
      %v1700 = vand.u32 %v257, 4294901760
      %1701 = vmatpush1.msra.mxu0 %v1700
      %1702 = vmatprep.subr.mxu0 0.0
      %1703 = vmatpush2.msra.mxu0 0.0
      %1704 = vmatprep.subr.mxu0 0.0
      %1705 = vmatpush2.msra.mxu0 0.0
      %1706 = vmatprep.subr.mxu0 0.0
      %1707 = vmatpush2.msra.mxu0 0.0
      %1708 = vmatprep.subr.mxu0 0.0
      %1709 = vmatpush2.msra.mxu0 0.0
      %1710 = vmatprep.subr.mxu0 0.0
      %1711 = vmatpush2.msra.mxu0 0.0
      %1712 = vmatprep.subr.mxu0 0.0
      %1713 = vmatpush2.msra.mxu0 0.0
      %1714 = vmatprep.subr.mxu0 0.0
      %1715 = vmatpush2.msra.mxu0 0.0
      %1716 = vmatprep.subr.mxu0 0.0
      %1717 = vmatpush2.msra.mxu0 0.0
      %1718 = vmatprep.subr.mxu0 0.0
      %1719 = vmatpush2.msra.mxu0 0.0
      %1720 = vmatprep.subr.mxu0 0.0
      %1721 = vmatpush2.msra.mxu0 0.0
      %1722 = vmatprep.subr.mxu0 0.0
      %1723 = vmatpush2.msra.mxu0 0.0
      %1724 = vmatprep.subr.mxu0 0.0
      %1725 = vmatpush2.msra.mxu0 0.0
      %1726 = vmatprep.subr.mxu0 0.0
      %1727 = vmatpush2.msra.mxu0 0.0
      %1728 = vmatprep.subr.mxu0 0.0
      %1729 = vmatpush2.msra.mxu0 0.0
      %1730 = vmatprep.subr.mxu0 0.0
      %1731 = vmatpush2.msra.mxu0 0.0
      %1732 = vmatprep.subr.mxu0 0.0
      %1733 = vmatpush2.msra.mxu0 0.0
      %1734 = vmatprep.mubr.f32.mxu0 0.0
      %v1735 = vand.u32 %v1667, 4294901760
      %v1736 = vsub.f32 %v1667, %v1735
      %v1737 = vand.u32 %v1736, 4294901760
      %v1738 = vsub.f32 %v1736, %v1737
      %v1739 = vand.u32 %v1738, 4294901760
      %1740 = vmatmul.mubr.f32.gmra.mxu0 %v1739
      %v1741 = vpop.f32.mrf.mxu0
      %v1742 = vadd.f32 %v293, %v1741
      %v1743 = vpop.f32.mrf.mxu0
      %1744 = vdwg.mxu0
      %1745 = vmatprep.subr.mxu0 0.0
      %1746 = vmatpush1.msra.mxu0 0.0
      %1747 = vmatprep.subr.mxu0 0.0
      %1748 = vmatpush1.msra.mxu0 0.0
      %1749 = vmatprep.subr.mxu0 0.0
      %1750 = vmatpush1.msra.mxu0 0.0
      %1751 = vmatprep.subr.mxu0 0.0
      %1752 = vmatpush1.msra.mxu0 0.0
      %1753 = vmatprep.subr.mxu0 0.0
      %1754 = vmatpush1.msra.mxu0 0.0
      %1755 = vmatprep.subr.mxu0 0.0
      %1756 = vmatpush1.msra.mxu0 0.0
      %1757 = vmatprep.subr.mxu0 0.0
      %1758 = vmatpush1.msra.mxu0 0.0
      %1759 = vmatprep.subr.mxu0 0.0
      %1760 = vmatpush1.msra.mxu0 0.0
      %1761 = vmatprep.subr.mxu0 0.0
      %1762 = vmatpush1.msra.mxu0 0.0
      %1763 = vmatprep.subr.mxu0 0.0
      %1764 = vmatpush1.msra.mxu0 0.0
      %1765 = vmatprep.subr.mxu0 0.0
      %1766 = vmatpush1.msra.mxu0 0.0
      %1767 = vmatprep.subr.mxu0 0.0
      %1768 = vmatpush1.msra.mxu0 0.0
      %1769 = vmatprep.subr.mxu0 0.0
      %1770 = vmatpush1.msra.mxu0 0.0
      %1771 = vmatprep.subr.mxu0 0.0
      %1772 = vmatpush1.msra.mxu0 0.0
      %1773 = vmatprep.subr.mxu0 0.0
      %1774 = vmatpush1.msra.mxu0 0.0
      %1775 = vmatprep.subr.mxu0 0.0
      %v1776 = vand.u32 %v257, 4294901760
      %v1777 = vsub.f32 %v257, %v1776
      %v1778 = vand.u32 %v1777, 4294901760
      %v1779 = vsub.f32 %v1777, %v1778
      %v1780 = vand.u32 %v1779, 4294901760
      %1781 = vmatpush1.msra.mxu0 %v1780
      %1782 = vmatprep.subr.mxu0 0.0
      %1783 = vmatpush2.msra.mxu0 0.0
      %1784 = vmatprep.subr.mxu0 0.0
      %1785 = vmatpush2.msra.mxu0 0.0
      %1786 = vmatprep.subr.mxu0 0.0
      %1787 = vmatpush2.msra.mxu0 0.0
      %1788 = vmatprep.subr.mxu0 0.0
      %1789 = vmatpush2.msra.mxu0 0.0
      %1790 = vmatprep.subr.mxu0 0.0
      %1791 = vmatpush2.msra.mxu0 0.0
      %1792 = vmatprep.subr.mxu0 0.0
      %1793 = vmatpush2.msra.mxu0 0.0
      %1794 = vmatprep.subr.mxu0 0.0
      %1795 = vmatpush2.msra.mxu0 0.0
      %1796 = vmatprep.subr.mxu0 0.0
      %1797 = vmatpush2.msra.mxu0 0.0
      %1798 = vmatprep.subr.mxu0 0.0
      %1799 = vmatpush2.msra.mxu0 0.0
      %1800 = vmatprep.subr.mxu0 0.0
      %1801 = vmatpush2.msra.mxu0 0.0
      %1802 = vmatprep.subr.mxu0 0.0
      %1803 = vmatpush2.msra.mxu0 0.0
      %1804 = vmatprep.subr.mxu0 0.0
      %1805 = vmatpush2.msra.mxu0 0.0
      %1806 = vmatprep.subr.mxu0 0.0
      %1807 = vmatpush2.msra.mxu0 0.0
      %1808 = vmatprep.subr.mxu0 0.0
      %1809 = vmatpush2.msra.mxu0 0.0
      %1810 = vmatprep.subr.mxu0 0.0
      %1811 = vmatpush2.msra.mxu0 0.0
      %1812 = vmatprep.subr.mxu0 0.0
      %1813 = vmatpush2.msra.mxu0 0.0
      %1814 = vmatprep.mubr.f32.mxu0 0.0
      %v1815 = vand.u32 %v1667, 4294901760
      %1816 = vmatmul.mubr.f32.gmra.mxu0 %v1815
      %v1817 = vpop.f32.mrf.mxu0
      %v1818 = vadd.f32 %v1742, %v1817
      %v1819 = vpop.f32.mrf.mxu0
      %1820 = vdwg.mxu0
      %1821 = vmatprep.subr.mxu0 0.0
      %1822 = vmatpush1.msra.mxu0 0.0
      %1823 = vmatprep.subr.mxu0 0.0
      %1824 = vmatpush1.msra.mxu0 0.0
      %1825 = vmatprep.subr.mxu0 0.0
      %1826 = vmatpush1.msra.mxu0 0.0
      %1827 = vmatprep.subr.mxu0 0.0
      %1828 = vmatpush1.msra.mxu0 0.0
      %1829 = vmatprep.subr.mxu0 0.0
      %1830 = vmatpush1.msra.mxu0 0.0
      %1831 = vmatprep.subr.mxu0 0.0
      %1832 = vmatpush1.msra.mxu0 0.0
      %1833 = vmatprep.subr.mxu0 0.0
      %1834 = vmatpush1.msra.mxu0 0.0
      %1835 = vmatprep.subr.mxu0 0.0
      %1836 = vmatpush1.msra.mxu0 0.0
      %1837 = vmatprep.subr.mxu0 0.0
      %1838 = vmatpush1.msra.mxu0 0.0
      %1839 = vmatprep.subr.mxu0 0.0
      %1840 = vmatpush1.msra.mxu0 0.0
      %1841 = vmatprep.subr.mxu0 0.0
      %1842 = vmatpush1.msra.mxu0 0.0
      %1843 = vmatprep.subr.mxu0 0.0
      %1844 = vmatpush1.msra.mxu0 0.0
      %1845 = vmatprep.subr.mxu0 0.0
      %1846 = vmatpush1.msra.mxu0 0.0
      %1847 = vmatprep.subr.mxu0 0.0
      %1848 = vmatpush1.msra.mxu0 0.0
      %1849 = vmatprep.subr.mxu0 0.0
      %1850 = vmatpush1.msra.mxu0 0.0
      %1851 = vmatprep.subr.mxu0 0.0
      %v1852 = vand.u32 %v257, 4294901760
      %v1853 = vsub.f32 %v257, %v1852
      %1854 = vmatpush1.msra.mxu0 %v1853
      %1855 = vmatprep.subr.mxu0 0.0
      %1856 = vmatpush2.msra.mxu0 0.0
      %1857 = vmatprep.subr.mxu0 0.0
      %1858 = vmatpush2.msra.mxu0 0.0
      %1859 = vmatprep.subr.mxu0 0.0
      %1860 = vmatpush2.msra.mxu0 0.0
      %1861 = vmatprep.subr.mxu0 0.0
      %1862 = vmatpush2.msra.mxu0 0.0
      %1863 = vmatprep.subr.mxu0 0.0
      %1864 = vmatpush2.msra.mxu0 0.0
      %1865 = vmatprep.subr.mxu0 0.0
      %1866 = vmatpush2.msra.mxu0 0.0
      %1867 = vmatprep.subr.mxu0 0.0
      %1868 = vmatpush2.msra.mxu0 0.0
      %1869 = vmatprep.subr.mxu0 0.0
      %1870 = vmatpush2.msra.mxu0 0.0
      %1871 = vmatprep.subr.mxu0 0.0
      %1872 = vmatpush2.msra.mxu0 0.0
      %1873 = vmatprep.subr.mxu0 0.0
      %1874 = vmatpush2.msra.mxu0 0.0
      %1875 = vmatprep.subr.mxu0 0.0
      %1876 = vmatpush2.msra.mxu0 0.0
      %1877 = vmatprep.subr.mxu0 0.0
      %1878 = vmatpush2.msra.mxu0 0.0
      %1879 = vmatprep.subr.mxu0 0.0
      %1880 = vmatpush2.msra.mxu0 0.0
      %1881 = vmatprep.subr.mxu0 0.0
      %1882 = vmatpush2.msra.mxu0 0.0
      %1883 = vmatprep.subr.mxu0 0.0
      %1884 = vmatpush2.msra.mxu0 0.0
      %1885 = vmatprep.subr.mxu0 0.0
      %1886 = vmatpush2.msra.mxu0 0.0
      %1887 = vmatprep.mubr.f32.mxu0 0.0
      %v1888 = vand.u32 %v1667, 4294901760
      %v1889 = vsub.f32 %v1667, %v1888
      %1890 = vmatmul.mubr.f32.gmra.mxu0 %v1889
      %v1891 = vpop.f32.mrf.mxu0
      %v1892 = vadd.f32 %v1818, %v1891
      %v1893 = vpop.f32.mrf.mxu0
      %1894 = vdwg.mxu0
      %1895 = vmatprep.subr.mxu0 0.0
      %1896 = vmatpush1.msra.mxu0 0.0
      %1897 = vmatprep.subr.mxu0 0.0
      %1898 = vmatpush1.msra.mxu0 0.0
      %1899 = vmatprep.subr.mxu0 0.0
      %1900 = vmatpush1.msra.mxu0 0.0
      %1901 = vmatprep.subr.mxu0 0.0
      %1902 = vmatpush1.msra.mxu0 0.0
      %1903 = vmatprep.subr.mxu0 0.0
      %1904 = vmatpush1.msra.mxu0 0.0
      %1905 = vmatprep.subr.mxu0 0.0
      %1906 = vmatpush1.msra.mxu0 0.0
      %1907 = vmatprep.subr.mxu0 0.0
      %1908 = vmatpush1.msra.mxu0 0.0
      %1909 = vmatprep.subr.mxu0 0.0
      %1910 = vmatpush1.msra.mxu0 0.0
      %1911 = vmatprep.subr.mxu0 0.0
      %1912 = vmatpush1.msra.mxu0 0.0
      %1913 = vmatprep.subr.mxu0 0.0
      %1914 = vmatpush1.msra.mxu0 0.0
      %1915 = vmatprep.subr.mxu0 0.0
      %1916 = vmatpush1.msra.mxu0 0.0
      %1917 = vmatprep.subr.mxu0 0.0
      %1918 = vmatpush1.msra.mxu0 0.0
      %1919 = vmatprep.subr.mxu0 0.0
      %1920 = vmatpush1.msra.mxu0 0.0
      %1921 = vmatprep.subr.mxu0 0.0
      %1922 = vmatpush1.msra.mxu0 0.0
      %1923 = vmatprep.subr.mxu0 0.0
      %1924 = vmatpush1.msra.mxu0 0.0
      %1925 = vmatprep.subr.mxu0 0.0
      %v1926 = vand.u32 %v257, 4294901760
      %1927 = vmatpush1.msra.mxu0 %v1926
      %1928 = vmatprep.subr.mxu0 0.0
      %1929 = vmatpush2.msra.mxu0 0.0
      %1930 = vmatprep.subr.mxu0 0.0
      %1931 = vmatpush2.msra.mxu0 0.0
      %1932 = vmatprep.subr.mxu0 0.0
      %1933 = vmatpush2.msra.mxu0 0.0
      %1934 = vmatprep.subr.mxu0 0.0
      %1935 = vmatpush2.msra.mxu0 0.0
      %1936 = vmatprep.subr.mxu0 0.0
      %1937 = vmatpush2.msra.mxu0 0.0
      %1938 = vmatprep.subr.mxu0 0.0
      %1939 = vmatpush2.msra.mxu0 0.0
      %1940 = vmatprep.subr.mxu0 0.0
      %1941 = vmatpush2.msra.mxu0 0.0
      %1942 = vmatprep.subr.mxu0 0.0
      %1943 = vmatpush2.msra.mxu0 0.0
      %1944 = vmatprep.subr.mxu0 0.0
      %1945 = vmatpush2.msra.mxu0 0.0
      %1946 = vmatprep.subr.mxu0 0.0
      %1947 = vmatpush2.msra.mxu0 0.0
      %1948 = vmatprep.subr.mxu0 0.0
      %1949 = vmatpush2.msra.mxu0 0.0
      %1950 = vmatprep.subr.mxu0 0.0
      %1951 = vmatpush2.msra.mxu0 0.0
      %1952 = vmatprep.subr.mxu0 0.0
      %1953 = vmatpush2.msra.mxu0 0.0
      %1954 = vmatprep.subr.mxu0 0.0
      %1955 = vmatpush2.msra.mxu0 0.0
      %1956 = vmatprep.subr.mxu0 0.0
      %1957 = vmatpush2.msra.mxu0 0.0
      %1958 = vmatprep.subr.mxu0 0.0
      %1959 = vmatpush2.msra.mxu0 0.0
      %1960 = vmatprep.mubr.f32.mxu0 0.0
      %v1961 = vand.u32 %v1667, 4294901760
      %v1962 = vsub.f32 %v1667, %v1961
      %v1963 = vand.u32 %v1962, 4294901760
      %1964 = vmatmul.mubr.f32.gmra.mxu0 %v1963
      %v1965 = vpop.f32.mrf.mxu0
      %v1966 = vadd.f32 %v1892, %v1965
      %v1967 = vpop.f32.mrf.mxu0
      %1968 = vdwg.mxu0
      %1969 = vmatprep.subr.mxu0 0.0
      %1970 = vmatpush1.msra.mxu0 0.0
      %1971 = vmatprep.subr.mxu0 0.0
      %1972 = vmatpush1.msra.mxu0 0.0
      %1973 = vmatprep.subr.mxu0 0.0
      %1974 = vmatpush1.msra.mxu0 0.0
      %1975 = vmatprep.subr.mxu0 0.0
      %1976 = vmatpush1.msra.mxu0 0.0
      %1977 = vmatprep.subr.mxu0 0.0
      %1978 = vmatpush1.msra.mxu0 0.0
      %1979 = vmatprep.subr.mxu0 0.0
      %1980 = vmatpush1.msra.mxu0 0.0
      %1981 = vmatprep.subr.mxu0 0.0
      %1982 = vmatpush1.msra.mxu0 0.0
      %1983 = vmatprep.subr.mxu0 0.0
      %1984 = vmatpush1.msra.mxu0 0.0
      %1985 = vmatprep.subr.mxu0 0.0
      %1986 = vmatpush1.msra.mxu0 0.0
      %1987 = vmatprep.subr.mxu0 0.0
      %1988 = vmatpush1.msra.mxu0 0.0
      %1989 = vmatprep.subr.mxu0 0.0
      %1990 = vmatpush1.msra.mxu0 0.0
      %1991 = vmatprep.subr.mxu0 0.0
      %1992 = vmatpush1.msra.mxu0 0.0
      %1993 = vmatprep.subr.mxu0 0.0
      %1994 = vmatpush1.msra.mxu0 0.0
      %1995 = vmatprep.subr.mxu0 0.0
      %1996 = vmatpush1.msra.mxu0 0.0
      %1997 = vmatprep.subr.mxu0 0.0
      %1998 = vmatpush1.msra.mxu0 0.0
      %1999 = vmatprep.subr.mxu0 0.0
      %v2000 = vand.u32 %v257, 4294901760
      %v2001 = vsub.f32 %v257, %v2000
      %v2002 = vand.u32 %v2001, 4294901760
      %2003 = vmatpush1.msra.mxu0 %v2002
      %2004 = vmatprep.subr.mxu0 0.0
      %2005 = vmatpush2.msra.mxu0 0.0
      %2006 = vmatprep.subr.mxu0 0.0
      %2007 = vmatpush2.msra.mxu0 0.0
      %2008 = vmatprep.subr.mxu0 0.0
      %2009 = vmatpush2.msra.mxu0 0.0
      %2010 = vmatprep.subr.mxu0 0.0
      %2011 = vmatpush2.msra.mxu0 0.0
      %2012 = vmatprep.subr.mxu0 0.0
      %2013 = vmatpush2.msra.mxu0 0.0
      %2014 = vmatprep.subr.mxu0 0.0
      %2015 = vmatpush2.msra.mxu0 0.0
      %2016 = vmatprep.subr.mxu0 0.0
      %2017 = vmatpush2.msra.mxu0 0.0
      %2018 = vmatprep.subr.mxu0 0.0
      %2019 = vmatpush2.msra.mxu0 0.0
      %2020 = vmatprep.subr.mxu0 0.0
      %2021 = vmatpush2.msra.mxu0 0.0
      %2022 = vmatprep.subr.mxu0 0.0
      %2023 = vmatpush2.msra.mxu0 0.0
      %2024 = vmatprep.subr.mxu0 0.0
      %2025 = vmatpush2.msra.mxu0 0.0
      %2026 = vmatprep.subr.mxu0 0.0
      %2027 = vmatpush2.msra.mxu0 0.0
      %2028 = vmatprep.subr.mxu0 0.0
      %2029 = vmatpush2.msra.mxu0 0.0
      %2030 = vmatprep.subr.mxu0 0.0
      %2031 = vmatpush2.msra.mxu0 0.0
      %2032 = vmatprep.subr.mxu0 0.0
      %2033 = vmatpush2.msra.mxu0 0.0
      %2034 = vmatprep.subr.mxu0 0.0
      %2035 = vmatpush2.msra.mxu0 0.0
      %2036 = vmatprep.mubr.f32.mxu0 0.0
      %v2037 = vand.u32 %v1667, 4294901760
      %2038 = vmatmul.mubr.f32.gmra.mxu0 %v2037
      %v2039 = vpop.f32.mrf.mxu0
      %v2040 = vadd.f32 %v1966, %v2039
      %v2041 = vpop.f32.mrf.mxu0
      %2042 = vdwg.mxu0
      %2043 = vmatprep.subr.mxu0 0.0
      %2044 = vmatpush1.msra.mxu0 0.0
      %2045 = vmatprep.subr.mxu0 0.0
      %2046 = vmatpush1.msra.mxu0 0.0
      %2047 = vmatprep.subr.mxu0 0.0
      %2048 = vmatpush1.msra.mxu0 0.0
      %2049 = vmatprep.subr.mxu0 0.0
      %2050 = vmatpush1.msra.mxu0 0.0
      %2051 = vmatprep.subr.mxu0 0.0
      %2052 = vmatpush1.msra.mxu0 0.0
      %2053 = vmatprep.subr.mxu0 0.0
      %2054 = vmatpush1.msra.mxu0 0.0
      %2055 = vmatprep.subr.mxu0 0.0
      %2056 = vmatpush1.msra.mxu0 0.0
      %2057 = vmatprep.subr.mxu0 0.0
      %2058 = vmatpush1.msra.mxu0 0.0
      %2059 = vmatprep.subr.mxu0 0.0
      %2060 = vmatpush1.msra.mxu0 0.0
      %2061 = vmatprep.subr.mxu0 0.0
      %2062 = vmatpush1.msra.mxu0 0.0
      %2063 = vmatprep.subr.mxu0 0.0
      %2064 = vmatpush1.msra.mxu0 0.0
      %2065 = vmatprep.subr.mxu0 0.0
      %2066 = vmatpush1.msra.mxu0 0.0
      %2067 = vmatprep.subr.mxu0 0.0
      %2068 = vmatpush1.msra.mxu0 0.0
      %2069 = vmatprep.subr.mxu0 0.0
      %2070 = vmatpush1.msra.mxu0 0.0
      %2071 = vmatprep.subr.mxu0 0.0
      %2072 = vmatpush1.msra.mxu0 0.0
      %2073 = vmatprep.subr.mxu0 0.0
      %v2074 = vand.u32 %v257, 4294901760
      %2075 = vmatpush1.msra.mxu0 %v2074
      %2076 = vmatprep.subr.mxu0 0.0
      %2077 = vmatpush2.msra.mxu0 0.0
      %2078 = vmatprep.subr.mxu0 0.0
      %2079 = vmatpush2.msra.mxu0 0.0
      %2080 = vmatprep.subr.mxu0 0.0
      %2081 = vmatpush2.msra.mxu0 0.0
      %2082 = vmatprep.subr.mxu0 0.0
      %2083 = vmatpush2.msra.mxu0 0.0
      %2084 = vmatprep.subr.mxu0 0.0
      %2085 = vmatpush2.msra.mxu0 0.0
      %2086 = vmatprep.subr.mxu0 0.0
      %2087 = vmatpush2.msra.mxu0 0.0
      %2088 = vmatprep.subr.mxu0 0.0
      %2089 = vmatpush2.msra.mxu0 0.0
      %2090 = vmatprep.subr.mxu0 0.0
      %2091 = vmatpush2.msra.mxu0 0.0
      %2092 = vmatprep.subr.mxu0 0.0
      %2093 = vmatpush2.msra.mxu0 0.0
      %2094 = vmatprep.subr.mxu0 0.0
      %2095 = vmatpush2.msra.mxu0 0.0
      %2096 = vmatprep.subr.mxu0 0.0
      %2097 = vmatpush2.msra.mxu0 0.0
      %2098 = vmatprep.subr.mxu0 0.0
      %2099 = vmatpush2.msra.mxu0 0.0
      %2100 = vmatprep.subr.mxu0 0.0
      %2101 = vmatpush2.msra.mxu0 0.0
      %2102 = vmatprep.subr.mxu0 0.0
      %2103 = vmatpush2.msra.mxu0 0.0
      %2104 = vmatprep.subr.mxu0 0.0
      %2105 = vmatpush2.msra.mxu0 0.0
      %2106 = vmatprep.subr.mxu0 0.0
      %2107 = vmatpush2.msra.mxu0 0.0
      %2108 = vmatprep.mubr.f32.mxu0 0.0
      %v2109 = vand.u32 %v1667, 4294901760
      %2110 = vmatmul.mubr.f32.gmra.mxu0 %v2109
      %v2111 = vpop.f32.mrf.mxu0
      %v2112 = vadd.f32 %v2040, %v2111
      %v2113 = vpop.f32.mrf.mxu0
      %2114 = vdwg.mxu0
      %v2116 = vsel %vm318, %v250, 0
      %2118 = vmatprep.subr.mxu0 0.0
      %2119 = vmatpush1.msra.mxu0 0.0
      %2120 = vmatprep.subr.mxu0 0.0
      %2121 = vmatpush1.msra.mxu0 0.0
      %2122 = vmatprep.subr.mxu0 0.0
      %2123 = vmatpush1.msra.mxu0 0.0
      %2124 = vmatprep.subr.mxu0 0.0
      %2125 = vmatpush1.msra.mxu0 0.0
      %2126 = vmatprep.subr.mxu0 0.0
      %2127 = vmatpush1.msra.mxu0 0.0
      %2128 = vmatprep.subr.mxu0 0.0
      %2129 = vmatpush1.msra.mxu0 0.0
      %2130 = vmatprep.subr.mxu0 0.0
      %2131 = vmatpush1.msra.mxu0 0.0
      %2132 = vmatprep.subr.mxu0 0.0
      %2133 = vmatpush1.msra.mxu0 0.0
      %2134 = vmatprep.subr.mxu0 0.0
      %2135 = vmatpush1.msra.mxu0 0.0
      %2136 = vmatprep.subr.mxu0 0.0
      %2137 = vmatpush1.msra.mxu0 0.0
      %2138 = vmatprep.subr.mxu0 0.0
      %2139 = vmatpush1.msra.mxu0 0.0
      %2140 = vmatprep.subr.mxu0 0.0
      %2141 = vmatpush1.msra.mxu0 0.0
      %2142 = vmatprep.subr.mxu0 0.0
      %2143 = vmatpush1.msra.mxu0 0.0
      %2144 = vmatprep.subr.mxu0 0.0
      %2145 = vmatpush1.msra.mxu0 0.0
      %2146 = vmatprep.subr.mxu0 0.0
      %2147 = vmatpush1.msra.mxu0 0.0
      %2148 = vmatprep.subr.mxu0 0.0
      %v2149 = vand.u32 %v258, 4294901760
      %2150 = vmatpush1.msra.mxu0 %v2149
      %2151 = vmatprep.subr.mxu0 0.0
      %2152 = vmatpush2.msra.mxu0 0.0
      %2153 = vmatprep.subr.mxu0 0.0
      %2154 = vmatpush2.msra.mxu0 0.0
      %2155 = vmatprep.subr.mxu0 0.0
      %2156 = vmatpush2.msra.mxu0 0.0
      %2157 = vmatprep.subr.mxu0 0.0
      %2158 = vmatpush2.msra.mxu0 0.0
      %2159 = vmatprep.subr.mxu0 0.0
      %2160 = vmatpush2.msra.mxu0 0.0
      %2161 = vmatprep.subr.mxu0 0.0
      %2162 = vmatpush2.msra.mxu0 0.0
      %2163 = vmatprep.subr.mxu0 0.0
      %2164 = vmatpush2.msra.mxu0 0.0
      %2165 = vmatprep.subr.mxu0 0.0
      %2166 = vmatpush2.msra.mxu0 0.0
      %2167 = vmatprep.subr.mxu0 0.0
      %2168 = vmatpush2.msra.mxu0 0.0
      %2169 = vmatprep.subr.mxu0 0.0
      %2170 = vmatpush2.msra.mxu0 0.0
      %2171 = vmatprep.subr.mxu0 0.0
      %2172 = vmatpush2.msra.mxu0 0.0
      %2173 = vmatprep.subr.mxu0 0.0
      %2174 = vmatpush2.msra.mxu0 0.0
      %2175 = vmatprep.subr.mxu0 0.0
      %2176 = vmatpush2.msra.mxu0 0.0
      %2177 = vmatprep.subr.mxu0 0.0
      %2178 = vmatpush2.msra.mxu0 0.0
      %2179 = vmatprep.subr.mxu0 0.0
      %2180 = vmatpush2.msra.mxu0 0.0
      %2181 = vmatprep.subr.mxu0 0.0
      %2182 = vmatpush2.msra.mxu0 0.0
      %2183 = vmatprep.mubr.f32.mxu0 0.0
      %v2184 = vand.u32 %v2116, 4294901760
      %v2185 = vsub.f32 %v2116, %v2184
      %v2186 = vand.u32 %v2185, 4294901760
      %v2187 = vsub.f32 %v2185, %v2186
      %v2188 = vand.u32 %v2187, 4294901760
      %2189 = vmatmul.mubr.f32.gmra.mxu0 %v2188
      %v2190 = vpop.f32.mrf.mxu0
      %v2191 = vadd.f32 %v297, %v2190
      %v2192 = vpop.f32.mrf.mxu0
      %2193 = vdwg.mxu0
      %2194 = vmatprep.subr.mxu0 0.0
      %2195 = vmatpush1.msra.mxu0 0.0
      %2196 = vmatprep.subr.mxu0 0.0
      %2197 = vmatpush1.msra.mxu0 0.0
      %2198 = vmatprep.subr.mxu0 0.0
      %2199 = vmatpush1.msra.mxu0 0.0
      %2200 = vmatprep.subr.mxu0 0.0
      %2201 = vmatpush1.msra.mxu0 0.0
      %2202 = vmatprep.subr.mxu0 0.0
      %2203 = vmatpush1.msra.mxu0 0.0
      %2204 = vmatprep.subr.mxu0 0.0
      %2205 = vmatpush1.msra.mxu0 0.0
      %2206 = vmatprep.subr.mxu0 0.0
      %2207 = vmatpush1.msra.mxu0 0.0
      %2208 = vmatprep.subr.mxu0 0.0
      %2209 = vmatpush1.msra.mxu0 0.0
      %2210 = vmatprep.subr.mxu0 0.0
      %2211 = vmatpush1.msra.mxu0 0.0
      %2212 = vmatprep.subr.mxu0 0.0
      %2213 = vmatpush1.msra.mxu0 0.0
      %2214 = vmatprep.subr.mxu0 0.0
      %2215 = vmatpush1.msra.mxu0 0.0
      %2216 = vmatprep.subr.mxu0 0.0
      %2217 = vmatpush1.msra.mxu0 0.0
      %2218 = vmatprep.subr.mxu0 0.0
      %2219 = vmatpush1.msra.mxu0 0.0
      %2220 = vmatprep.subr.mxu0 0.0
      %2221 = vmatpush1.msra.mxu0 0.0
      %2222 = vmatprep.subr.mxu0 0.0
      %2223 = vmatpush1.msra.mxu0 0.0
      %2224 = vmatprep.subr.mxu0 0.0
      %v2225 = vand.u32 %v258, 4294901760
      %v2226 = vsub.f32 %v258, %v2225
      %v2227 = vand.u32 %v2226, 4294901760
      %v2228 = vsub.f32 %v2226, %v2227
      %v2229 = vand.u32 %v2228, 4294901760
      %2230 = vmatpush1.msra.mxu0 %v2229
      %2231 = vmatprep.subr.mxu0 0.0
      %2232 = vmatpush2.msra.mxu0 0.0
      %2233 = vmatprep.subr.mxu0 0.0
      %2234 = vmatpush2.msra.mxu0 0.0
      %2235 = vmatprep.subr.mxu0 0.0
      %2236 = vmatpush2.msra.mxu0 0.0
      %2237 = vmatprep.subr.mxu0 0.0
      %2238 = vmatpush2.msra.mxu0 0.0
      %2239 = vmatprep.subr.mxu0 0.0
      %2240 = vmatpush2.msra.mxu0 0.0
      %2241 = vmatprep.subr.mxu0 0.0
      %2242 = vmatpush2.msra.mxu0 0.0
      %2243 = vmatprep.subr.mxu0 0.0
      %2244 = vmatpush2.msra.mxu0 0.0
      %2245 = vmatprep.subr.mxu0 0.0
      %2246 = vmatpush2.msra.mxu0 0.0
      %2247 = vmatprep.subr.mxu0 0.0
      %2248 = vmatpush2.msra.mxu0 0.0
      %2249 = vmatprep.subr.mxu0 0.0
      %2250 = vmatpush2.msra.mxu0 0.0
      %2251 = vmatprep.subr.mxu0 0.0
      %2252 = vmatpush2.msra.mxu0 0.0
      %2253 = vmatprep.subr.mxu0 0.0
      %2254 = vmatpush2.msra.mxu0 0.0
      %2255 = vmatprep.subr.mxu0 0.0
      %2256 = vmatpush2.msra.mxu0 0.0
      %2257 = vmatprep.subr.mxu0 0.0
      %2258 = vmatpush2.msra.mxu0 0.0
      %2259 = vmatprep.subr.mxu0 0.0
      %2260 = vmatpush2.msra.mxu0 0.0
      %2261 = vmatprep.subr.mxu0 0.0
      %2262 = vmatpush2.msra.mxu0 0.0
      %2263 = vmatprep.mubr.f32.mxu0 0.0
      %v2264 = vand.u32 %v2116, 4294901760
      %2265 = vmatmul.mubr.f32.gmra.mxu0 %v2264
      %v2266 = vpop.f32.mrf.mxu0
      %v2267 = vadd.f32 %v2191, %v2266
      %v2268 = vpop.f32.mrf.mxu0
      %2269 = vdwg.mxu0
      %2270 = vmatprep.subr.mxu0 0.0
      %2271 = vmatpush1.msra.mxu0 0.0
      %2272 = vmatprep.subr.mxu0 0.0
      %2273 = vmatpush1.msra.mxu0 0.0
      %2274 = vmatprep.subr.mxu0 0.0
      %2275 = vmatpush1.msra.mxu0 0.0
      %2276 = vmatprep.subr.mxu0 0.0
      %2277 = vmatpush1.msra.mxu0 0.0
      %2278 = vmatprep.subr.mxu0 0.0
      %2279 = vmatpush1.msra.mxu0 0.0
      %2280 = vmatprep.subr.mxu0 0.0
      %2281 = vmatpush1.msra.mxu0 0.0
      %2282 = vmatprep.subr.mxu0 0.0
      %2283 = vmatpush1.msra.mxu0 0.0
      %2284 = vmatprep.subr.mxu0 0.0
      %2285 = vmatpush1.msra.mxu0 0.0
      %2286 = vmatprep.subr.mxu0 0.0
      %2287 = vmatpush1.msra.mxu0 0.0
      %2288 = vmatprep.subr.mxu0 0.0
      %2289 = vmatpush1.msra.mxu0 0.0
      %2290 = vmatprep.subr.mxu0 0.0
      %2291 = vmatpush1.msra.mxu0 0.0
      %2292 = vmatprep.subr.mxu0 0.0
      %2293 = vmatpush1.msra.mxu0 0.0
      %2294 = vmatprep.subr.mxu0 0.0
      %2295 = vmatpush1.msra.mxu0 0.0
      %2296 = vmatprep.subr.mxu0 0.0
      %2297 = vmatpush1.msra.mxu0 0.0
      %2298 = vmatprep.subr.mxu0 0.0
      %2299 = vmatpush1.msra.mxu0 0.0
      %2300 = vmatprep.subr.mxu0 0.0
      %v2301 = vand.u32 %v258, 4294901760
      %v2302 = vsub.f32 %v258, %v2301
      %2303 = vmatpush1.msra.mxu0 %v2302
      %2304 = vmatprep.subr.mxu0 0.0
      %2305 = vmatpush2.msra.mxu0 0.0
      %2306 = vmatprep.subr.mxu0 0.0
      %2307 = vmatpush2.msra.mxu0 0.0
      %2308 = vmatprep.subr.mxu0 0.0
      %2309 = vmatpush2.msra.mxu0 0.0
      %2310 = vmatprep.subr.mxu0 0.0
      %2311 = vmatpush2.msra.mxu0 0.0
      %2312 = vmatprep.subr.mxu0 0.0
      %2313 = vmatpush2.msra.mxu0 0.0
      %2314 = vmatprep.subr.mxu0 0.0
      %2315 = vmatpush2.msra.mxu0 0.0
      %2316 = vmatprep.subr.mxu0 0.0
      %2317 = vmatpush2.msra.mxu0 0.0
      %2318 = vmatprep.subr.mxu0 0.0
      %2319 = vmatpush2.msra.mxu0 0.0
      %2320 = vmatprep.subr.mxu0 0.0
      %2321 = vmatpush2.msra.mxu0 0.0
      %2322 = vmatprep.subr.mxu0 0.0
      %2323 = vmatpush2.msra.mxu0 0.0
      %2324 = vmatprep.subr.mxu0 0.0
      %2325 = vmatpush2.msra.mxu0 0.0
      %2326 = vmatprep.subr.mxu0 0.0
      %2327 = vmatpush2.msra.mxu0 0.0
      %2328 = vmatprep.subr.mxu0 0.0
      %2329 = vmatpush2.msra.mxu0 0.0
      %2330 = vmatprep.subr.mxu0 0.0
      %2331 = vmatpush2.msra.mxu0 0.0
      %2332 = vmatprep.subr.mxu0 0.0
      %2333 = vmatpush2.msra.mxu0 0.0
      %2334 = vmatprep.subr.mxu0 0.0
      %2335 = vmatpush2.msra.mxu0 0.0
      %2336 = vmatprep.mubr.f32.mxu0 0.0
      %v2337 = vand.u32 %v2116, 4294901760
      %v2338 = vsub.f32 %v2116, %v2337
      %2339 = vmatmul.mubr.f32.gmra.mxu0 %v2338
      %v2340 = vpop.f32.mrf.mxu0
      %v2341 = vadd.f32 %v2267, %v2340
      %v2342 = vpop.f32.mrf.mxu0
      %2343 = vdwg.mxu0
      %2344 = vmatprep.subr.mxu0 0.0
      %2345 = vmatpush1.msra.mxu0 0.0
      %2346 = vmatprep.subr.mxu0 0.0
      %2347 = vmatpush1.msra.mxu0 0.0
      %2348 = vmatprep.subr.mxu0 0.0
      %2349 = vmatpush1.msra.mxu0 0.0
      %2350 = vmatprep.subr.mxu0 0.0
      %2351 = vmatpush1.msra.mxu0 0.0
      %2352 = vmatprep.subr.mxu0 0.0
      %2353 = vmatpush1.msra.mxu0 0.0
      %2354 = vmatprep.subr.mxu0 0.0
      %2355 = vmatpush1.msra.mxu0 0.0
      %2356 = vmatprep.subr.mxu0 0.0
      %2357 = vmatpush1.msra.mxu0 0.0
      %2358 = vmatprep.subr.mxu0 0.0
      %2359 = vmatpush1.msra.mxu0 0.0
      %2360 = vmatprep.subr.mxu0 0.0
      %2361 = vmatpush1.msra.mxu0 0.0
      %2362 = vmatprep.subr.mxu0 0.0
      %2363 = vmatpush1.msra.mxu0 0.0
      %2364 = vmatprep.subr.mxu0 0.0
      %2365 = vmatpush1.msra.mxu0 0.0
      %2366 = vmatprep.subr.mxu0 0.0
      %2367 = vmatpush1.msra.mxu0 0.0
      %2368 = vmatprep.subr.mxu0 0.0
      %2369 = vmatpush1.msra.mxu0 0.0
      %2370 = vmatprep.subr.mxu0 0.0
      %2371 = vmatpush1.msra.mxu0 0.0
      %2372 = vmatprep.subr.mxu0 0.0
      %2373 = vmatpush1.msra.mxu0 0.0
      %2374 = vmatprep.subr.mxu0 0.0
      %v2375 = vand.u32 %v258, 4294901760
      %2376 = vmatpush1.msra.mxu0 %v2375
      %2377 = vmatprep.subr.mxu0 0.0
      %2378 = vmatpush2.msra.mxu0 0.0
      %2379 = vmatprep.subr.mxu0 0.0
      %2380 = vmatpush2.msra.mxu0 0.0
      %2381 = vmatprep.subr.mxu0 0.0
      %2382 = vmatpush2.msra.mxu0 0.0
      %2383 = vmatprep.subr.mxu0 0.0
      %2384 = vmatpush2.msra.mxu0 0.0
      %2385 = vmatprep.subr.mxu0 0.0
      %2386 = vmatpush2.msra.mxu0 0.0
      %2387 = vmatprep.subr.mxu0 0.0
      %2388 = vmatpush2.msra.mxu0 0.0
      %2389 = vmatprep.subr.mxu0 0.0
      %2390 = vmatpush2.msra.mxu0 0.0
      %2391 = vmatprep.subr.mxu0 0.0
      %2392 = vmatpush2.msra.mxu0 0.0
      %2393 = vmatprep.subr.mxu0 0.0
      %2394 = vmatpush2.msra.mxu0 0.0
      %2395 = vmatprep.subr.mxu0 0.0
      %2396 = vmatpush2.msra.mxu0 0.0
      %2397 = vmatprep.subr.mxu0 0.0
      %2398 = vmatpush2.msra.mxu0 0.0
      %2399 = vmatprep.subr.mxu0 0.0
      %2400 = vmatpush2.msra.mxu0 0.0
      %2401 = vmatprep.subr.mxu0 0.0
      %2402 = vmatpush2.msra.mxu0 0.0
      %2403 = vmatprep.subr.mxu0 0.0
      %2404 = vmatpush2.msra.mxu0 0.0
      %2405 = vmatprep.subr.mxu0 0.0
      %2406 = vmatpush2.msra.mxu0 0.0
      %2407 = vmatprep.subr.mxu0 0.0
      %2408 = vmatpush2.msra.mxu0 0.0
      %2409 = vmatprep.mubr.f32.mxu0 0.0
      %v2410 = vand.u32 %v2116, 4294901760
      %v2411 = vsub.f32 %v2116, %v2410
      %v2412 = vand.u32 %v2411, 4294901760
      %2413 = vmatmul.mubr.f32.gmra.mxu0 %v2412
      %v2414 = vpop.f32.mrf.mxu0
      %v2415 = vadd.f32 %v2341, %v2414
      %v2416 = vpop.f32.mrf.mxu0
      %2417 = vdwg.mxu0
      %2418 = vmatprep.subr.mxu0 0.0
      %2419 = vmatpush1.msra.mxu0 0.0
      %2420 = vmatprep.subr.mxu0 0.0
      %2421 = vmatpush1.msra.mxu0 0.0
      %2422 = vmatprep.subr.mxu0 0.0
      %2423 = vmatpush1.msra.mxu0 0.0
      %2424 = vmatprep.subr.mxu0 0.0
      %2425 = vmatpush1.msra.mxu0 0.0
      %2426 = vmatprep.subr.mxu0 0.0
      %2427 = vmatpush1.msra.mxu0 0.0
      %2428 = vmatprep.subr.mxu0 0.0
      %2429 = vmatpush1.msra.mxu0 0.0
      %2430 = vmatprep.subr.mxu0 0.0
      %2431 = vmatpush1.msra.mxu0 0.0
      %2432 = vmatprep.subr.mxu0 0.0
      %2433 = vmatpush1.msra.mxu0 0.0
      %2434 = vmatprep.subr.mxu0 0.0
      %2435 = vmatpush1.msra.mxu0 0.0
      %2436 = vmatprep.subr.mxu0 0.0
      %2437 = vmatpush1.msra.mxu0 0.0
      %2438 = vmatprep.subr.mxu0 0.0
      %2439 = vmatpush1.msra.mxu0 0.0
      %2440 = vmatprep.subr.mxu0 0.0
      %2441 = vmatpush1.msra.mxu0 0.0
      %2442 = vmatprep.subr.mxu0 0.0
      %2443 = vmatpush1.msra.mxu0 0.0
      %2444 = vmatprep.subr.mxu0 0.0
      %2445 = vmatpush1.msra.mxu0 0.0
      %2446 = vmatprep.subr.mxu0 0.0
      %2447 = vmatpush1.msra.mxu0 0.0
      %2448 = vmatprep.subr.mxu0 0.0
      %v2449 = vand.u32 %v258, 4294901760
      %v2450 = vsub.f32 %v258, %v2449
      %v2451 = vand.u32 %v2450, 4294901760
      %2452 = vmatpush1.msra.mxu0 %v2451
      %2453 = vmatprep.subr.mxu0 0.0
      %2454 = vmatpush2.msra.mxu0 0.0
      %2455 = vmatprep.subr.mxu0 0.0
      %2456 = vmatpush2.msra.mxu0 0.0
      %2457 = vmatprep.subr.mxu0 0.0
      %2458 = vmatpush2.msra.mxu0 0.0
      %2459 = vmatprep.subr.mxu0 0.0
      %2460 = vmatpush2.msra.mxu0 0.0
      %2461 = vmatprep.subr.mxu0 0.0
      %2462 = vmatpush2.msra.mxu0 0.0
      %2463 = vmatprep.subr.mxu0 0.0
      %2464 = vmatpush2.msra.mxu0 0.0
      %2465 = vmatprep.subr.mxu0 0.0
      %2466 = vmatpush2.msra.mxu0 0.0
      %2467 = vmatprep.subr.mxu0 0.0
      %2468 = vmatpush2.msra.mxu0 0.0
      %2469 = vmatprep.subr.mxu0 0.0
      %2470 = vmatpush2.msra.mxu0 0.0
      %2471 = vmatprep.subr.mxu0 0.0
      %2472 = vmatpush2.msra.mxu0 0.0
      %2473 = vmatprep.subr.mxu0 0.0
      %2474 = vmatpush2.msra.mxu0 0.0
      %2475 = vmatprep.subr.mxu0 0.0
      %2476 = vmatpush2.msra.mxu0 0.0
      %2477 = vmatprep.subr.mxu0 0.0
      %2478 = vmatpush2.msra.mxu0 0.0
      %2479 = vmatprep.subr.mxu0 0.0
      %2480 = vmatpush2.msra.mxu0 0.0
      %2481 = vmatprep.subr.mxu0 0.0
      %2482 = vmatpush2.msra.mxu0 0.0
      %2483 = vmatprep.subr.mxu0 0.0
      %2484 = vmatpush2.msra.mxu0 0.0
      %2485 = vmatprep.mubr.f32.mxu0 0.0
      %v2486 = vand.u32 %v2116, 4294901760
      %2487 = vmatmul.mubr.f32.gmra.mxu0 %v2486
      %v2488 = vpop.f32.mrf.mxu0
      %v2489 = vadd.f32 %v2415, %v2488
      %v2490 = vpop.f32.mrf.mxu0
      %2491 = vdwg.mxu0
      %2492 = vmatprep.subr.mxu0 0.0
      %2493 = vmatpush1.msra.mxu0 0.0
      %2494 = vmatprep.subr.mxu0 0.0
      %2495 = vmatpush1.msra.mxu0 0.0
      %2496 = vmatprep.subr.mxu0 0.0
      %2497 = vmatpush1.msra.mxu0 0.0
      %2498 = vmatprep.subr.mxu0 0.0
      %2499 = vmatpush1.msra.mxu0 0.0
      %2500 = vmatprep.subr.mxu0 0.0
      %2501 = vmatpush1.msra.mxu0 0.0
      %2502 = vmatprep.subr.mxu0 0.0
      %2503 = vmatpush1.msra.mxu0 0.0
      %2504 = vmatprep.subr.mxu0 0.0
      %2505 = vmatpush1.msra.mxu0 0.0
      %2506 = vmatprep.subr.mxu0 0.0
      %2507 = vmatpush1.msra.mxu0 0.0
      %2508 = vmatprep.subr.mxu0 0.0
      %2509 = vmatpush1.msra.mxu0 0.0
      %2510 = vmatprep.subr.mxu0 0.0
      %2511 = vmatpush1.msra.mxu0 0.0
      %2512 = vmatprep.subr.mxu0 0.0
      %2513 = vmatpush1.msra.mxu0 0.0
      %2514 = vmatprep.subr.mxu0 0.0
      %2515 = vmatpush1.msra.mxu0 0.0
      %2516 = vmatprep.subr.mxu0 0.0
      %2517 = vmatpush1.msra.mxu0 0.0
      %2518 = vmatprep.subr.mxu0 0.0
      %2519 = vmatpush1.msra.mxu0 0.0
      %2520 = vmatprep.subr.mxu0 0.0
      %2521 = vmatpush1.msra.mxu0 0.0
      %2522 = vmatprep.subr.mxu0 0.0
      %v2523 = vand.u32 %v258, 4294901760
      %2524 = vmatpush1.msra.mxu0 %v2523
      %2525 = vmatprep.subr.mxu0 0.0
      %2526 = vmatpush2.msra.mxu0 0.0
      %2527 = vmatprep.subr.mxu0 0.0
      %2528 = vmatpush2.msra.mxu0 0.0
      %2529 = vmatprep.subr.mxu0 0.0
      %2530 = vmatpush2.msra.mxu0 0.0
      %2531 = vmatprep.subr.mxu0 0.0
      %2532 = vmatpush2.msra.mxu0 0.0
      %2533 = vmatprep.subr.mxu0 0.0
      %2534 = vmatpush2.msra.mxu0 0.0
      %2535 = vmatprep.subr.mxu0 0.0
      %2536 = vmatpush2.msra.mxu0 0.0
      %2537 = vmatprep.subr.mxu0 0.0
      %2538 = vmatpush2.msra.mxu0 0.0
      %2539 = vmatprep.subr.mxu0 0.0
      %2540 = vmatpush2.msra.mxu0 0.0
      %2541 = vmatprep.subr.mxu0 0.0
      %2542 = vmatpush2.msra.mxu0 0.0
      %2543 = vmatprep.subr.mxu0 0.0
      %2544 = vmatpush2.msra.mxu0 0.0
      %2545 = vmatprep.subr.mxu0 0.0
      %2546 = vmatpush2.msra.mxu0 0.0
      %2547 = vmatprep.subr.mxu0 0.0
      %2548 = vmatpush2.msra.mxu0 0.0
      %2549 = vmatprep.subr.mxu0 0.0
      %2550 = vmatpush2.msra.mxu0 0.0
      %2551 = vmatprep.subr.mxu0 0.0
      %2552 = vmatpush2.msra.mxu0 0.0
      %2553 = vmatprep.subr.mxu0 0.0
      %2554 = vmatpush2.msra.mxu0 0.0
      %2555 = vmatprep.subr.mxu0 0.0
      %2556 = vmatpush2.msra.mxu0 0.0
      %2557 = vmatprep.mubr.f32.mxu0 0.0
      %v2558 = vand.u32 %v2116, 4294901760
      %2559 = vmatmul.mubr.f32.gmra.mxu0 %v2558
      %v2560 = vpop.f32.mrf.mxu0
      %v2561 = vadd.f32 %v2489, %v2560
      %v2562 = vpop.f32.mrf.mxu0
      %2563 = vdwg.mxu0
      %v2565 = vsel %vm318, %v251, 0
      %2567 = vmatprep.subr.mxu0 0.0
      %2568 = vmatpush1.msra.mxu0 0.0
      %2569 = vmatprep.subr.mxu0 0.0
      %2570 = vmatpush1.msra.mxu0 0.0
      %2571 = vmatprep.subr.mxu0 0.0
      %2572 = vmatpush1.msra.mxu0 0.0
      %2573 = vmatprep.subr.mxu0 0.0
      %2574 = vmatpush1.msra.mxu0 0.0
      %2575 = vmatprep.subr.mxu0 0.0
      %2576 = vmatpush1.msra.mxu0 0.0
      %2577 = vmatprep.subr.mxu0 0.0
      %2578 = vmatpush1.msra.mxu0 0.0
      %2579 = vmatprep.subr.mxu0 0.0
      %2580 = vmatpush1.msra.mxu0 0.0
      %2581 = vmatprep.subr.mxu0 0.0
      %2582 = vmatpush1.msra.mxu0 0.0
      %2583 = vmatprep.subr.mxu0 0.0
      %2584 = vmatpush1.msra.mxu0 0.0
      %2585 = vmatprep.subr.mxu0 0.0
      %2586 = vmatpush1.msra.mxu0 0.0
      %2587 = vmatprep.subr.mxu0 0.0
      %2588 = vmatpush1.msra.mxu0 0.0
      %2589 = vmatprep.subr.mxu0 0.0
      %2590 = vmatpush1.msra.mxu0 0.0
      %2591 = vmatprep.subr.mxu0 0.0
      %2592 = vmatpush1.msra.mxu0 0.0
      %2593 = vmatprep.subr.mxu0 0.0
      %2594 = vmatpush1.msra.mxu0 0.0
      %2595 = vmatprep.subr.mxu0 0.0
      %2596 = vmatpush1.msra.mxu0 0.0
      %2597 = vmatprep.subr.mxu0 0.0
      %v2598 = vand.u32 %v259, 4294901760
      %2599 = vmatpush1.msra.mxu0 %v2598
      %2600 = vmatprep.subr.mxu0 0.0
      %2601 = vmatpush2.msra.mxu0 0.0
      %2602 = vmatprep.subr.mxu0 0.0
      %2603 = vmatpush2.msra.mxu0 0.0
      %2604 = vmatprep.subr.mxu0 0.0
      %2605 = vmatpush2.msra.mxu0 0.0
      %2606 = vmatprep.subr.mxu0 0.0
      %2607 = vmatpush2.msra.mxu0 0.0
      %2608 = vmatprep.subr.mxu0 0.0
      %2609 = vmatpush2.msra.mxu0 0.0
      %2610 = vmatprep.subr.mxu0 0.0
      %2611 = vmatpush2.msra.mxu0 0.0
      %2612 = vmatprep.subr.mxu0 0.0
      %2613 = vmatpush2.msra.mxu0 0.0
      %2614 = vmatprep.subr.mxu0 0.0
      %2615 = vmatpush2.msra.mxu0 0.0
      %2616 = vmatprep.subr.mxu0 0.0
      %2617 = vmatpush2.msra.mxu0 0.0
      %2618 = vmatprep.subr.mxu0 0.0
      %2619 = vmatpush2.msra.mxu0 0.0
      %2620 = vmatprep.subr.mxu0 0.0
      %2621 = vmatpush2.msra.mxu0 0.0
      %2622 = vmatprep.subr.mxu0 0.0
      %2623 = vmatpush2.msra.mxu0 0.0
      %2624 = vmatprep.subr.mxu0 0.0
      %2625 = vmatpush2.msra.mxu0 0.0
      %2626 = vmatprep.subr.mxu0 0.0
      %2627 = vmatpush2.msra.mxu0 0.0
      %2628 = vmatprep.subr.mxu0 0.0
      %2629 = vmatpush2.msra.mxu0 0.0
      %2630 = vmatprep.subr.mxu0 0.0
      %2631 = vmatpush2.msra.mxu0 0.0
      %2632 = vmatprep.mubr.f32.mxu0 0.0
      %v2633 = vand.u32 %v2565, 4294901760
      %v2634 = vsub.f32 %v2565, %v2633
      %v2635 = vand.u32 %v2634, 4294901760
      %v2636 = vsub.f32 %v2634, %v2635
      %v2637 = vand.u32 %v2636, 4294901760
      %2638 = vmatmul.mubr.f32.gmra.mxu0 %v2637
      %v2639 = vpop.f32.mrf.mxu0
      %v2640 = vadd.f32 %v301, %v2639
      %v2641 = vpop.f32.mrf.mxu0
      %2642 = vdwg.mxu0
      %2643 = vmatprep.subr.mxu0 0.0
      %2644 = vmatpush1.msra.mxu0 0.0
      %2645 = vmatprep.subr.mxu0 0.0
      %2646 = vmatpush1.msra.mxu0 0.0
      %2647 = vmatprep.subr.mxu0 0.0
      %2648 = vmatpush1.msra.mxu0 0.0
      %2649 = vmatprep.subr.mxu0 0.0
      %2650 = vmatpush1.msra.mxu0 0.0
      %2651 = vmatprep.subr.mxu0 0.0
      %2652 = vmatpush1.msra.mxu0 0.0
      %2653 = vmatprep.subr.mxu0 0.0
      %2654 = vmatpush1.msra.mxu0 0.0
      %2655 = vmatprep.subr.mxu0 0.0
      %2656 = vmatpush1.msra.mxu0 0.0
      %2657 = vmatprep.subr.mxu0 0.0
      %2658 = vmatpush1.msra.mxu0 0.0
      %2659 = vmatprep.subr.mxu0 0.0
      %2660 = vmatpush1.msra.mxu0 0.0
      %2661 = vmatprep.subr.mxu0 0.0
      %2662 = vmatpush1.msra.mxu0 0.0
      %2663 = vmatprep.subr.mxu0 0.0
      %2664 = vmatpush1.msra.mxu0 0.0
      %2665 = vmatprep.subr.mxu0 0.0
      %2666 = vmatpush1.msra.mxu0 0.0
      %2667 = vmatprep.subr.mxu0 0.0
      %2668 = vmatpush1.msra.mxu0 0.0
      %2669 = vmatprep.subr.mxu0 0.0
      %2670 = vmatpush1.msra.mxu0 0.0
      %2671 = vmatprep.subr.mxu0 0.0
      %2672 = vmatpush1.msra.mxu0 0.0
      %2673 = vmatprep.subr.mxu0 0.0
      %v2674 = vand.u32 %v259, 4294901760
      %v2675 = vsub.f32 %v259, %v2674
      %v2676 = vand.u32 %v2675, 4294901760
      %v2677 = vsub.f32 %v2675, %v2676
      %v2678 = vand.u32 %v2677, 4294901760
      %2679 = vmatpush1.msra.mxu0 %v2678
      %2680 = vmatprep.subr.mxu0 0.0
      %2681 = vmatpush2.msra.mxu0 0.0
      %2682 = vmatprep.subr.mxu0 0.0
      %2683 = vmatpush2.msra.mxu0 0.0
      %2684 = vmatprep.subr.mxu0 0.0
      %2685 = vmatpush2.msra.mxu0 0.0
      %2686 = vmatprep.subr.mxu0 0.0
      %2687 = vmatpush2.msra.mxu0 0.0
      %2688 = vmatprep.subr.mxu0 0.0
      %2689 = vmatpush2.msra.mxu0 0.0
      %2690 = vmatprep.subr.mxu0 0.0
      %2691 = vmatpush2.msra.mxu0 0.0
      %2692 = vmatprep.subr.mxu0 0.0
      %2693 = vmatpush2.msra.mxu0 0.0
      %2694 = vmatprep.subr.mxu0 0.0
      %2695 = vmatpush2.msra.mxu0 0.0
      %2696 = vmatprep.subr.mxu0 0.0
      %2697 = vmatpush2.msra.mxu0 0.0
      %2698 = vmatprep.subr.mxu0 0.0
      %2699 = vmatpush2.msra.mxu0 0.0
      %2700 = vmatprep.subr.mxu0 0.0
      %2701 = vmatpush2.msra.mxu0 0.0
      %2702 = vmatprep.subr.mxu0 0.0
      %2703 = vmatpush2.msra.mxu0 0.0
      %2704 = vmatprep.subr.mxu0 0.0
      %2705 = vmatpush2.msra.mxu0 0.0
      %2706 = vmatprep.subr.mxu0 0.0
      %2707 = vmatpush2.msra.mxu0 0.0
      %2708 = vmatprep.subr.mxu0 0.0
      %2709 = vmatpush2.msra.mxu0 0.0
      %2710 = vmatprep.subr.mxu0 0.0
      %2711 = vmatpush2.msra.mxu0 0.0
      %2712 = vmatprep.mubr.f32.mxu0 0.0
      %v2713 = vand.u32 %v2565, 4294901760
      %2714 = vmatmul.mubr.f32.gmra.mxu0 %v2713
      %v2715 = vpop.f32.mrf.mxu0
      %v2716 = vadd.f32 %v2640, %v2715
      %v2717 = vpop.f32.mrf.mxu0
      %2718 = vdwg.mxu0
      %2719 = vmatprep.subr.mxu0 0.0
      %2720 = vmatpush1.msra.mxu0 0.0
      %2721 = vmatprep.subr.mxu0 0.0
      %2722 = vmatpush1.msra.mxu0 0.0
      %2723 = vmatprep.subr.mxu0 0.0
      %2724 = vmatpush1.msra.mxu0 0.0
      %2725 = vmatprep.subr.mxu0 0.0
      %2726 = vmatpush1.msra.mxu0 0.0
      %2727 = vmatprep.subr.mxu0 0.0
      %2728 = vmatpush1.msra.mxu0 0.0
      %2729 = vmatprep.subr.mxu0 0.0
      %2730 = vmatpush1.msra.mxu0 0.0
      %2731 = vmatprep.subr.mxu0 0.0
      %2732 = vmatpush1.msra.mxu0 0.0
      %2733 = vmatprep.subr.mxu0 0.0
      %2734 = vmatpush1.msra.mxu0 0.0
      %2735 = vmatprep.subr.mxu0 0.0
      %2736 = vmatpush1.msra.mxu0 0.0
      %2737 = vmatprep.subr.mxu0 0.0
      %2738 = vmatpush1.msra.mxu0 0.0
      %2739 = vmatprep.subr.mxu0 0.0
      %2740 = vmatpush1.msra.mxu0 0.0
      %2741 = vmatprep.subr.mxu0 0.0
      %2742 = vmatpush1.msra.mxu0 0.0
      %2743 = vmatprep.subr.mxu0 0.0
      %2744 = vmatpush1.msra.mxu0 0.0
      %2745 = vmatprep.subr.mxu0 0.0
      %2746 = vmatpush1.msra.mxu0 0.0
      %2747 = vmatprep.subr.mxu0 0.0
      %2748 = vmatpush1.msra.mxu0 0.0
      %2749 = vmatprep.subr.mxu0 0.0
      %v2750 = vand.u32 %v259, 4294901760
      %v2751 = vsub.f32 %v259, %v2750
      %2752 = vmatpush1.msra.mxu0 %v2751
      %2753 = vmatprep.subr.mxu0 0.0
      %2754 = vmatpush2.msra.mxu0 0.0
      %2755 = vmatprep.subr.mxu0 0.0
      %2756 = vmatpush2.msra.mxu0 0.0
      %2757 = vmatprep.subr.mxu0 0.0
      %2758 = vmatpush2.msra.mxu0 0.0
      %2759 = vmatprep.subr.mxu0 0.0
      %2760 = vmatpush2.msra.mxu0 0.0
      %2761 = vmatprep.subr.mxu0 0.0
      %2762 = vmatpush2.msra.mxu0 0.0
      %2763 = vmatprep.subr.mxu0 0.0
      %2764 = vmatpush2.msra.mxu0 0.0
      %2765 = vmatprep.subr.mxu0 0.0
      %2766 = vmatpush2.msra.mxu0 0.0
      %2767 = vmatprep.subr.mxu0 0.0
      %2768 = vmatpush2.msra.mxu0 0.0
      %2769 = vmatprep.subr.mxu0 0.0
      %2770 = vmatpush2.msra.mxu0 0.0
      %2771 = vmatprep.subr.mxu0 0.0
      %2772 = vmatpush2.msra.mxu0 0.0
      %2773 = vmatprep.subr.mxu0 0.0
      %2774 = vmatpush2.msra.mxu0 0.0
      %2775 = vmatprep.subr.mxu0 0.0
      %2776 = vmatpush2.msra.mxu0 0.0
      %2777 = vmatprep.subr.mxu0 0.0
      %2778 = vmatpush2.msra.mxu0 0.0
      %2779 = vmatprep.subr.mxu0 0.0
      %2780 = vmatpush2.msra.mxu0 0.0
      %2781 = vmatprep.subr.mxu0 0.0
      %2782 = vmatpush2.msra.mxu0 0.0
      %2783 = vmatprep.subr.mxu0 0.0
      %2784 = vmatpush2.msra.mxu0 0.0
      %2785 = vmatprep.mubr.f32.mxu0 0.0
      %v2786 = vand.u32 %v2565, 4294901760
      %v2787 = vsub.f32 %v2565, %v2786
      %2788 = vmatmul.mubr.f32.gmra.mxu0 %v2787
      %v2789 = vpop.f32.mrf.mxu0
      %v2790 = vadd.f32 %v2716, %v2789
      %v2791 = vpop.f32.mrf.mxu0
      %2792 = vdwg.mxu0
      %2793 = vmatprep.subr.mxu0 0.0
      %2794 = vmatpush1.msra.mxu0 0.0
      %2795 = vmatprep.subr.mxu0 0.0
      %2796 = vmatpush1.msra.mxu0 0.0
      %2797 = vmatprep.subr.mxu0 0.0
      %2798 = vmatpush1.msra.mxu0 0.0
      %2799 = vmatprep.subr.mxu0 0.0
      %2800 = vmatpush1.msra.mxu0 0.0
      %2801 = vmatprep.subr.mxu0 0.0
      %2802 = vmatpush1.msra.mxu0 0.0
      %2803 = vmatprep.subr.mxu0 0.0
      %2804 = vmatpush1.msra.mxu0 0.0
      %2805 = vmatprep.subr.mxu0 0.0
      %2806 = vmatpush1.msra.mxu0 0.0
      %2807 = vmatprep.subr.mxu0 0.0
      %2808 = vmatpush1.msra.mxu0 0.0
      %2809 = vmatprep.subr.mxu0 0.0
      %2810 = vmatpush1.msra.mxu0 0.0
      %2811 = vmatprep.subr.mxu0 0.0
      %2812 = vmatpush1.msra.mxu0 0.0
      %2813 = vmatprep.subr.mxu0 0.0
      %2814 = vmatpush1.msra.mxu0 0.0
      %2815 = vmatprep.subr.mxu0 0.0
      %2816 = vmatpush1.msra.mxu0 0.0
      %2817 = vmatprep.subr.mxu0 0.0
      %2818 = vmatpush1.msra.mxu0 0.0
      %2819 = vmatprep.subr.mxu0 0.0
      %2820 = vmatpush1.msra.mxu0 0.0
      %2821 = vmatprep.subr.mxu0 0.0
      %2822 = vmatpush1.msra.mxu0 0.0
      %2823 = vmatprep.subr.mxu0 0.0
      %v2824 = vand.u32 %v259, 4294901760
      %2825 = vmatpush1.msra.mxu0 %v2824
      %2826 = vmatprep.subr.mxu0 0.0
      %2827 = vmatpush2.msra.mxu0 0.0
      %2828 = vmatprep.subr.mxu0 0.0
      %2829 = vmatpush2.msra.mxu0 0.0
      %2830 = vmatprep.subr.mxu0 0.0
      %2831 = vmatpush2.msra.mxu0 0.0
      %2832 = vmatprep.subr.mxu0 0.0
      %2833 = vmatpush2.msra.mxu0 0.0
      %2834 = vmatprep.subr.mxu0 0.0
      %2835 = vmatpush2.msra.mxu0 0.0
      %2836 = vmatprep.subr.mxu0 0.0
      %2837 = vmatpush2.msra.mxu0 0.0
      %2838 = vmatprep.subr.mxu0 0.0
      %2839 = vmatpush2.msra.mxu0 0.0
      %2840 = vmatprep.subr.mxu0 0.0
      %2841 = vmatpush2.msra.mxu0 0.0
      %2842 = vmatprep.subr.mxu0 0.0
      %2843 = vmatpush2.msra.mxu0 0.0
      %2844 = vmatprep.subr.mxu0 0.0
      %2845 = vmatpush2.msra.mxu0 0.0
      %2846 = vmatprep.subr.mxu0 0.0
      %2847 = vmatpush2.msra.mxu0 0.0
      %2848 = vmatprep.subr.mxu0 0.0
      %2849 = vmatpush2.msra.mxu0 0.0
      %2850 = vmatprep.subr.mxu0 0.0
      %2851 = vmatpush2.msra.mxu0 0.0
      %2852 = vmatprep.subr.mxu0 0.0
      %2853 = vmatpush2.msra.mxu0 0.0
      %2854 = vmatprep.subr.mxu0 0.0
      %2855 = vmatpush2.msra.mxu0 0.0
      %2856 = vmatprep.subr.mxu0 0.0
      %2857 = vmatpush2.msra.mxu0 0.0
      %2858 = vmatprep.mubr.f32.mxu0 0.0
      %v2859 = vand.u32 %v2565, 4294901760
      %v2860 = vsub.f32 %v2565, %v2859
      %v2861 = vand.u32 %v2860, 4294901760
      %2862 = vmatmul.mubr.f32.gmra.mxu0 %v2861
      %v2863 = vpop.f32.mrf.mxu0
      %v2864 = vadd.f32 %v2790, %v2863
      %v2865 = vpop.f32.mrf.mxu0
      %2866 = vdwg.mxu0
      %2867 = vmatprep.subr.mxu0 0.0
      %2868 = vmatpush1.msra.mxu0 0.0
      %2869 = vmatprep.subr.mxu0 0.0
      %2870 = vmatpush1.msra.mxu0 0.0
      %2871 = vmatprep.subr.mxu0 0.0
      %2872 = vmatpush1.msra.mxu0 0.0
      %2873 = vmatprep.subr.mxu0 0.0
      %2874 = vmatpush1.msra.mxu0 0.0
      %2875 = vmatprep.subr.mxu0 0.0
      %2876 = vmatpush1.msra.mxu0 0.0
      %2877 = vmatprep.subr.mxu0 0.0
      %2878 = vmatpush1.msra.mxu0 0.0
      %2879 = vmatprep.subr.mxu0 0.0
      %2880 = vmatpush1.msra.mxu0 0.0
      %2881 = vmatprep.subr.mxu0 0.0
      %2882 = vmatpush1.msra.mxu0 0.0
      %2883 = vmatprep.subr.mxu0 0.0
      %2884 = vmatpush1.msra.mxu0 0.0
      %2885 = vmatprep.subr.mxu0 0.0
      %2886 = vmatpush1.msra.mxu0 0.0
      %2887 = vmatprep.subr.mxu0 0.0
      %2888 = vmatpush1.msra.mxu0 0.0
      %2889 = vmatprep.subr.mxu0 0.0
      %2890 = vmatpush1.msra.mxu0 0.0
      %2891 = vmatprep.subr.mxu0 0.0
      %2892 = vmatpush1.msra.mxu0 0.0
      %2893 = vmatprep.subr.mxu0 0.0
      %2894 = vmatpush1.msra.mxu0 0.0
      %2895 = vmatprep.subr.mxu0 0.0
      %2896 = vmatpush1.msra.mxu0 0.0
      %2897 = vmatprep.subr.mxu0 0.0
      %v2898 = vand.u32 %v259, 4294901760
      %v2899 = vsub.f32 %v259, %v2898
      %v2900 = vand.u32 %v2899, 4294901760
      %2901 = vmatpush1.msra.mxu0 %v2900
      %2902 = vmatprep.subr.mxu0 0.0
      %2903 = vmatpush2.msra.mxu0 0.0
      %2904 = vmatprep.subr.mxu0 0.0
      %2905 = vmatpush2.msra.mxu0 0.0
      %2906 = vmatprep.subr.mxu0 0.0
      %2907 = vmatpush2.msra.mxu0 0.0
      %2908 = vmatprep.subr.mxu0 0.0
      %2909 = vmatpush2.msra.mxu0 0.0
      %2910 = vmatprep.subr.mxu0 0.0
      %2911 = vmatpush2.msra.mxu0 0.0
      %2912 = vmatprep.subr.mxu0 0.0
      %2913 = vmatpush2.msra.mxu0 0.0
      %2914 = vmatprep.subr.mxu0 0.0
      %2915 = vmatpush2.msra.mxu0 0.0
      %2916 = vmatprep.subr.mxu0 0.0
      %2917 = vmatpush2.msra.mxu0 0.0
      %2918 = vmatprep.subr.mxu0 0.0
      %2919 = vmatpush2.msra.mxu0 0.0
      %2920 = vmatprep.subr.mxu0 0.0
      %2921 = vmatpush2.msra.mxu0 0.0
      %2922 = vmatprep.subr.mxu0 0.0
      %2923 = vmatpush2.msra.mxu0 0.0
      %2924 = vmatprep.subr.mxu0 0.0
      %2925 = vmatpush2.msra.mxu0 0.0
      %2926 = vmatprep.subr.mxu0 0.0
      %2927 = vmatpush2.msra.mxu0 0.0
      %2928 = vmatprep.subr.mxu0 0.0
      %2929 = vmatpush2.msra.mxu0 0.0
      %2930 = vmatprep.subr.mxu0 0.0
      %2931 = vmatpush2.msra.mxu0 0.0
      %2932 = vmatprep.subr.mxu0 0.0
      %2933 = vmatpush2.msra.mxu0 0.0
      %2934 = vmatprep.mubr.f32.mxu0 0.0
      %v2935 = vand.u32 %v2565, 4294901760
      %2936 = vmatmul.mubr.f32.gmra.mxu0 %v2935
      %v2937 = vpop.f32.mrf.mxu0
      %v2938 = vadd.f32 %v2864, %v2937
      %v2939 = vpop.f32.mrf.mxu0
      %2940 = vdwg.mxu0
      %2941 = vmatprep.subr.mxu0 0.0
      %2942 = vmatpush1.msra.mxu0 0.0
      %2943 = vmatprep.subr.mxu0 0.0
      %2944 = vmatpush1.msra.mxu0 0.0
      %2945 = vmatprep.subr.mxu0 0.0
      %2946 = vmatpush1.msra.mxu0 0.0
      %2947 = vmatprep.subr.mxu0 0.0
      %2948 = vmatpush1.msra.mxu0 0.0
      %2949 = vmatprep.subr.mxu0 0.0
      %2950 = vmatpush1.msra.mxu0 0.0
      %2951 = vmatprep.subr.mxu0 0.0
      %2952 = vmatpush1.msra.mxu0 0.0
      %2953 = vmatprep.subr.mxu0 0.0
      %2954 = vmatpush1.msra.mxu0 0.0
      %2955 = vmatprep.subr.mxu0 0.0
      %2956 = vmatpush1.msra.mxu0 0.0
      %2957 = vmatprep.subr.mxu0 0.0
      %2958 = vmatpush1.msra.mxu0 0.0
      %2959 = vmatprep.subr.mxu0 0.0
      %2960 = vmatpush1.msra.mxu0 0.0
      %2961 = vmatprep.subr.mxu0 0.0
      %2962 = vmatpush1.msra.mxu0 0.0
      %2963 = vmatprep.subr.mxu0 0.0
      %2964 = vmatpush1.msra.mxu0 0.0
      %2965 = vmatprep.subr.mxu0 0.0
      %2966 = vmatpush1.msra.mxu0 0.0
      %2967 = vmatprep.subr.mxu0 0.0
      %2968 = vmatpush1.msra.mxu0 0.0
      %2969 = vmatprep.subr.mxu0 0.0
      %2970 = vmatpush1.msra.mxu0 0.0
      %2971 = vmatprep.subr.mxu0 0.0
      %v2972 = vand.u32 %v259, 4294901760
      %2973 = vmatpush1.msra.mxu0 %v2972
      %2974 = vmatprep.subr.mxu0 0.0
      %2975 = vmatpush2.msra.mxu0 0.0
      %2976 = vmatprep.subr.mxu0 0.0
      %2977 = vmatpush2.msra.mxu0 0.0
      %2978 = vmatprep.subr.mxu0 0.0
      %2979 = vmatpush2.msra.mxu0 0.0
      %2980 = vmatprep.subr.mxu0 0.0
      %2981 = vmatpush2.msra.mxu0 0.0
      %2982 = vmatprep.subr.mxu0 0.0
      %2983 = vmatpush2.msra.mxu0 0.0
      %2984 = vmatprep.subr.mxu0 0.0
      %2985 = vmatpush2.msra.mxu0 0.0
      %2986 = vmatprep.subr.mxu0 0.0
      %2987 = vmatpush2.msra.mxu0 0.0
      %2988 = vmatprep.subr.mxu0 0.0
      %2989 = vmatpush2.msra.mxu0 0.0
      %2990 = vmatprep.subr.mxu0 0.0
      %2991 = vmatpush2.msra.mxu0 0.0
      %2992 = vmatprep.subr.mxu0 0.0
      %2993 = vmatpush2.msra.mxu0 0.0
      %2994 = vmatprep.subr.mxu0 0.0
      %2995 = vmatpush2.msra.mxu0 0.0
      %2996 = vmatprep.subr.mxu0 0.0
      %2997 = vmatpush2.msra.mxu0 0.0
      %2998 = vmatprep.subr.mxu0 0.0
      %2999 = vmatpush2.msra.mxu0 0.0
      %3000 = vmatprep.subr.mxu0 0.0
      %3001 = vmatpush2.msra.mxu0 0.0
      %3002 = vmatprep.subr.mxu0 0.0
      %3003 = vmatpush2.msra.mxu0 0.0
      %3004 = vmatprep.subr.mxu0 0.0
      %3005 = vmatpush2.msra.mxu0 0.0
      %3006 = vmatprep.mubr.f32.mxu0 0.0
      %v3007 = vand.u32 %v2565, 4294901760
      %3008 = vmatmul.mubr.f32.gmra.mxu0 %v3007
      %v3009 = vpop.f32.mrf.mxu0
      %v3010 = vadd.f32 %v2938, %v3009
      %v3011 = vpop.f32.mrf.mxu0
      %3012 = vdwg.mxu0
      %v3014 = vsel %vm318, %v252, 0
      %3016 = vmatprep.subr.mxu0 0.0
      %3017 = vmatpush1.msra.mxu0 0.0
      %3018 = vmatprep.subr.mxu0 0.0
      %3019 = vmatpush1.msra.mxu0 0.0
      %3020 = vmatprep.subr.mxu0 0.0
      %3021 = vmatpush1.msra.mxu0 0.0
      %3022 = vmatprep.subr.mxu0 0.0
      %3023 = vmatpush1.msra.mxu0 0.0
      %3024 = vmatprep.subr.mxu0 0.0
      %3025 = vmatpush1.msra.mxu0 0.0
      %3026 = vmatprep.subr.mxu0 0.0
      %3027 = vmatpush1.msra.mxu0 0.0
      %3028 = vmatprep.subr.mxu0 0.0
      %3029 = vmatpush1.msra.mxu0 0.0
      %3030 = vmatprep.subr.mxu0 0.0
      %3031 = vmatpush1.msra.mxu0 0.0
      %3032 = vmatprep.subr.mxu0 0.0
      %3033 = vmatpush1.msra.mxu0 0.0
      %3034 = vmatprep.subr.mxu0 0.0
      %3035 = vmatpush1.msra.mxu0 0.0
      %3036 = vmatprep.subr.mxu0 0.0
      %3037 = vmatpush1.msra.mxu0 0.0
      %3038 = vmatprep.subr.mxu0 0.0
      %3039 = vmatpush1.msra.mxu0 0.0
      %3040 = vmatprep.subr.mxu0 0.0
      %3041 = vmatpush1.msra.mxu0 0.0
      %3042 = vmatprep.subr.mxu0 0.0
      %3043 = vmatpush1.msra.mxu0 0.0
      %3044 = vmatprep.subr.mxu0 0.0
      %3045 = vmatpush1.msra.mxu0 0.0
      %3046 = vmatprep.subr.mxu0 0.0
      %v3047 = vand.u32 %v260, 4294901760
      %3048 = vmatpush1.msra.mxu0 %v3047
      %3049 = vmatprep.subr.mxu0 0.0
      %3050 = vmatpush2.msra.mxu0 0.0
      %3051 = vmatprep.subr.mxu0 0.0
      %3052 = vmatpush2.msra.mxu0 0.0
      %3053 = vmatprep.subr.mxu0 0.0
      %3054 = vmatpush2.msra.mxu0 0.0
      %3055 = vmatprep.subr.mxu0 0.0
      %3056 = vmatpush2.msra.mxu0 0.0
      %3057 = vmatprep.subr.mxu0 0.0
      %3058 = vmatpush2.msra.mxu0 0.0
      %3059 = vmatprep.subr.mxu0 0.0
      %3060 = vmatpush2.msra.mxu0 0.0
      %3061 = vmatprep.subr.mxu0 0.0
      %3062 = vmatpush2.msra.mxu0 0.0
      %3063 = vmatprep.subr.mxu0 0.0
      %3064 = vmatpush2.msra.mxu0 0.0
      %3065 = vmatprep.subr.mxu0 0.0
      %3066 = vmatpush2.msra.mxu0 0.0
      %3067 = vmatprep.subr.mxu0 0.0
      %3068 = vmatpush2.msra.mxu0 0.0
      %3069 = vmatprep.subr.mxu0 0.0
      %3070 = vmatpush2.msra.mxu0 0.0
      %3071 = vmatprep.subr.mxu0 0.0
      %3072 = vmatpush2.msra.mxu0 0.0
      %3073 = vmatprep.subr.mxu0 0.0
      %3074 = vmatpush2.msra.mxu0 0.0
      %3075 = vmatprep.subr.mxu0 0.0
      %3076 = vmatpush2.msra.mxu0 0.0
      %3077 = vmatprep.subr.mxu0 0.0
      %3078 = vmatpush2.msra.mxu0 0.0
      %3079 = vmatprep.subr.mxu0 0.0
      %3080 = vmatpush2.msra.mxu0 0.0
      %3081 = vmatprep.mubr.f32.mxu0 0.0
      %v3082 = vand.u32 %v3014, 4294901760
      %v3083 = vsub.f32 %v3014, %v3082
      %v3084 = vand.u32 %v3083, 4294901760
      %v3085 = vsub.f32 %v3083, %v3084
      %v3086 = vand.u32 %v3085, 4294901760
      %3087 = vmatmul.mubr.f32.gmra.mxu0 %v3086
      %v3088 = vpop.f32.mrf.mxu0
      %v3089 = vadd.f32 %v305, %v3088
      %v3090 = vpop.f32.mrf.mxu0
      %3091 = vdwg.mxu0
      %3092 = vmatprep.subr.mxu0 0.0
      %3093 = vmatpush1.msra.mxu0 0.0
      %3094 = vmatprep.subr.mxu0 0.0
      %3095 = vmatpush1.msra.mxu0 0.0
      %3096 = vmatprep.subr.mxu0 0.0
      %3097 = vmatpush1.msra.mxu0 0.0
      %3098 = vmatprep.subr.mxu0 0.0
      %3099 = vmatpush1.msra.mxu0 0.0
      %3100 = vmatprep.subr.mxu0 0.0
      %3101 = vmatpush1.msra.mxu0 0.0
      %3102 = vmatprep.subr.mxu0 0.0
      %3103 = vmatpush1.msra.mxu0 0.0
      %3104 = vmatprep.subr.mxu0 0.0
      %3105 = vmatpush1.msra.mxu0 0.0
      %3106 = vmatprep.subr.mxu0 0.0
      %3107 = vmatpush1.msra.mxu0 0.0
      %3108 = vmatprep.subr.mxu0 0.0
      %3109 = vmatpush1.msra.mxu0 0.0
      %3110 = vmatprep.subr.mxu0 0.0
      %3111 = vmatpush1.msra.mxu0 0.0
      %3112 = vmatprep.subr.mxu0 0.0
      %3113 = vmatpush1.msra.mxu0 0.0
      %3114 = vmatprep.subr.mxu0 0.0
      %3115 = vmatpush1.msra.mxu0 0.0
      %3116 = vmatprep.subr.mxu0 0.0
      %3117 = vmatpush1.msra.mxu0 0.0
      %3118 = vmatprep.subr.mxu0 0.0
      %3119 = vmatpush1.msra.mxu0 0.0
      %3120 = vmatprep.subr.mxu0 0.0
      %3121 = vmatpush1.msra.mxu0 0.0
      %3122 = vmatprep.subr.mxu0 0.0
      %v3123 = vand.u32 %v260, 4294901760
      %v3124 = vsub.f32 %v260, %v3123
      %v3125 = vand.u32 %v3124, 4294901760
      %v3126 = vsub.f32 %v3124, %v3125
      %v3127 = vand.u32 %v3126, 4294901760
      %3128 = vmatpush1.msra.mxu0 %v3127
      %3129 = vmatprep.subr.mxu0 0.0
      %3130 = vmatpush2.msra.mxu0 0.0
      %3131 = vmatprep.subr.mxu0 0.0
      %3132 = vmatpush2.msra.mxu0 0.0
      %3133 = vmatprep.subr.mxu0 0.0
      %3134 = vmatpush2.msra.mxu0 0.0
      %3135 = vmatprep.subr.mxu0 0.0
      %3136 = vmatpush2.msra.mxu0 0.0
      %3137 = vmatprep.subr.mxu0 0.0
      %3138 = vmatpush2.msra.mxu0 0.0
      %3139 = vmatprep.subr.mxu0 0.0
      %3140 = vmatpush2.msra.mxu0 0.0
      %3141 = vmatprep.subr.mxu0 0.0
      %3142 = vmatpush2.msra.mxu0 0.0
      %3143 = vmatprep.subr.mxu0 0.0
      %3144 = vmatpush2.msra.mxu0 0.0
      %3145 = vmatprep.subr.mxu0 0.0
      %3146 = vmatpush2.msra.mxu0 0.0
      %3147 = vmatprep.subr.mxu0 0.0
      %3148 = vmatpush2.msra.mxu0 0.0
      %3149 = vmatprep.subr.mxu0 0.0
      %3150 = vmatpush2.msra.mxu0 0.0
      %3151 = vmatprep.subr.mxu0 0.0
      %3152 = vmatpush2.msra.mxu0 0.0
      %3153 = vmatprep.subr.mxu0 0.0
      %3154 = vmatpush2.msra.mxu0 0.0
      %3155 = vmatprep.subr.mxu0 0.0
      %3156 = vmatpush2.msra.mxu0 0.0
      %3157 = vmatprep.subr.mxu0 0.0
      %3158 = vmatpush2.msra.mxu0 0.0
      %3159 = vmatprep.subr.mxu0 0.0
      %3160 = vmatpush2.msra.mxu0 0.0
      %3161 = vmatprep.mubr.f32.mxu0 0.0
      %v3162 = vand.u32 %v3014, 4294901760
      %3163 = vmatmul.mubr.f32.gmra.mxu0 %v3162
      %v3164 = vpop.f32.mrf.mxu0
      %v3165 = vadd.f32 %v3089, %v3164
      %v3166 = vpop.f32.mrf.mxu0
      %3167 = vdwg.mxu0
      %3168 = vmatprep.subr.mxu0 0.0
      %3169 = vmatpush1.msra.mxu0 0.0
      %3170 = vmatprep.subr.mxu0 0.0
      %3171 = vmatpush1.msra.mxu0 0.0
      %3172 = vmatprep.subr.mxu0 0.0
      %3173 = vmatpush1.msra.mxu0 0.0
      %3174 = vmatprep.subr.mxu0 0.0
      %3175 = vmatpush1.msra.mxu0 0.0
      %3176 = vmatprep.subr.mxu0 0.0
      %3177 = vmatpush1.msra.mxu0 0.0
      %3178 = vmatprep.subr.mxu0 0.0
      %3179 = vmatpush1.msra.mxu0 0.0
      %3180 = vmatprep.subr.mxu0 0.0
      %3181 = vmatpush1.msra.mxu0 0.0
      %3182 = vmatprep.subr.mxu0 0.0
      %3183 = vmatpush1.msra.mxu0 0.0
      %3184 = vmatprep.subr.mxu0 0.0
      %3185 = vmatpush1.msra.mxu0 0.0
      %3186 = vmatprep.subr.mxu0 0.0
      %3187 = vmatpush1.msra.mxu0 0.0
      %3188 = vmatprep.subr.mxu0 0.0
      %3189 = vmatpush1.msra.mxu0 0.0
      %3190 = vmatprep.subr.mxu0 0.0
      %3191 = vmatpush1.msra.mxu0 0.0
      %3192 = vmatprep.subr.mxu0 0.0
      %3193 = vmatpush1.msra.mxu0 0.0
      %3194 = vmatprep.subr.mxu0 0.0
      %3195 = vmatpush1.msra.mxu0 0.0
      %3196 = vmatprep.subr.mxu0 0.0
      %3197 = vmatpush1.msra.mxu0 0.0
      %3198 = vmatprep.subr.mxu0 0.0
      %v3199 = vand.u32 %v260, 4294901760
      %v3200 = vsub.f32 %v260, %v3199
      %3201 = vmatpush1.msra.mxu0 %v3200
      %3202 = vmatprep.subr.mxu0 0.0
      %3203 = vmatpush2.msra.mxu0 0.0
      %3204 = vmatprep.subr.mxu0 0.0
      %3205 = vmatpush2.msra.mxu0 0.0
      %3206 = vmatprep.subr.mxu0 0.0
      %3207 = vmatpush2.msra.mxu0 0.0
      %3208 = vmatprep.subr.mxu0 0.0
      %3209 = vmatpush2.msra.mxu0 0.0
      %3210 = vmatprep.subr.mxu0 0.0
      %3211 = vmatpush2.msra.mxu0 0.0
      %3212 = vmatprep.subr.mxu0 0.0
      %3213 = vmatpush2.msra.mxu0 0.0
      %3214 = vmatprep.subr.mxu0 0.0
      %3215 = vmatpush2.msra.mxu0 0.0
      %3216 = vmatprep.subr.mxu0 0.0
      %3217 = vmatpush2.msra.mxu0 0.0
      %3218 = vmatprep.subr.mxu0 0.0
      %3219 = vmatpush2.msra.mxu0 0.0
      %3220 = vmatprep.subr.mxu0 0.0
      %3221 = vmatpush2.msra.mxu0 0.0
      %3222 = vmatprep.subr.mxu0 0.0
      %3223 = vmatpush2.msra.mxu0 0.0
      %3224 = vmatprep.subr.mxu0 0.0
      %3225 = vmatpush2.msra.mxu0 0.0
      %3226 = vmatprep.subr.mxu0 0.0
      %3227 = vmatpush2.msra.mxu0 0.0
      %3228 = vmatprep.subr.mxu0 0.0
      %3229 = vmatpush2.msra.mxu0 0.0
      %3230 = vmatprep.subr.mxu0 0.0
      %3231 = vmatpush2.msra.mxu0 0.0
      %3232 = vmatprep.subr.mxu0 0.0
      %3233 = vmatpush2.msra.mxu0 0.0
      %3234 = vmatprep.mubr.f32.mxu0 0.0
      %v3235 = vand.u32 %v3014, 4294901760
      %v3236 = vsub.f32 %v3014, %v3235
      %3237 = vmatmul.mubr.f32.gmra.mxu0 %v3236
      %v3238 = vpop.f32.mrf.mxu0
      %v3239 = vadd.f32 %v3165, %v3238
      %v3240 = vpop.f32.mrf.mxu0
      %3241 = vdwg.mxu0
      %3242 = vmatprep.subr.mxu0 0.0
      %3243 = vmatpush1.msra.mxu0 0.0
      %3244 = vmatprep.subr.mxu0 0.0
      %3245 = vmatpush1.msra.mxu0 0.0
      %3246 = vmatprep.subr.mxu0 0.0
      %3247 = vmatpush1.msra.mxu0 0.0
      %3248 = vmatprep.subr.mxu0 0.0
      %3249 = vmatpush1.msra.mxu0 0.0
      %3250 = vmatprep.subr.mxu0 0.0
      %3251 = vmatpush1.msra.mxu0 0.0
      %3252 = vmatprep.subr.mxu0 0.0
      %3253 = vmatpush1.msra.mxu0 0.0
      %3254 = vmatprep.subr.mxu0 0.0
      %3255 = vmatpush1.msra.mxu0 0.0
      %3256 = vmatprep.subr.mxu0 0.0
      %3257 = vmatpush1.msra.mxu0 0.0
      %3258 = vmatprep.subr.mxu0 0.0
      %3259 = vmatpush1.msra.mxu0 0.0
      %3260 = vmatprep.subr.mxu0 0.0
      %3261 = vmatpush1.msra.mxu0 0.0
      %3262 = vmatprep.subr.mxu0 0.0
      %3263 = vmatpush1.msra.mxu0 0.0
      %3264 = vmatprep.subr.mxu0 0.0
      %3265 = vmatpush1.msra.mxu0 0.0
      %3266 = vmatprep.subr.mxu0 0.0
      %3267 = vmatpush1.msra.mxu0 0.0
      %3268 = vmatprep.subr.mxu0 0.0
      %3269 = vmatpush1.msra.mxu0 0.0
      %3270 = vmatprep.subr.mxu0 0.0
      %3271 = vmatpush1.msra.mxu0 0.0
      %3272 = vmatprep.subr.mxu0 0.0
      %v3273 = vand.u32 %v260, 4294901760
      %3274 = vmatpush1.msra.mxu0 %v3273
      %3275 = vmatprep.subr.mxu0 0.0
      %3276 = vmatpush2.msra.mxu0 0.0
      %3277 = vmatprep.subr.mxu0 0.0
      %3278 = vmatpush2.msra.mxu0 0.0
      %3279 = vmatprep.subr.mxu0 0.0
      %3280 = vmatpush2.msra.mxu0 0.0
      %3281 = vmatprep.subr.mxu0 0.0
      %3282 = vmatpush2.msra.mxu0 0.0
      %3283 = vmatprep.subr.mxu0 0.0
      %3284 = vmatpush2.msra.mxu0 0.0
      %3285 = vmatprep.subr.mxu0 0.0
      %3286 = vmatpush2.msra.mxu0 0.0
      %3287 = vmatprep.subr.mxu0 0.0
      %3288 = vmatpush2.msra.mxu0 0.0
      %3289 = vmatprep.subr.mxu0 0.0
      %3290 = vmatpush2.msra.mxu0 0.0
      %3291 = vmatprep.subr.mxu0 0.0
      %3292 = vmatpush2.msra.mxu0 0.0
      %3293 = vmatprep.subr.mxu0 0.0
      %3294 = vmatpush2.msra.mxu0 0.0
      %3295 = vmatprep.subr.mxu0 0.0
      %3296 = vmatpush2.msra.mxu0 0.0
      %3297 = vmatprep.subr.mxu0 0.0
      %3298 = vmatpush2.msra.mxu0 0.0
      %3299 = vmatprep.subr.mxu0 0.0
      %3300 = vmatpush2.msra.mxu0 0.0
      %3301 = vmatprep.subr.mxu0 0.0
      %3302 = vmatpush2.msra.mxu0 0.0
      %3303 = vmatprep.subr.mxu0 0.0
      %3304 = vmatpush2.msra.mxu0 0.0
      %3305 = vmatprep.subr.mxu0 0.0
      %3306 = vmatpush2.msra.mxu0 0.0
      %3307 = vmatprep.mubr.f32.mxu0 0.0
      %v3308 = vand.u32 %v3014, 4294901760
      %v3309 = vsub.f32 %v3014, %v3308
      %v3310 = vand.u32 %v3309, 4294901760
      %3311 = vmatmul.mubr.f32.gmra.mxu0 %v3310
      %v3312 = vpop.f32.mrf.mxu0
      %v3313 = vadd.f32 %v3239, %v3312
      %v3314 = vpop.f32.mrf.mxu0
      %3315 = vdwg.mxu0
      %3316 = vmatprep.subr.mxu0 0.0
      %3317 = vmatpush1.msra.mxu0 0.0
      %3318 = vmatprep.subr.mxu0 0.0
      %3319 = vmatpush1.msra.mxu0 0.0
      %3320 = vmatprep.subr.mxu0 0.0
      %3321 = vmatpush1.msra.mxu0 0.0
      %3322 = vmatprep.subr.mxu0 0.0
      %3323 = vmatpush1.msra.mxu0 0.0
      %3324 = vmatprep.subr.mxu0 0.0
      %3325 = vmatpush1.msra.mxu0 0.0
      %3326 = vmatprep.subr.mxu0 0.0
      %3327 = vmatpush1.msra.mxu0 0.0
      %3328 = vmatprep.subr.mxu0 0.0
      %3329 = vmatpush1.msra.mxu0 0.0
      %3330 = vmatprep.subr.mxu0 0.0
      %3331 = vmatpush1.msra.mxu0 0.0
      %3332 = vmatprep.subr.mxu0 0.0
      %3333 = vmatpush1.msra.mxu0 0.0
      %3334 = vmatprep.subr.mxu0 0.0
      %3335 = vmatpush1.msra.mxu0 0.0
      %3336 = vmatprep.subr.mxu0 0.0
      %3337 = vmatpush1.msra.mxu0 0.0
      %3338 = vmatprep.subr.mxu0 0.0
      %3339 = vmatpush1.msra.mxu0 0.0
      %3340 = vmatprep.subr.mxu0 0.0
      %3341 = vmatpush1.msra.mxu0 0.0
      %3342 = vmatprep.subr.mxu0 0.0
      %3343 = vmatpush1.msra.mxu0 0.0
      %3344 = vmatprep.subr.mxu0 0.0
      %3345 = vmatpush1.msra.mxu0 0.0
      %3346 = vmatprep.subr.mxu0 0.0
      %v3347 = vand.u32 %v260, 4294901760
      %v3348 = vsub.f32 %v260, %v3347
      %v3349 = vand.u32 %v3348, 4294901760
      %3350 = vmatpush1.msra.mxu0 %v3349
      %3351 = vmatprep.subr.mxu0 0.0
      %3352 = vmatpush2.msra.mxu0 0.0
      %3353 = vmatprep.subr.mxu0 0.0
      %3354 = vmatpush2.msra.mxu0 0.0
      %3355 = vmatprep.subr.mxu0 0.0
      %3356 = vmatpush2.msra.mxu0 0.0
      %3357 = vmatprep.subr.mxu0 0.0
      %3358 = vmatpush2.msra.mxu0 0.0
      %3359 = vmatprep.subr.mxu0 0.0
      %3360 = vmatpush2.msra.mxu0 0.0
      %3361 = vmatprep.subr.mxu0 0.0
      %3362 = vmatpush2.msra.mxu0 0.0
      %3363 = vmatprep.subr.mxu0 0.0
      %3364 = vmatpush2.msra.mxu0 0.0
      %3365 = vmatprep.subr.mxu0 0.0
      %3366 = vmatpush2.msra.mxu0 0.0
      %3367 = vmatprep.subr.mxu0 0.0
      %3368 = vmatpush2.msra.mxu0 0.0
      %3369 = vmatprep.subr.mxu0 0.0
      %3370 = vmatpush2.msra.mxu0 0.0
      %3371 = vmatprep.subr.mxu0 0.0
      %3372 = vmatpush2.msra.mxu0 0.0
      %3373 = vmatprep.subr.mxu0 0.0
      %3374 = vmatpush2.msra.mxu0 0.0
      %3375 = vmatprep.subr.mxu0 0.0
      %3376 = vmatpush2.msra.mxu0 0.0
      %3377 = vmatprep.subr.mxu0 0.0
      %3378 = vmatpush2.msra.mxu0 0.0
      %3379 = vmatprep.subr.mxu0 0.0
      %3380 = vmatpush2.msra.mxu0 0.0
      %3381 = vmatprep.subr.mxu0 0.0
      %3382 = vmatpush2.msra.mxu0 0.0
      %3383 = vmatprep.mubr.f32.mxu0 0.0
      %v3384 = vand.u32 %v3014, 4294901760
      %3385 = vmatmul.mubr.f32.gmra.mxu0 %v3384
      %v3386 = vpop.f32.mrf.mxu0
      %v3387 = vadd.f32 %v3313, %v3386
      %v3388 = vpop.f32.mrf.mxu0
      %3389 = vdwg.mxu0
      %3390 = vmatprep.subr.mxu0 0.0
      %3391 = vmatpush1.msra.mxu0 0.0
      %3392 = vmatprep.subr.mxu0 0.0
      %3393 = vmatpush1.msra.mxu0 0.0
      %3394 = vmatprep.subr.mxu0 0.0
      %3395 = vmatpush1.msra.mxu0 0.0
      %3396 = vmatprep.subr.mxu0 0.0
      %3397 = vmatpush1.msra.mxu0 0.0
      %3398 = vmatprep.subr.mxu0 0.0
      %3399 = vmatpush1.msra.mxu0 0.0
      %3400 = vmatprep.subr.mxu0 0.0
      %3401 = vmatpush1.msra.mxu0 0.0
      %3402 = vmatprep.subr.mxu0 0.0
      %3403 = vmatpush1.msra.mxu0 0.0
      %3404 = vmatprep.subr.mxu0 0.0
      %3405 = vmatpush1.msra.mxu0 0.0
      %3406 = vmatprep.subr.mxu0 0.0
      %3407 = vmatpush1.msra.mxu0 0.0
      %3408 = vmatprep.subr.mxu0 0.0
      %3409 = vmatpush1.msra.mxu0 0.0
      %3410 = vmatprep.subr.mxu0 0.0
      %3411 = vmatpush1.msra.mxu0 0.0
      %3412 = vmatprep.subr.mxu0 0.0
      %3413 = vmatpush1.msra.mxu0 0.0
      %3414 = vmatprep.subr.mxu0 0.0
      %3415 = vmatpush1.msra.mxu0 0.0
      %3416 = vmatprep.subr.mxu0 0.0
      %3417 = vmatpush1.msra.mxu0 0.0
      %3418 = vmatprep.subr.mxu0 0.0
      %3419 = vmatpush1.msra.mxu0 0.0
      %3420 = vmatprep.subr.mxu0 0.0
      %v3421 = vand.u32 %v260, 4294901760
      %3422 = vmatpush1.msra.mxu0 %v3421
      %3423 = vmatprep.subr.mxu0 0.0
      %3424 = vmatpush2.msra.mxu0 0.0
      %3425 = vmatprep.subr.mxu0 0.0
      %3426 = vmatpush2.msra.mxu0 0.0
      %3427 = vmatprep.subr.mxu0 0.0
      %3428 = vmatpush2.msra.mxu0 0.0
      %3429 = vmatprep.subr.mxu0 0.0
      %3430 = vmatpush2.msra.mxu0 0.0
      %3431 = vmatprep.subr.mxu0 0.0
      %3432 = vmatpush2.msra.mxu0 0.0
      %3433 = vmatprep.subr.mxu0 0.0
      %3434 = vmatpush2.msra.mxu0 0.0
      %3435 = vmatprep.subr.mxu0 0.0
      %3436 = vmatpush2.msra.mxu0 0.0
      %3437 = vmatprep.subr.mxu0 0.0
      %3438 = vmatpush2.msra.mxu0 0.0
      %3439 = vmatprep.subr.mxu0 0.0
      %3440 = vmatpush2.msra.mxu0 0.0
      %3441 = vmatprep.subr.mxu0 0.0
      %3442 = vmatpush2.msra.mxu0 0.0
      %3443 = vmatprep.subr.mxu0 0.0
      %3444 = vmatpush2.msra.mxu0 0.0
      %3445 = vmatprep.subr.mxu0 0.0
      %3446 = vmatpush2.msra.mxu0 0.0
      %3447 = vmatprep.subr.mxu0 0.0
      %3448 = vmatpush2.msra.mxu0 0.0
      %3449 = vmatprep.subr.mxu0 0.0
      %3450 = vmatpush2.msra.mxu0 0.0
      %3451 = vmatprep.subr.mxu0 0.0
      %3452 = vmatpush2.msra.mxu0 0.0
      %3453 = vmatprep.subr.mxu0 0.0
      %3454 = vmatpush2.msra.mxu0 0.0
      %3455 = vmatprep.mubr.f32.mxu0 0.0
      %v3456 = vand.u32 %v3014, 4294901760
      %3457 = vmatmul.mubr.f32.gmra.mxu0 %v3456
      %v3458 = vpop.f32.mrf.mxu0
      %v3459 = vadd.f32 %v3387, %v3458
      %v3460 = vpop.f32.mrf.mxu0
      %3461 = vdwg.mxu0
      %v3463 = vsel %vm318, %v253, 0
      %3465 = vmatprep.subr.mxu0 0.0
      %3466 = vmatpush1.msra.mxu0 0.0
      %3467 = vmatprep.subr.mxu0 0.0
      %3468 = vmatpush1.msra.mxu0 0.0
      %3469 = vmatprep.subr.mxu0 0.0
      %3470 = vmatpush1.msra.mxu0 0.0
      %3471 = vmatprep.subr.mxu0 0.0
      %3472 = vmatpush1.msra.mxu0 0.0
      %3473 = vmatprep.subr.mxu0 0.0
      %3474 = vmatpush1.msra.mxu0 0.0
      %3475 = vmatprep.subr.mxu0 0.0
      %3476 = vmatpush1.msra.mxu0 0.0
      %3477 = vmatprep.subr.mxu0 0.0
      %3478 = vmatpush1.msra.mxu0 0.0
      %3479 = vmatprep.subr.mxu0 0.0
      %3480 = vmatpush1.msra.mxu0 0.0
      %3481 = vmatprep.subr.mxu0 0.0
      %3482 = vmatpush1.msra.mxu0 0.0
      %3483 = vmatprep.subr.mxu0 0.0
      %3484 = vmatpush1.msra.mxu0 0.0
      %3485 = vmatprep.subr.mxu0 0.0
      %3486 = vmatpush1.msra.mxu0 0.0
      %3487 = vmatprep.subr.mxu0 0.0
      %3488 = vmatpush1.msra.mxu0 0.0
      %3489 = vmatprep.subr.mxu0 0.0
      %3490 = vmatpush1.msra.mxu0 0.0
      %3491 = vmatprep.subr.mxu0 0.0
      %3492 = vmatpush1.msra.mxu0 0.0
      %3493 = vmatprep.subr.mxu0 0.0
      %3494 = vmatpush1.msra.mxu0 0.0
      %3495 = vmatprep.subr.mxu0 0.0
      %v3496 = vand.u32 %v261, 4294901760
      %3497 = vmatpush1.msra.mxu0 %v3496
      %3498 = vmatprep.subr.mxu0 0.0
      %3499 = vmatpush2.msra.mxu0 0.0
      %3500 = vmatprep.subr.mxu0 0.0
      %3501 = vmatpush2.msra.mxu0 0.0
      %3502 = vmatprep.subr.mxu0 0.0
      %3503 = vmatpush2.msra.mxu0 0.0
      %3504 = vmatprep.subr.mxu0 0.0
      %3505 = vmatpush2.msra.mxu0 0.0
      %3506 = vmatprep.subr.mxu0 0.0
      %3507 = vmatpush2.msra.mxu0 0.0
      %3508 = vmatprep.subr.mxu0 0.0
      %3509 = vmatpush2.msra.mxu0 0.0
      %3510 = vmatprep.subr.mxu0 0.0
      %3511 = vmatpush2.msra.mxu0 0.0
      %3512 = vmatprep.subr.mxu0 0.0
      %3513 = vmatpush2.msra.mxu0 0.0
      %3514 = vmatprep.subr.mxu0 0.0
      %3515 = vmatpush2.msra.mxu0 0.0
      %3516 = vmatprep.subr.mxu0 0.0
      %3517 = vmatpush2.msra.mxu0 0.0
      %3518 = vmatprep.subr.mxu0 0.0
      %3519 = vmatpush2.msra.mxu0 0.0
      %3520 = vmatprep.subr.mxu0 0.0
      %3521 = vmatpush2.msra.mxu0 0.0
      %3522 = vmatprep.subr.mxu0 0.0
      %3523 = vmatpush2.msra.mxu0 0.0
      %3524 = vmatprep.subr.mxu0 0.0
      %3525 = vmatpush2.msra.mxu0 0.0
      %3526 = vmatprep.subr.mxu0 0.0
      %3527 = vmatpush2.msra.mxu0 0.0
      %3528 = vmatprep.subr.mxu0 0.0
      %3529 = vmatpush2.msra.mxu0 0.0
      %3530 = vmatprep.mubr.f32.mxu0 0.0
      %v3531 = vand.u32 %v3463, 4294901760
      %v3532 = vsub.f32 %v3463, %v3531
      %v3533 = vand.u32 %v3532, 4294901760
      %v3534 = vsub.f32 %v3532, %v3533
      %v3535 = vand.u32 %v3534, 4294901760
      %3536 = vmatmul.mubr.f32.gmra.mxu0 %v3535
      %v3537 = vpop.f32.mrf.mxu0
      %v3538 = vadd.f32 %v309, %v3537
      %v3539 = vpop.f32.mrf.mxu0
      %3540 = vdwg.mxu0
      %3541 = vmatprep.subr.mxu0 0.0
      %3542 = vmatpush1.msra.mxu0 0.0
      %3543 = vmatprep.subr.mxu0 0.0
      %3544 = vmatpush1.msra.mxu0 0.0
      %3545 = vmatprep.subr.mxu0 0.0
      %3546 = vmatpush1.msra.mxu0 0.0
      %3547 = vmatprep.subr.mxu0 0.0
      %3548 = vmatpush1.msra.mxu0 0.0
      %3549 = vmatprep.subr.mxu0 0.0
      %3550 = vmatpush1.msra.mxu0 0.0
      %3551 = vmatprep.subr.mxu0 0.0
      %3552 = vmatpush1.msra.mxu0 0.0
      %3553 = vmatprep.subr.mxu0 0.0
      %3554 = vmatpush1.msra.mxu0 0.0
      %3555 = vmatprep.subr.mxu0 0.0
      %3556 = vmatpush1.msra.mxu0 0.0
      %3557 = vmatprep.subr.mxu0 0.0
      %3558 = vmatpush1.msra.mxu0 0.0
      %3559 = vmatprep.subr.mxu0 0.0
      %3560 = vmatpush1.msra.mxu0 0.0
      %3561 = vmatprep.subr.mxu0 0.0
      %3562 = vmatpush1.msra.mxu0 0.0
      %3563 = vmatprep.subr.mxu0 0.0
      %3564 = vmatpush1.msra.mxu0 0.0
      %3565 = vmatprep.subr.mxu0 0.0
      %3566 = vmatpush1.msra.mxu0 0.0
      %3567 = vmatprep.subr.mxu0 0.0
      %3568 = vmatpush1.msra.mxu0 0.0
      %3569 = vmatprep.subr.mxu0 0.0
      %3570 = vmatpush1.msra.mxu0 0.0
      %3571 = vmatprep.subr.mxu0 0.0
      %v3572 = vand.u32 %v261, 4294901760
      %v3573 = vsub.f32 %v261, %v3572
      %v3574 = vand.u32 %v3573, 4294901760
      %v3575 = vsub.f32 %v3573, %v3574
      %v3576 = vand.u32 %v3575, 4294901760
      %3577 = vmatpush1.msra.mxu0 %v3576
      %3578 = vmatprep.subr.mxu0 0.0
      %3579 = vmatpush2.msra.mxu0 0.0
      %3580 = vmatprep.subr.mxu0 0.0
      %3581 = vmatpush2.msra.mxu0 0.0
      %3582 = vmatprep.subr.mxu0 0.0
      %3583 = vmatpush2.msra.mxu0 0.0
      %3584 = vmatprep.subr.mxu0 0.0
      %3585 = vmatpush2.msra.mxu0 0.0
      %3586 = vmatprep.subr.mxu0 0.0
      %3587 = vmatpush2.msra.mxu0 0.0
      %3588 = vmatprep.subr.mxu0 0.0
      %3589 = vmatpush2.msra.mxu0 0.0
      %3590 = vmatprep.subr.mxu0 0.0
      %3591 = vmatpush2.msra.mxu0 0.0
      %3592 = vmatprep.subr.mxu0 0.0
      %3593 = vmatpush2.msra.mxu0 0.0
      %3594 = vmatprep.subr.mxu0 0.0
      %3595 = vmatpush2.msra.mxu0 0.0
      %3596 = vmatprep.subr.mxu0 0.0
      %3597 = vmatpush2.msra.mxu0 0.0
      %3598 = vmatprep.subr.mxu0 0.0
      %3599 = vmatpush2.msra.mxu0 0.0
      %3600 = vmatprep.subr.mxu0 0.0
      %3601 = vmatpush2.msra.mxu0 0.0
      %3602 = vmatprep.subr.mxu0 0.0
      %3603 = vmatpush2.msra.mxu0 0.0
      %3604 = vmatprep.subr.mxu0 0.0
      %3605 = vmatpush2.msra.mxu0 0.0
      %3606 = vmatprep.subr.mxu0 0.0
      %3607 = vmatpush2.msra.mxu0 0.0
      %3608 = vmatprep.subr.mxu0 0.0
      %3609 = vmatpush2.msra.mxu0 0.0
      %3610 = vmatprep.mubr.f32.mxu0 0.0
      %v3611 = vand.u32 %v3463, 4294901760
      %3612 = vmatmul.mubr.f32.gmra.mxu0 %v3611
      %v3613 = vpop.f32.mrf.mxu0
      %v3614 = vadd.f32 %v3538, %v3613
      %v3615 = vpop.f32.mrf.mxu0
      %3616 = vdwg.mxu0
      %3617 = vmatprep.subr.mxu0 0.0
      %3618 = vmatpush1.msra.mxu0 0.0
      %3619 = vmatprep.subr.mxu0 0.0
      %3620 = vmatpush1.msra.mxu0 0.0
      %3621 = vmatprep.subr.mxu0 0.0
      %3622 = vmatpush1.msra.mxu0 0.0
      %3623 = vmatprep.subr.mxu0 0.0
      %3624 = vmatpush1.msra.mxu0 0.0
      %3625 = vmatprep.subr.mxu0 0.0
      %3626 = vmatpush1.msra.mxu0 0.0
      %3627 = vmatprep.subr.mxu0 0.0
      %3628 = vmatpush1.msra.mxu0 0.0
      %3629 = vmatprep.subr.mxu0 0.0
      %3630 = vmatpush1.msra.mxu0 0.0
      %3631 = vmatprep.subr.mxu0 0.0
      %3632 = vmatpush1.msra.mxu0 0.0
      %3633 = vmatprep.subr.mxu0 0.0
      %3634 = vmatpush1.msra.mxu0 0.0
      %3635 = vmatprep.subr.mxu0 0.0
      %3636 = vmatpush1.msra.mxu0 0.0
      %3637 = vmatprep.subr.mxu0 0.0
      %3638 = vmatpush1.msra.mxu0 0.0
      %3639 = vmatprep.subr.mxu0 0.0
      %3640 = vmatpush1.msra.mxu0 0.0
      %3641 = vmatprep.subr.mxu0 0.0
      %3642 = vmatpush1.msra.mxu0 0.0
      %3643 = vmatprep.subr.mxu0 0.0
      %3644 = vmatpush1.msra.mxu0 0.0
      %3645 = vmatprep.subr.mxu0 0.0
      %3646 = vmatpush1.msra.mxu0 0.0
      %3647 = vmatprep.subr.mxu0 0.0
      %v3648 = vand.u32 %v261, 4294901760
      %v3649 = vsub.f32 %v261, %v3648
      %3650 = vmatpush1.msra.mxu0 %v3649
      %3651 = vmatprep.subr.mxu0 0.0
      %3652 = vmatpush2.msra.mxu0 0.0
      %3653 = vmatprep.subr.mxu0 0.0
      %3654 = vmatpush2.msra.mxu0 0.0
      %3655 = vmatprep.subr.mxu0 0.0
      %3656 = vmatpush2.msra.mxu0 0.0
      %3657 = vmatprep.subr.mxu0 0.0
      %3658 = vmatpush2.msra.mxu0 0.0
      %3659 = vmatprep.subr.mxu0 0.0
      %3660 = vmatpush2.msra.mxu0 0.0
      %3661 = vmatprep.subr.mxu0 0.0
      %3662 = vmatpush2.msra.mxu0 0.0
      %3663 = vmatprep.subr.mxu0 0.0
      %3664 = vmatpush2.msra.mxu0 0.0
      %3665 = vmatprep.subr.mxu0 0.0
      %3666 = vmatpush2.msra.mxu0 0.0
      %3667 = vmatprep.subr.mxu0 0.0
      %3668 = vmatpush2.msra.mxu0 0.0
      %3669 = vmatprep.subr.mxu0 0.0
      %3670 = vmatpush2.msra.mxu0 0.0
      %3671 = vmatprep.subr.mxu0 0.0
      %3672 = vmatpush2.msra.mxu0 0.0
      %3673 = vmatprep.subr.mxu0 0.0
      %3674 = vmatpush2.msra.mxu0 0.0
      %3675 = vmatprep.subr.mxu0 0.0
      %3676 = vmatpush2.msra.mxu0 0.0
      %3677 = vmatprep.subr.mxu0 0.0
      %3678 = vmatpush2.msra.mxu0 0.0
      %3679 = vmatprep.subr.mxu0 0.0
      %3680 = vmatpush2.msra.mxu0 0.0
      %3681 = vmatprep.subr.mxu0 0.0
      %3682 = vmatpush2.msra.mxu0 0.0
      %3683 = vmatprep.mubr.f32.mxu0 0.0
      %v3684 = vand.u32 %v3463, 4294901760
      %v3685 = vsub.f32 %v3463, %v3684
      %3686 = vmatmul.mubr.f32.gmra.mxu0 %v3685
      %v3687 = vpop.f32.mrf.mxu0
      %v3688 = vadd.f32 %v3614, %v3687
      %v3689 = vpop.f32.mrf.mxu0
      %3690 = vdwg.mxu0
      %3691 = vmatprep.subr.mxu0 0.0
      %3692 = vmatpush1.msra.mxu0 0.0
      %3693 = vmatprep.subr.mxu0 0.0
      %3694 = vmatpush1.msra.mxu0 0.0
      %3695 = vmatprep.subr.mxu0 0.0
      %3696 = vmatpush1.msra.mxu0 0.0
      %3697 = vmatprep.subr.mxu0 0.0
      %3698 = vmatpush1.msra.mxu0 0.0
      %3699 = vmatprep.subr.mxu0 0.0
      %3700 = vmatpush1.msra.mxu0 0.0
      %3701 = vmatprep.subr.mxu0 0.0
      %3702 = vmatpush1.msra.mxu0 0.0
      %3703 = vmatprep.subr.mxu0 0.0
      %3704 = vmatpush1.msra.mxu0 0.0
      %3705 = vmatprep.subr.mxu0 0.0
      %3706 = vmatpush1.msra.mxu0 0.0
      %3707 = vmatprep.subr.mxu0 0.0
      %3708 = vmatpush1.msra.mxu0 0.0
      %3709 = vmatprep.subr.mxu0 0.0
      %3710 = vmatpush1.msra.mxu0 0.0
      %3711 = vmatprep.subr.mxu0 0.0
      %3712 = vmatpush1.msra.mxu0 0.0
      %3713 = vmatprep.subr.mxu0 0.0
      %3714 = vmatpush1.msra.mxu0 0.0
      %3715 = vmatprep.subr.mxu0 0.0
      %3716 = vmatpush1.msra.mxu0 0.0
      %3717 = vmatprep.subr.mxu0 0.0
      %3718 = vmatpush1.msra.mxu0 0.0
      %3719 = vmatprep.subr.mxu0 0.0
      %3720 = vmatpush1.msra.mxu0 0.0
      %3721 = vmatprep.subr.mxu0 0.0
      %v3722 = vand.u32 %v261, 4294901760
      %3723 = vmatpush1.msra.mxu0 %v3722
      %3724 = vmatprep.subr.mxu0 0.0
      %3725 = vmatpush2.msra.mxu0 0.0
      %3726 = vmatprep.subr.mxu0 0.0
      %3727 = vmatpush2.msra.mxu0 0.0
      %3728 = vmatprep.subr.mxu0 0.0
      %3729 = vmatpush2.msra.mxu0 0.0
      %3730 = vmatprep.subr.mxu0 0.0
      %3731 = vmatpush2.msra.mxu0 0.0
      %3732 = vmatprep.subr.mxu0 0.0
      %3733 = vmatpush2.msra.mxu0 0.0
      %3734 = vmatprep.subr.mxu0 0.0
      %3735 = vmatpush2.msra.mxu0 0.0
      %3736 = vmatprep.subr.mxu0 0.0
      %3737 = vmatpush2.msra.mxu0 0.0
      %3738 = vmatprep.subr.mxu0 0.0
      %3739 = vmatpush2.msra.mxu0 0.0
      %3740 = vmatprep.subr.mxu0 0.0
      %3741 = vmatpush2.msra.mxu0 0.0
      %3742 = vmatprep.subr.mxu0 0.0
      %3743 = vmatpush2.msra.mxu0 0.0
      %3744 = vmatprep.subr.mxu0 0.0
      %3745 = vmatpush2.msra.mxu0 0.0
      %3746 = vmatprep.subr.mxu0 0.0
      %3747 = vmatpush2.msra.mxu0 0.0
      %3748 = vmatprep.subr.mxu0 0.0
      %3749 = vmatpush2.msra.mxu0 0.0
      %3750 = vmatprep.subr.mxu0 0.0
      %3751 = vmatpush2.msra.mxu0 0.0
      %3752 = vmatprep.subr.mxu0 0.0
      %3753 = vmatpush2.msra.mxu0 0.0
      %3754 = vmatprep.subr.mxu0 0.0
      %3755 = vmatpush2.msra.mxu0 0.0
      %3756 = vmatprep.mubr.f32.mxu0 0.0
      %v3757 = vand.u32 %v3463, 4294901760
      %v3758 = vsub.f32 %v3463, %v3757
      %v3759 = vand.u32 %v3758, 4294901760
      %3760 = vmatmul.mubr.f32.gmra.mxu0 %v3759
      %v3761 = vpop.f32.mrf.mxu0
      %v3762 = vadd.f32 %v3688, %v3761
      %v3763 = vpop.f32.mrf.mxu0
      %3764 = vdwg.mxu0
      %3765 = vmatprep.subr.mxu0 0.0
      %3766 = vmatpush1.msra.mxu0 0.0
      %3767 = vmatprep.subr.mxu0 0.0
      %3768 = vmatpush1.msra.mxu0 0.0
      %3769 = vmatprep.subr.mxu0 0.0
      %3770 = vmatpush1.msra.mxu0 0.0
      %3771 = vmatprep.subr.mxu0 0.0
      %3772 = vmatpush1.msra.mxu0 0.0
      %3773 = vmatprep.subr.mxu0 0.0
      %3774 = vmatpush1.msra.mxu0 0.0
      %3775 = vmatprep.subr.mxu0 0.0
      %3776 = vmatpush1.msra.mxu0 0.0
      %3777 = vmatprep.subr.mxu0 0.0
      %3778 = vmatpush1.msra.mxu0 0.0
      %3779 = vmatprep.subr.mxu0 0.0
      %3780 = vmatpush1.msra.mxu0 0.0
      %3781 = vmatprep.subr.mxu0 0.0
      %3782 = vmatpush1.msra.mxu0 0.0
      %3783 = vmatprep.subr.mxu0 0.0
      %3784 = vmatpush1.msra.mxu0 0.0
      %3785 = vmatprep.subr.mxu0 0.0
      %3786 = vmatpush1.msra.mxu0 0.0
      %3787 = vmatprep.subr.mxu0 0.0
      %3788 = vmatpush1.msra.mxu0 0.0
      %3789 = vmatprep.subr.mxu0 0.0
      %3790 = vmatpush1.msra.mxu0 0.0
      %3791 = vmatprep.subr.mxu0 0.0
      %3792 = vmatpush1.msra.mxu0 0.0
      %3793 = vmatprep.subr.mxu0 0.0
      %3794 = vmatpush1.msra.mxu0 0.0
      %3795 = vmatprep.subr.mxu0 0.0
      %v3796 = vand.u32 %v261, 4294901760
      %v3797 = vsub.f32 %v261, %v3796
      %v3798 = vand.u32 %v3797, 4294901760
      %3799 = vmatpush1.msra.mxu0 %v3798
      %3800 = vmatprep.subr.mxu0 0.0
      %3801 = vmatpush2.msra.mxu0 0.0
      %3802 = vmatprep.subr.mxu0 0.0
      %3803 = vmatpush2.msra.mxu0 0.0
      %3804 = vmatprep.subr.mxu0 0.0
      %3805 = vmatpush2.msra.mxu0 0.0
      %3806 = vmatprep.subr.mxu0 0.0
      %3807 = vmatpush2.msra.mxu0 0.0
      %3808 = vmatprep.subr.mxu0 0.0
      %3809 = vmatpush2.msra.mxu0 0.0
      %3810 = vmatprep.subr.mxu0 0.0
      %3811 = vmatpush2.msra.mxu0 0.0
      %3812 = vmatprep.subr.mxu0 0.0
      %3813 = vmatpush2.msra.mxu0 0.0
      %3814 = vmatprep.subr.mxu0 0.0
      %3815 = vmatpush2.msra.mxu0 0.0
      %3816 = vmatprep.subr.mxu0 0.0
      %3817 = vmatpush2.msra.mxu0 0.0
      %3818 = vmatprep.subr.mxu0 0.0
      %3819 = vmatpush2.msra.mxu0 0.0
      %3820 = vmatprep.subr.mxu0 0.0
      %3821 = vmatpush2.msra.mxu0 0.0
      %3822 = vmatprep.subr.mxu0 0.0
      %3823 = vmatpush2.msra.mxu0 0.0
      %3824 = vmatprep.subr.mxu0 0.0
      %3825 = vmatpush2.msra.mxu0 0.0
      %3826 = vmatprep.subr.mxu0 0.0
      %3827 = vmatpush2.msra.mxu0 0.0
      %3828 = vmatprep.subr.mxu0 0.0
      %3829 = vmatpush2.msra.mxu0 0.0
      %3830 = vmatprep.subr.mxu0 0.0
      %3831 = vmatpush2.msra.mxu0 0.0
      %3832 = vmatprep.mubr.f32.mxu0 0.0
      %v3833 = vand.u32 %v3463, 4294901760
      %3834 = vmatmul.mubr.f32.gmra.mxu0 %v3833
      %v3835 = vpop.f32.mrf.mxu0
      %v3836 = vadd.f32 %v3762, %v3835
      %v3837 = vpop.f32.mrf.mxu0
      %3838 = vdwg.mxu0
      %3839 = vmatprep.subr.mxu0 0.0
      %3840 = vmatpush1.msra.mxu0 0.0
      %3841 = vmatprep.subr.mxu0 0.0
      %3842 = vmatpush1.msra.mxu0 0.0
      %3843 = vmatprep.subr.mxu0 0.0
      %3844 = vmatpush1.msra.mxu0 0.0
      %3845 = vmatprep.subr.mxu0 0.0
      %3846 = vmatpush1.msra.mxu0 0.0
      %3847 = vmatprep.subr.mxu0 0.0
      %3848 = vmatpush1.msra.mxu0 0.0
      %3849 = vmatprep.subr.mxu0 0.0
      %3850 = vmatpush1.msra.mxu0 0.0
      %3851 = vmatprep.subr.mxu0 0.0
      %3852 = vmatpush1.msra.mxu0 0.0
      %3853 = vmatprep.subr.mxu0 0.0
      %3854 = vmatpush1.msra.mxu0 0.0
      %3855 = vmatprep.subr.mxu0 0.0
      %3856 = vmatpush1.msra.mxu0 0.0
      %3857 = vmatprep.subr.mxu0 0.0
      %3858 = vmatpush1.msra.mxu0 0.0
      %3859 = vmatprep.subr.mxu0 0.0
      %3860 = vmatpush1.msra.mxu0 0.0
      %3861 = vmatprep.subr.mxu0 0.0
      %3862 = vmatpush1.msra.mxu0 0.0
      %3863 = vmatprep.subr.mxu0 0.0
      %3864 = vmatpush1.msra.mxu0 0.0
      %3865 = vmatprep.subr.mxu0 0.0
      %3866 = vmatpush1.msra.mxu0 0.0
      %3867 = vmatprep.subr.mxu0 0.0
      %3868 = vmatpush1.msra.mxu0 0.0
      %3869 = vmatprep.subr.mxu0 0.0
      %v3870 = vand.u32 %v261, 4294901760
      %3871 = vmatpush1.msra.mxu0 %v3870
      %3872 = vmatprep.subr.mxu0 0.0
      %3873 = vmatpush2.msra.mxu0 0.0
      %3874 = vmatprep.subr.mxu0 0.0
      %3875 = vmatpush2.msra.mxu0 0.0
      %3876 = vmatprep.subr.mxu0 0.0
      %3877 = vmatpush2.msra.mxu0 0.0
      %3878 = vmatprep.subr.mxu0 0.0
      %3879 = vmatpush2.msra.mxu0 0.0
      %3880 = vmatprep.subr.mxu0 0.0
      %3881 = vmatpush2.msra.mxu0 0.0
      %3882 = vmatprep.subr.mxu0 0.0
      %3883 = vmatpush2.msra.mxu0 0.0
      %3884 = vmatprep.subr.mxu0 0.0
      %3885 = vmatpush2.msra.mxu0 0.0
      %3886 = vmatprep.subr.mxu0 0.0
      %3887 = vmatpush2.msra.mxu0 0.0
      %3888 = vmatprep.subr.mxu0 0.0
      %3889 = vmatpush2.msra.mxu0 0.0
      %3890 = vmatprep.subr.mxu0 0.0
      %3891 = vmatpush2.msra.mxu0 0.0
      %3892 = vmatprep.subr.mxu0 0.0
      %3893 = vmatpush2.msra.mxu0 0.0
      %3894 = vmatprep.subr.mxu0 0.0
      %3895 = vmatpush2.msra.mxu0 0.0
      %3896 = vmatprep.subr.mxu0 0.0
      %3897 = vmatpush2.msra.mxu0 0.0
      %3898 = vmatprep.subr.mxu0 0.0
      %3899 = vmatpush2.msra.mxu0 0.0
      %3900 = vmatprep.subr.mxu0 0.0
      %3901 = vmatpush2.msra.mxu0 0.0
      %3902 = vmatprep.subr.mxu0 0.0
      %3903 = vmatpush2.msra.mxu0 0.0
      %3904 = vmatprep.mubr.f32.mxu0 0.0
      %v3905 = vand.u32 %v3463, 4294901760
      %3906 = vmatmul.mubr.f32.gmra.mxu0 %v3905
      %v3907 = vpop.f32.mrf.mxu0
      %v3908 = vadd.f32 %v3836, %v3907
      %v3909 = vpop.f32.mrf.mxu0
      %3910 = vdwg.mxu0
      %vm3911 = vcmask 58368
      %3912 = vst.msk [vmem:[%s244] sm:$0x3] %vm3911, %v765
      %3913 = vst.msk [vmem:[%s244 + $0x2] sm:$0x3] %vm3911, %v1214
      %3914 = vst.msk [vmem:[%s244 + $0x4] sm:$0x3] %vm3911, %v1663
      %3915 = vst.msk [vmem:[%s244 + $0x6] sm:$0x3] %vm3911, %v2112
      %3916 = vst.msk [vmem:[%s244 + $0x8] sm:$0x3] %vm3911, %v2561
      %3917 = vst.msk [vmem:[%s244 + $0xa] sm:$0x3] %vm3911, %v3010
      %3918 = vst.msk [vmem:[%s244 + $0xc] sm:$0x3] %vm3911, %v3459
      %3919 = vst.msk [vmem:[%s244 + $0xe] sm:$0x3] %vm3911, %v3908
      %s3920 = smul.u32 8, %s18
      %p3921 = scmp.lt.s32.totalorder %s3920, 15
      %s3922 = scalar_select %p3921, %s3920, 15
      %p3923 = scmp.lt.s32.totalorder %s19, 0
      %s3924 = scalar_select %p3923, %s19, 0
      %s3925 = sadd.s32 %s3924, %s3922
      %s3926 = smul.addr %s3925, 2
      %s3927 = scalar_lea.vmem %s3, %s3926
      // Predicated region
      $region33: #{tpu_custom_call.1} parent=31 // pred_check
        %p3928 = pneg %p126
      $region34: #{tpu_custom_call.1} parent=31 // pred_check_branch
        %3930 = sbr.rel (%p3928) target = $region36
      $region35: #{tpu_custom_call.1} parent=31 // pred_region
        %s3931 = smul.u32 8, %s18
      $region36: #{tpu_custom_call.1} parent=31 // pred_fallthru
        _
    $region32: #{tpu_custom_call.1} parent=5 // pred_fallthru
      _
    %p3932 = scmp.le.s32.totalorder 2, %s9
    // Predicated region
    $region37: #{tpu_custom_call.1} parent=5 // pred_check
      %p3933 = pneg %p3932
    $region38: #{tpu_custom_call.1} parent=5 // pred_check_branch
      %3935 = sbr.rel (%p3933) target = $region40
    $region39: #{tpu_custom_call.1} parent=5 // pred_region
      %s3936 = ssub.s32 %s9, 2
      // Predicated region
      $region41: #{tpu_custom_call.1} parent=39 // pred_check
        %p3937 = pneg %p132
      $region42: #{tpu_custom_call.1} parent=39 // pred_check_branch
        %3939 = sbr.rel (%p3937) target = $region44
      $region43: #{tpu_custom_call.1} parent=39 // pred_region
        %s3940 = smul.u32 8, %s20
        %p3941 = scmp.lt.s32.totalorder %s3940, 15
        %s3942 = scalar_select %p3941, %s3940, 15
        %p3943 = scmp.lt.s32.totalorder %s21, 0
        %s3944 = scalar_select %p3943, %s21, 0
        %s3945 = sadd.s32 %s3944, %s3942
        %s3946 = smul.addr %s3945, 2
        %s3947 = scalar_lea.vmem %s3, %s3946
      $region44: #{tpu_custom_call.1} parent=39 // pred_fallthru
        _
    $region40: #{tpu_custom_call.1} parent=5 // pred_fallthru
      _
  $region6: #{tpu_custom_call.1} parent=0 // loop_footer
    %s13 = sadd.s32 1, %s9
  $region7: #{tpu_custom_call.1} parent=0 // loop_footer_branch
    %8 = sbr.rel target = $region3
  $region8: #{tpu_custom_call.1} parent=0 // loop_exit
    _

</llo_original>
